<compile_context>
chip_gen: v7x
topology: tpu7x:2x2x1
jax: 0.10.0
libtpu: 0.0.40
codegen_flags: <defaults>
</compile_context>

<pallas_src>
import functools
import numpy as np
import jax
import jax.numpy as jnp
from jax.experimental import pallas as pl
from jax.experimental.pallas import tpu as pltpu


# ----------------------------------------------------------------------------
# 1-D linear operators matching PyTorch semantics (host-side numpy, cached).
# ----------------------------------------------------------------------------
def adaptive_pool_matrix(L, b):
    """(b, L) matrix implementing nn.AdaptiveAvgPool1d(b) on length L."""
    M = np.zeros((b, L), dtype=np.float64)
    for i in range(b):
        s = (i * L) // b
        e = ((i + 1) * L + b - 1) // b  # ceil
        M[i, s:e] = 1.0 / (e - s)
    return M


def bilinear_up_matrix(L_out, b):
    """(L_out, b) matrix implementing F.interpolate(..., align_corners=True)."""
    M = np.zeros((L_out, b), dtype=np.float64)
    if b == 1 or L_out == 1:
        M[:, 0] = 1.0
        return M
    scale = (b - 1) / (L_out - 1)
    for h in range(L_out):
        src = h * scale
        i0 = min(int(np.floor(src)), b - 1)
        i1 = min(i0 + 1, b - 1)
        frac = src - i0
        M[h, i0] += 1.0 - frac
        M[h, i1] += frac
    return M


def _round_up(x, m):
    return ((x + m - 1) // m) * m


@functools.lru_cache(maxsize=None)
def _ppm_operators(H, W, bins, R):
    """Cached device-side stacked operators for a given geometry.

    Returns:
      poolM : (H*W, Spad) f32  column-stacked adaptive-avg-pool operators
      upM   : (Spad, H*W) f32  row-stacked bilinear upsample operators
      mask  : (nbins*R, Spad) f32 block-diagonal 0/1 mask keeping bins independent
      Spad  : int, sum(b*b) zero-padded up to a multiple of 128 lanes
    """
    pool_blocks, up_blocks, sizes = [], [], []
    for b in bins:
        Ph = adaptive_pool_matrix(H, b)
        Pw = adaptive_pool_matrix(W, b)
        Uh = bilinear_up_matrix(H, b)
        Uw = bilinear_up_matrix(W, b)
        pool_blocks.append(np.kron(Ph, Pw).T)   # (H*W, b*b)
        up_blocks.append(np.kron(Uh, Uw).T)     # (b*b, H*W)
        sizes.append(b * b)
    poolM_np = np.concatenate(pool_blocks, axis=1)          # (HW, S)
    upM_np = np.concatenate(up_blocks, axis=0)              # (S, HW)
    S = int(sum(sizes))
    RT = len(bins) * R
    mask_np = np.zeros((RT, S), dtype=np.float64)
    off = 0
    for i, sz in enumerate(sizes):
        mask_np[i * R:(i + 1) * R, off:off + sz] = 1.0
        off += sz
    # Lane-pad the stacked bin axis to a multiple of 128 so pooled / y / z sit
    # on lane-dense vregs; padded columns are zeroed by mask and by upM rows.
    Spad = _round_up(S, 128)
    if Spad > S:
        poolM_np = np.pad(poolM_np, ((0, 0), (0, Spad - S)))
        upM_np = np.pad(upM_np, ((0, Spad - S), (0, 0)))
        mask_np = np.pad(mask_np, ((0, 0), (0, Spad - S)))
    poolM = jnp.asarray(poolM_np, dtype=jnp.float32)
    upM = jnp.asarray(upM_np, dtype=jnp.float32)
    mask = jnp.asarray(mask_np, dtype=jnp.float32)
    return poolM, upM, mask, Spad


# ----------------------------------------------------------------------------
# Fused PPM forward: one Pallas invocation produces concat([x] + all branches)
# for the whole batch.
# ----------------------------------------------------------------------------
def _make_kernel(N, C, Cout):
    hi = jax.lax.Precision.HIGHEST

    def kernel(x_ref, pool_ref, w_ref, shift_ref, mask_ref, up_ref, o_ref):
        pool = pool_ref[...]      # (HW, Spad)  f32
        w = w_ref[...]            # (RT, C)     f32  (BN scale folded in)
        shift = shift_ref[...]    # (RT, Spad)  f32  (pre-broadcast BN shift)
        mask = mask_ref[...]      # (RT, Spad)  f32  block-diagonal 0/1
        up = up_ref[...]          # (Spad, HW)  f32
        # Whole batch handled inside one invocation (no grid-step overhead);
        # N is tiny so a static unrolled loop is fine.
        for n in range(N):
            xn = x_ref[n]                                   # (C, HW) f32
            o_ref[n, 0:C, :] = xn                           # identity channels (exact f32)
            # Pool all bins at once:      (C, HW) @ (HW, Spad) -> (C, Spad)
            pooled = jnp.dot(xn, pool, precision=hi,
                             preferred_element_type=jnp.float32)
            # All 1x1 convs (BN folded):  (RT, C) @ (C, Spad) -> (RT, Spad)
            y = jnp.dot(w, pooled, precision=hi,
                        preferred_element_type=jnp.float32)
            # BN shift + ReLU, then block-diagonal mask keeps bins independent.
            z = jnp.maximum(y + shift, 0.0) * mask
            # All bilinear upsamples:     (RT, Spad) @ (Spad, HW) -> (RT, HW)
            o_ref[n, C:Cout, :] = jnp.dot(z, up, precision=hi,
                                          preferred_element_type=jnp.float32)

    return kernel


def ppm_forward(x, params, bins, eps=1e-5):
    N, C, H, W = x.shape
    HW = H * W
    R = params[0]["w"].shape[0]
    RT = len(bins) * R
    Cout = C + RT

    poolM, upM, mask, Spad = _ppm_operators(H, W, tuple(bins), R)

    # Fold the inference-mode BN scale into the conv weight; keep the shift,
    # pre-broadcast to (RT, Spad) so the kernel epilogue is pure elementwise.
    w_rows, shift_rows = [], []
    for p in params:
        s = p["gamma"] / jnp.sqrt(p["var"] + eps)
        w_rows.append(p["w"] * s[:, None])
        shift_rows.append(p["beta"] - p["mean"] * s)
    w_all = jnp.concatenate(w_rows, axis=0).astype(jnp.float32)              # (RT, C)
    shift = jnp.broadcast_to(
        jnp.concatenate(shift_rows, axis=0).astype(jnp.float32)[:, None],
        (RT, Spad))                                                          # (RT, Spad)

    x_flat = x.reshape(N, C, HW)

    # The split identity / branch stores are sublane-aligned when C % 8 == 0
    # (true for the tested C=8 and real PSPNet C=2048); other C values still
    # lower, just via slower masked stores.
    out = pl.pallas_call(
        _make_kernel(N, C, Cout),
        out_shape=jax.ShapeDtypeStruct((N, Cout, HW), jnp.float32),
        in_specs=[pl.BlockSpec(memory_space=pltpu.MemorySpace.VMEM)] * 6,
        out_specs=pl.BlockSpec(memory_space=pltpu.MemorySpace.VMEM),
    )(x_flat, poolM, w_all, shift, mask, upM)
    return out.reshape(N, Cout, H, W)


# ----------------------------------------------------------------------------
# Pure-numpy f64 reference (PyTorch semantics) for correctness checking.
# (numpy, not jnp, so the reference is not subject to TPU default matmul
#  precision and the comparison tolerance can be tight.)
# ----------------------------------------------------------------------------
def ppm_reference_np(x, params, bins, eps=1e-5):
    x = np.asarray(x, dtype=np.float64)
    outs = [x]
    _, _, H, W = x.shape
    for b, p in zip(bins, params):
        Ph = adaptive_pool_matrix(H, b)
        Pw = adaptive_pool_matrix(W, b)
        Uh = bilinear_up_matrix(H, b)
        Uw = bilinear_up_matrix(W, b)
        w = np.asarray(p["w"], np.float64)
        gamma = np.asarray(p["gamma"], np.float64)
        beta = np.asarray(p["beta"], np.float64)
        mean = np.asarray(p["mean"], np.float64)
        var = np.asarray(p["var"], np.float64)
        pooled = np.einsum("ih,nchw,jw->ncij", Ph, x, Pw)
        y = np.einsum("rc,ncij->nrij", w, pooled)
        s = gamma / np.sqrt(var + eps)
        z = np.maximum(y * s[None, :, None, None]
                       + (beta - mean * s)[None, :, None, None], 0.0)
        outs.append(np.einsum("hi,nrij,wj->nrhw", Uh, z, Uw))
    return np.concatenate(outs, axis=1)


if __name__ == "__main__":
    key = jax.random.PRNGKey(0)
    N, C, H, W = 2, 8, 16, 16          # in_dim = 8
    bins = (1, 2, 3, 6)
    R = C // len(bins)                 # reduction_dim = in_dim // len(bins) = 2

    k_x, k_p = jax.random.split(key)
    x = jax.random.normal(k_x, (N, C, H, W), dtype=jnp.float32)

    # Deterministic parameter init per branch (conv weight + BN stats/affine).
    params = []
    for kb in jax.random.split(k_p, len(bins)):
        k1, k2, k3, k4, k5 = jax.random.split(kb, 5)
        params.append(dict(
            w=jax.random.normal(k1, (R, C), jnp.float32) * 0.1,            # Conv2d 1x1, no bias
            gamma=jax.random.uniform(k2, (R,), jnp.float32, 0.5, 1.5),     # BN weight
            beta=jax.random.normal(k3, (R,), jnp.float32) * 0.1,           # BN bias
            mean=jax.random.normal(k4, (R,), jnp.float32) * 0.1,           # BN running_mean
            var=jax.random.uniform(k5, (R,), jnp.float32, 0.5, 1.5),       # BN running_var
        ))
    # TODO(synk): BatchNorm is applied in inference mode (folded running stats);
    # training-mode batch statistics are not reproduced here.

    out = ppm_forward(x, params, bins)
    jax.block_until_ready(out)
    assert out.shape == (N, C + len(bins) * R, H, W)

    ref = ppm_reference_np(np.asarray(x), params, bins)
    # All operands / matmuls are f32 with precision=HIGHEST, so the tolerance
    # is ~20x tighter than the previous bf16-operand version.
    np.testing.assert_allclose(np.asarray(out), ref, rtol=1e-3, atol=1e-3)
    print("KERNEL_OK")
</pallas_src>

<mosaic_0001>
module attributes {stable_mosaic.version = 11 : i64} {
  func.func @kernel(%arg0: memref<2x8x256xf32, #tpu.memory_space<vmem>>, %arg1: memref<256x128xf32, #tpu.memory_space<vmem>>, %arg2: memref<8x8xf32, #tpu.memory_space<vmem>>, %arg3: memref<8x128xf32, #tpu.memory_space<vmem>>, %arg4: memref<8x128xf32, #tpu.memory_space<vmem>>, %arg5: memref<128x256xf32, #tpu.memory_space<vmem>>, %arg6: memref<2x16x256xf32, #tpu.memory_space<vmem>>) attributes {dimension_semantics = [], scalar_prefetch = 0 : i64, scratch_operands = 0 : i64, tpu.core_type = #tpu.core_type<tc>} {
    %c0 = arith.constant 0 : index
    %c0_0 = arith.constant 0 : index
    %0 = vector.load %arg1[%c0, %c0_0] : memref<256x128xf32, #tpu.memory_space<vmem>>, vector<256x128xf32>
    %c0_1 = arith.constant 0 : index
    %c0_2 = arith.constant 0 : index
    %1 = vector.load %arg2[%c0_1, %c0_2] : memref<8x8xf32, #tpu.memory_space<vmem>>, vector<8x8xf32>
    %c0_3 = arith.constant 0 : index
    %c0_4 = arith.constant 0 : index
    %2 = vector.load %arg3[%c0_3, %c0_4] : memref<8x128xf32, #tpu.memory_space<vmem>>, vector<8x128xf32>
    %c0_5 = arith.constant 0 : index
    %c0_6 = arith.constant 0 : index
    %3 = vector.load %arg4[%c0_5, %c0_6] : memref<8x128xf32, #tpu.memory_space<vmem>>, vector<8x128xf32>
    %c0_7 = arith.constant 0 : index
    %c0_8 = arith.constant 0 : index
    %4 = vector.load %arg5[%c0_7, %c0_8] : memref<128x256xf32, #tpu.memory_space<vmem>>, vector<128x256xf32>
    %c0_9 = arith.constant 0 : index
    %c0_10 = arith.constant 0 : index
    %c0_11 = arith.constant 0 : index
    %5 = vector.load %arg0[%c0_9, %c0_10, %c0_11] : memref<2x8x256xf32, #tpu.memory_space<vmem>>, vector<1x8x256xf32>
    %6 = vector.shape_cast %5 : vector<1x8x256xf32> to vector<8x256xf32>
    %c0_12 = arith.constant 0 : index
    %c0_13 = arith.constant 0 : index
    %c0_14 = arith.constant 0 : index
    %7 = vector.load %arg6[%c0_12, %c0_13, %c0_14] : memref<2x16x256xf32, #tpu.memory_space<vmem>>, vector<1x8x256xf32>
    %8 = vector.shape_cast %7 : vector<1x8x256xf32> to vector<8x256xf32>
    %9 = vector.shape_cast %6 : vector<8x256xf32> to vector<1x8x256xf32>
    tpu.vector_store %arg6[%c0_12, %c0_13, %c0_14], %9 {strides = array<i32>} : memref<2x16x256xf32, #tpu.memory_space<vmem>>, vector<1x8x256xf32>,
    %cst = arith.constant dense<0.000000e+00> : vector<8x128xf32>
    %10 = tpu.matmul %6, %0, %cst {dimension_numbers = #tpu.dot_dimension_numbers<[1], [0], [0], [1], [0, 0, 1, 1], [], []>, precision = #tpu.contract_precision<fp32>} : vector<8x256xf32>, vector<256x128xf32>, vector<8x128xf32> -> vector<8x128xf32>
    %cst_15 = arith.constant dense<0.000000e+00> : vector<8x128xf32>
    %11 = tpu.matmul %1, %10, %cst_15 {dimension_numbers = #tpu.dot_dimension_numbers<[1], [0], [0], [1], [0, 0, 1, 1], [], []>, precision = #tpu.contract_precision<fp32>} : vector<8x8xf32>, vector<8x128xf32>, vector<8x128xf32> -> vector<8x128xf32>
    %12 = arith.addf %11, %2 : vector<8x128xf32>
    %cst_16 = arith.constant 0.000000e+00 : f32
    %13 = vector.broadcast %cst_16 : f32 to vector<8x128xf32>
    %14 = arith.maximumf %12, %13 : vector<8x128xf32>
    %15 = arith.mulf %14, %3 : vector<8x128xf32>
    %cst_17 = arith.constant dense<0.000000e+00> : vector<8x256xf32>
    %16 = tpu.matmul %15, %4, %cst_17 {dimension_numbers = #tpu.dot_dimension_numbers<[1], [0], [0], [1], [0, 0, 1, 1], [], []>, precision = #tpu.contract_precision<fp32>} : vector<8x128xf32>, vector<128x256xf32>, vector<8x256xf32> -> vector<8x256xf32>
    %c0_18 = arith.constant 0 : index
    %c8 = arith.constant 8 : index
    %c0_19 = arith.constant 0 : index
    %17 = vector.load %arg6[%c0_18, %c8, %c0_19] : memref<2x16x256xf32, #tpu.memory_space<vmem>>, vector<1x8x256xf32>
    %18 = vector.shape_cast %17 : vector<1x8x256xf32> to vector<8x256xf32>
    %19 = vector.shape_cast %16 : vector<8x256xf32> to vector<1x8x256xf32>
    tpu.vector_store %arg6[%c0_18, %c8, %c0_19], %19 {strides = array<i32>} : memref<2x16x256xf32, #tpu.memory_space<vmem>>, vector<1x8x256xf32>,
    %c1 = arith.constant 1 : index
    %c0_20 = arith.constant 0 : index
    %c0_21 = arith.constant 0 : index
    %20 = vector.load %arg0[%c1, %c0_20, %c0_21] : memref<2x8x256xf32, #tpu.memory_space<vmem>>, vector<1x8x256xf32>
    %21 = vector.shape_cast %20 : vector<1x8x256xf32> to vector<8x256xf32>
    %c1_22 = arith.constant 1 : index
    %c0_23 = arith.constant 0 : index
    %c0_24 = arith.constant 0 : index
    %22 = vector.load %arg6[%c1_22, %c0_23, %c0_24] : memref<2x16x256xf32, #tpu.memory_space<vmem>>, vector<1x8x256xf32>
    %23 = vector.shape_cast %22 : vector<1x8x256xf32> to vector<8x256xf32>
    %24 = vector.shape_cast %21 : vector<8x256xf32> to vector<1x8x256xf32>
    tpu.vector_store %arg6[%c1_22, %c0_23, %c0_24], %24 {strides = array<i32>} : memref<2x16x256xf32, #tpu.memory_space<vmem>>, vector<1x8x256xf32>,
    %cst_25 = arith.constant dense<0.000000e+00> : vector<8x128xf32>
    %25 = tpu.matmul %21, %0, %cst_25 {dimension_numbers = #tpu.dot_dimension_numbers<[1], [0], [0], [1], [0, 0, 1, 1], [], []>, precision = #tpu.contract_precision<fp32>} : vector<8x256xf32>, vector<256x128xf32>, vector<8x128xf32> -> vector<8x128xf32>
    %cst_26 = arith.constant dense<0.000000e+00> : vector<8x128xf32>
    %26 = tpu.matmul %1, %25, %cst_26 {dimension_numbers = #tpu.dot_dimension_numbers<[1], [0], [0], [1], [0, 0, 1, 1], [], []>, precision = #tpu.contract_precision<fp32>} : vector<8x8xf32>, vector<8x128xf32>, vector<8x128xf32> -> vector<8x128xf32>
    %27 = arith.addf %26, %2 : vector<8x128xf32>
    %cst_27 = arith.constant 0.000000e+00 : f32
    %28 = vector.broadcast %cst_27 : f32 to vector<8x128xf32>
    %29 = arith.maximumf %27, %28 : vector<8x128xf32>
    %30 = arith.mulf %29, %3 : vector<8x128xf32>
    %cst_28 = arith.constant dense<0.000000e+00> : vector<8x256xf32>
    %31 = tpu.matmul %30, %4, %cst_28 {dimension_numbers = #tpu.dot_dimension_numbers<[1], [0], [0], [1], [0, 0, 1, 1], [], []>, precision = #tpu.contract_precision<fp32>} : vector<8x128xf32>, vector<128x256xf32>, vector<8x256xf32> -> vector<8x256xf32>
    %c1_29 = arith.constant 1 : index
    %c8_30 = arith.constant 8 : index
    %c0_31 = arith.constant 0 : index
    %32 = vector.load %arg6[%c1_29, %c8_30, %c0_31] : memref<2x16x256xf32, #tpu.memory_space<vmem>>, vector<1x8x256xf32>
    %33 = vector.shape_cast %32 : vector<1x8x256xf32> to vector<8x256xf32>
    %34 = vector.shape_cast %31 : vector<8x256xf32> to vector<1x8x256xf32>
    tpu.vector_store %arg6[%c1_29, %c8_30, %c0_31], %34 {strides = array<i32>} : memref<2x16x256xf32, #tpu.memory_space<vmem>>, vector<1x8x256xf32>,
    return
  }
}

</mosaic_0001>

<llo_original>
// kernel: tpu_custom_call.1
$region0: #{tpu_custom_call.1}
  #allocation0 [shape = 'u32[]', space=smem, size = 0x4, offset = 0x4, fixed_abs, tag = 'smem constant byte address 0x4 - core index']
  #allocation1 [shape = 'u32[144,128]{1,0:T(1,128)}', space=vmem, size = 0x12000, scoped, tag = 'internal scratch']
  %s0 = inlined_call_operand.hbm [shape: f32[2,8,256], index: 0, kind: input, shape index: {}]
  %s1 = inlined_call_operand.hbm [shape: f32[256,128], index: 1, kind: input, shape index: {}]
  %s2 = inlined_call_operand.hbm [shape: f32[8,8], index: 2, kind: input, shape index: {}]
  %s3 = inlined_call_operand.vmem [shape: f32[8,128], index: 3, kind: input, shape index: {}]
  %s4 = inlined_call_operand.hbm [shape: f32[8,128], index: 4, kind: input, shape index: {}]
  %s5 = inlined_call_operand.hbm [shape: f32[128,256], index: 5, kind: input, shape index: {}]
  %s6 = inlined_call_operand.hbm [shape: f32[2,16,256], index: 6, kind: output, shape index: {}]
  %s7 = sld [smem:[#allocation0]]
  $region54: #{tpu_custom_call.1} parent=0
    _
  %s9 = ssub.s32 1, %s7
  %s10 = scalar_select 0, %s9, %s7
  $region1: #{tpu_custom_call.1} parent=0
    #allocation2 [shape = 'u8[16384]{0}', space=vmem, size = 0x4000, scoped, tag = 'input window, operand 0, single buffered']
    #allocation3 [shape = 's32[1]{0}', space=sflag, size = 0x4, scoped, tag = 'scoped memory for tpu_custom_call.1']
    #allocation4 [shape = 's32[1]{0}', space=sflag, size = 0x4, scoped, tag = 'scoped memory for tpu_custom_call.1']
    #allocation5 [shape = 'u8[131072]{0}', space=vmem, size = 0x20000, scoped, tag = 'input window, operand 1, single buffered']
    #allocation6 [shape = 's32[1]{0}', space=sflag, size = 0x4, scoped, tag = 'scoped memory for tpu_custom_call.1']
    #allocation7 [shape = 'u8[4096]{0}', space=vmem, size = 0x1000, scoped, tag = 'input window, operand 2, single buffered']
    #allocation8 [shape = 'u8[4096]{0}', space=vmem, size = 0x1000, scoped, tag = 'input window, operand 4, single buffered']
    #allocation9 [shape = 's32[1]{0}', space=sflag, size = 0x4, scoped, tag = 'scoped memory for tpu_custom_call.1']
    #allocation10 [shape = 'u8[131072]{0}', space=vmem, size = 0x20000, scoped, tag = 'input window, operand 5, single buffered']
    #allocation11 [shape = 'u8[32768]{0}', space=vmem, size = 0x8000, scoped, tag = 'output window, operand 0, single buffered']
    %11 = vsyncpa [#allocation3], 0
    %12 = vsyncpa [#allocation6], 0
    %13 = vsyncpa [#allocation9], 0
    %14 = vsyncpa [#allocation4], 0
    // Predicated region
    $region2: #{tpu_custom_call.1} parent=1 // pred_check
      _
    $region3: #{tpu_custom_call.1} parent=1 // pred_check_branch
      %16 = sbr.rel (0) target = $region5
    $region4: #{tpu_custom_call.1} parent=1 // pred_region
      %s18 = ssub.s32 512, 512
      %19 = vsyncadd [#allocation3], %s18
      %s20 = sshll.u32 [#allocation2], 4
      %s21 = int_to_ptr.vmem [resolvable:$true] %s20
      %26 = dma.hbm_to_vmem [thread:$0]  %s0, 512, %s21, [#allocation3], 256, 256, 16
    $region5: #{tpu_custom_call.1} parent=1 // pred_fallthru
      _
    // Predicated region
    $region6: #{tpu_custom_call.1} parent=1 // pred_check
      _
    $region7: #{tpu_custom_call.1} parent=1 // pred_check_branch
      %28 = sbr.rel (0) target = $region9
    $region8: #{tpu_custom_call.1} parent=1 // pred_region
      %s30 = ssub.s32 4096, 4096
      %31 = vsyncadd [#allocation6], %s30
      %s32 = sshll.u32 [#allocation5], 4
      %s33 = int_to_ptr.vmem [resolvable:$true] %s32
      %38 = dma.hbm_to_vmem [thread:$0]  %s1, 4096, %s33, [#allocation6], 128, 128, 8
    $region9: #{tpu_custom_call.1} parent=1 // pred_fallthru
      _
    // Predicated region
    $region10: #{tpu_custom_call.1} parent=1 // pred_check
      _
    $region11: #{tpu_custom_call.1} parent=1 // pred_check_branch
      %40 = sbr.rel (0) target = $region13
    $region12: #{tpu_custom_call.1} parent=1 // pred_region
      %s42 = ssub.s32 128, 128
      %43 = vsyncadd [#allocation6], %s42
      %s45 = sshll.u32 [#allocation7], 4
      %s46 = int_to_ptr.vmem [resolvable:$true] %s45
      %48 = dma.hbm_to_vmem [thread:$0]  %s2, 128, %s46, [#allocation6]
    $region13: #{tpu_custom_call.1} parent=1 // pred_fallthru
      _
    // Predicated region
    $region14: #{tpu_custom_call.1} parent=1 // pred_check
      _
    $region15: #{tpu_custom_call.1} parent=1 // pred_check_branch
      %50 = sbr.rel (0) target = $region17
    $region16: #{tpu_custom_call.1} parent=1 // pred_region
      _
    $region17: #{tpu_custom_call.1} parent=1 // pred_fallthru
      _
    // Predicated region
    $region18: #{tpu_custom_call.1} parent=1 // pred_check
      _
    $region19: #{tpu_custom_call.1} parent=1 // pred_check_branch
      %52 = sbr.rel (0) target = $region21
    $region20: #{tpu_custom_call.1} parent=1 // pred_region
      %s54 = ssub.s32 128, 128
      %55 = vsyncadd [#allocation9], %s54
      %s57 = sshll.u32 [#allocation8], 4
      %s58 = int_to_ptr.vmem [resolvable:$true] %s57
      %60 = dma.hbm_to_vmem [thread:$0]  %s4, 128, %s58, [#allocation9]
    $region21: #{tpu_custom_call.1} parent=1 // pred_fallthru
      _
    // Predicated region
    $region22: #{tpu_custom_call.1} parent=1 // pred_check
      _
    $region23: #{tpu_custom_call.1} parent=1 // pred_check_branch
      %62 = sbr.rel (0) target = $region25
    $region24: #{tpu_custom_call.1} parent=1 // pred_region
      %s64 = ssub.s32 4096, 4096
      %65 = vsyncadd [#allocation9], %s64
      %s66 = sshll.u32 [#allocation10], 4
      %s67 = int_to_ptr.vmem [resolvable:$true] %s66
      %72 = dma.hbm_to_vmem [thread:$0]  %s5, 4096, %s67, [#allocation9], 256, 256, 16
    $region25: #{tpu_custom_call.1} parent=1 // pred_fallthru
      _
    // Predicated region
    $region26: #{tpu_custom_call.1} parent=1 // pred_check
      _
    $region27: #{tpu_custom_call.1} parent=1 // pred_check_branch
      %74 = sbr.rel (0) target = $region29
    $region28: #{tpu_custom_call.1} parent=1 // pred_region
      %75 = dma.done [#allocation3], 512
    $region29: #{tpu_custom_call.1} parent=1 // pred_fallthru
      _
    // Predicated region
    $region30: #{tpu_custom_call.1} parent=1 // pred_check
      _
    $region31: #{tpu_custom_call.1} parent=1 // pred_check_branch
      %77 = sbr.rel (0) target = $region33
    $region32: #{tpu_custom_call.1} parent=1 // pred_region
      %78 = dma.done [#allocation6], 4096
    $region33: #{tpu_custom_call.1} parent=1 // pred_fallthru
      _
    // Predicated region
    $region34: #{tpu_custom_call.1} parent=1 // pred_check
      _
    $region35: #{tpu_custom_call.1} parent=1 // pred_check_branch
      %80 = sbr.rel (0) target = $region37
    $region36: #{tpu_custom_call.1} parent=1 // pred_region
      %81 = dma.done [#allocation6], 128
    $region37: #{tpu_custom_call.1} parent=1 // pred_fallthru
      _
    // Predicated region
    $region38: #{tpu_custom_call.1} parent=1 // pred_check
      _
    $region39: #{tpu_custom_call.1} parent=1 // pred_check_branch
      %83 = sbr.rel (0) target = $region41
    $region40: #{tpu_custom_call.1} parent=1 // pred_region
      %84 = dma.done [#allocation9], 128
    $region41: #{tpu_custom_call.1} parent=1 // pred_fallthru
      _
    // Predicated region
    $region42: #{tpu_custom_call.1} parent=1 // pred_check
      _
    $region43: #{tpu_custom_call.1} parent=1 // pred_check_branch
      %86 = sbr.rel (0) target = $region45
    $region44: #{tpu_custom_call.1} parent=1 // pred_region
      %87 = dma.done [#allocation9], 4096
    $region45: #{tpu_custom_call.1} parent=1 // pred_fallthru
      _
    %v88 = vld [vmem:[#allocation5] sm:$0xff]
    %v89 = vld [vmem:[#allocation5 + $0x8] sm:$0xff]
    %v90 = vld [vmem:[#allocation5 + $0x10] sm:$0xff]
    %v91 = vld [vmem:[#allocation5 + $0x18] sm:$0xff]
    %v92 = vld [vmem:[#allocation5 + $0x20] sm:$0xff]
    %v93 = vld [vmem:[#allocation5 + $0x28] sm:$0xff]
    %v94 = vld [vmem:[#allocation5 + $0x30] sm:$0xff]
    %v95 = vld [vmem:[#allocation5 + $0x38] sm:$0xff]
    %v96 = vld [vmem:[#allocation5 + $0x40] sm:$0xff]
    %v97 = vld [vmem:[#allocation5 + $0x48] sm:$0xff]
    %v98 = vld [vmem:[#allocation5 + $0x50] sm:$0xff]
    %v99 = vld [vmem:[#allocation5 + $0x58] sm:$0xff]
    %v100 = vld [vmem:[#allocation5 + $0x60] sm:$0xff]
    %v101 = vld [vmem:[#allocation5 + $0x68] sm:$0xff]
    %v102 = vld [vmem:[#allocation5 + $0x70] sm:$0xff]
    %v103 = vld [vmem:[#allocation5 + $0x78] sm:$0xff]
    %v104 = vld [vmem:[#allocation5 + $0x80] sm:$0xff]
    %v105 = vld [vmem:[#allocation5 + $0x88] sm:$0xff]
    %v106 = vld [vmem:[#allocation5 + $0x90] sm:$0xff]
    %v107 = vld [vmem:[#allocation5 + $0x98] sm:$0xff]
    %v108 = vld [vmem:[#allocation5 + $0xa0] sm:$0xff]
    %v109 = vld [vmem:[#allocation5 + $0xa8] sm:$0xff]
    %v110 = vld [vmem:[#allocation5 + $0xb0] sm:$0xff]
    %v111 = vld [vmem:[#allocation5 + $0xb8] sm:$0xff]
    %v112 = vld [vmem:[#allocation5 + $0xc0] sm:$0xff]
    %v113 = vld [vmem:[#allocation5 + $0xc8] sm:$0xff]
    %v114 = vld [vmem:[#allocation5 + $0xd0] sm:$0xff]
    %v115 = vld [vmem:[#allocation5 + $0xd8] sm:$0xff]
    %v116 = vld [vmem:[#allocation5 + $0xe0] sm:$0xff]
    %v117 = vld [vmem:[#allocation5 + $0xe8] sm:$0xff]
    %v118 = vld [vmem:[#allocation5 + $0xf0] sm:$0xff]
    %v119 = vld [vmem:[#allocation5 + $0xf8] sm:$0xff]
    %v120 = vld [vmem:[#allocation7] sm:$0xff]
    %v121 = vld [vmem:[%s3] sm:$0xff]
    %v122 = vld [vmem:[#allocation8] sm:$0xff]
    %v123 = vld [vmem:[#allocation10] sm:$0xff]
    %v124 = vld [vmem:[#allocation10 + $0x8] sm:$0xff]
    %v125 = vld [vmem:[#allocation10 + $0x10] sm:$0xff]
    %v126 = vld [vmem:[#allocation10 + $0x18] sm:$0xff]
    %v127 = vld [vmem:[#allocation10 + $0x20] sm:$0xff]
    %v128 = vld [vmem:[#allocation10 + $0x28] sm:$0xff]
    %v129 = vld [vmem:[#allocation10 + $0x30] sm:$0xff]
    %v130 = vld [vmem:[#allocation10 + $0x38] sm:$0xff]
    %v131 = vld [vmem:[#allocation10 + $0x40] sm:$0xff]
    %v132 = vld [vmem:[#allocation10 + $0x48] sm:$0xff]
    %v133 = vld [vmem:[#allocation10 + $0x50] sm:$0xff]
    %v134 = vld [vmem:[#allocation10 + $0x58] sm:$0xff]
    %v135 = vld [vmem:[#allocation10 + $0x60] sm:$0xff]
    %v136 = vld [vmem:[#allocation10 + $0x68] sm:$0xff]
    %v137 = vld [vmem:[#allocation10 + $0x70] sm:$0xff]
    %v138 = vld [vmem:[#allocation10 + $0x78] sm:$0xff]
    %v139 = vld [vmem:[#allocation10 + $0x80] sm:$0xff]
    %v140 = vld [vmem:[#allocation10 + $0x88] sm:$0xff]
    %v141 = vld [vmem:[#allocation10 + $0x90] sm:$0xff]
    %v142 = vld [vmem:[#allocation10 + $0x98] sm:$0xff]
    %v143 = vld [vmem:[#allocation10 + $0xa0] sm:$0xff]
    %v144 = vld [vmem:[#allocation10 + $0xa8] sm:$0xff]
    %v145 = vld [vmem:[#allocation10 + $0xb0] sm:$0xff]
    %v146 = vld [vmem:[#allocation10 + $0xb8] sm:$0xff]
    %v147 = vld [vmem:[#allocation10 + $0xc0] sm:$0xff]
    %v148 = vld [vmem:[#allocation10 + $0xc8] sm:$0xff]
    %v149 = vld [vmem:[#allocation10 + $0xd0] sm:$0xff]
    %v150 = vld [vmem:[#allocation10 + $0xd8] sm:$0xff]
    %v151 = vld [vmem:[#allocation10 + $0xe0] sm:$0xff]
    %v152 = vld [vmem:[#allocation10 + $0xe8] sm:$0xff]
    %v153 = vld [vmem:[#allocation10 + $0xf0] sm:$0xff]
    %v154 = vld [vmem:[#allocation10 + $0xf8] sm:$0xff]
    %v155 = vld [vmem:[#allocation2] sm:$0xff]
    %v156 = vld [vmem:[#allocation2 + $0x8] sm:$0xff]
    %157 = vst [vmem:[#allocation11] sm:$0xff] %v155
    %158 = vst [vmem:[#allocation11 + $0x8] sm:$0xff] %v156
    %159 = vmatprep.subr.mxu0 0.0
    %v160 = vand.u32 %v88, 4294901760
    %161 = vmatpush1.msra.mxu0 %v160
    %162 = vmatprep.subr.mxu0 0.0
    %v163 = vand.u32 %v89, 4294901760
    %164 = vmatpush1.msra.mxu0 %v163
    %165 = vmatprep.subr.mxu0 0.0
    %v166 = vand.u32 %v90, 4294901760
    %167 = vmatpush1.msra.mxu0 %v166
    %168 = vmatprep.subr.mxu0 0.0
    %v169 = vand.u32 %v91, 4294901760
    %170 = vmatpush1.msra.mxu0 %v169
    %171 = vmatprep.subr.mxu0 0.0
    %v172 = vand.u32 %v92, 4294901760
    %173 = vmatpush1.msra.mxu0 %v172
    %174 = vmatprep.subr.mxu0 0.0
    %v175 = vand.u32 %v93, 4294901760
    %176 = vmatpush1.msra.mxu0 %v175
    %177 = vmatprep.subr.mxu0 0.0
    %v178 = vand.u32 %v94, 4294901760
    %179 = vmatpush1.msra.mxu0 %v178
    %180 = vmatprep.subr.mxu0 0.0
    %v181 = vand.u32 %v95, 4294901760
    %182 = vmatpush1.msra.mxu0 %v181
    %183 = vmatprep.subr.mxu0 0.0
    %v184 = vand.u32 %v96, 4294901760
    %185 = vmatpush1.msra.mxu0 %v184
    %186 = vmatprep.subr.mxu0 0.0
    %v187 = vand.u32 %v97, 4294901760
    %188 = vmatpush1.msra.mxu0 %v187
    %189 = vmatprep.subr.mxu0 0.0
    %v190 = vand.u32 %v98, 4294901760
    %191 = vmatpush1.msra.mxu0 %v190
    %192 = vmatprep.subr.mxu0 0.0
    %v193 = vand.u32 %v99, 4294901760
    %194 = vmatpush1.msra.mxu0 %v193
    %195 = vmatprep.subr.mxu0 0.0
    %v196 = vand.u32 %v100, 4294901760
    %197 = vmatpush1.msra.mxu0 %v196
    %198 = vmatprep.subr.mxu0 0.0
    %v199 = vand.u32 %v101, 4294901760
    %200 = vmatpush1.msra.mxu0 %v199
    %201 = vmatprep.subr.mxu0 0.0
    %v202 = vand.u32 %v102, 4294901760
    %203 = vmatpush1.msra.mxu0 %v202
    %204 = vmatprep.subr.mxu0 0.0
    %v205 = vand.u32 %v103, 4294901760
    %206 = vmatpush1.msra.mxu0 %v205
    %207 = vmatprep.subr.mxu0 0.0
    %v208 = vand.u32 %v104, 4294901760
    %209 = vmatpush1.msra.mxu0 %v208
    %210 = vmatprep.subr.mxu0 0.0
    %v211 = vand.u32 %v105, 4294901760
    %212 = vmatpush1.msra.mxu0 %v211
    %213 = vmatprep.subr.mxu0 0.0
    %v214 = vand.u32 %v106, 4294901760
    %215 = vmatpush1.msra.mxu0 %v214
    %216 = vmatprep.subr.mxu0 0.0
    %v217 = vand.u32 %v107, 4294901760
    %218 = vmatpush1.msra.mxu0 %v217
    %219 = vmatprep.subr.mxu0 0.0
    %v220 = vand.u32 %v108, 4294901760
    %221 = vmatpush1.msra.mxu0 %v220
    %222 = vmatprep.subr.mxu0 0.0
    %v223 = vand.u32 %v109, 4294901760
    %224 = vmatpush1.msra.mxu0 %v223
    %225 = vmatprep.subr.mxu0 0.0
    %v226 = vand.u32 %v110, 4294901760
    %227 = vmatpush1.msra.mxu0 %v226
    %228 = vmatprep.subr.mxu0 0.0
    %v229 = vand.u32 %v111, 4294901760
    %230 = vmatpush1.msra.mxu0 %v229
    %231 = vmatprep.subr.mxu0 0.0
    %v232 = vand.u32 %v112, 4294901760
    %233 = vmatpush1.msra.mxu0 %v232
    %234 = vmatprep.subr.mxu0 0.0
    %v235 = vand.u32 %v113, 4294901760
    %236 = vmatpush1.msra.mxu0 %v235
    %237 = vmatprep.subr.mxu0 0.0
    %v238 = vand.u32 %v114, 4294901760
    %239 = vmatpush1.msra.mxu0 %v238
    %240 = vmatprep.subr.mxu0 0.0
    %v241 = vand.u32 %v115, 4294901760
    %242 = vmatpush1.msra.mxu0 %v241
    %243 = vmatprep.subr.mxu0 0.0
    %v244 = vand.u32 %v116, 4294901760
    %245 = vmatpush1.msra.mxu0 %v244
    %246 = vmatprep.subr.mxu0 0.0
    %v247 = vand.u32 %v117, 4294901760
    %248 = vmatpush1.msra.mxu0 %v247
    %249 = vmatprep.subr.mxu0 0.0
    %v250 = vand.u32 %v118, 4294901760
    %251 = vmatpush1.msra.mxu0 %v250
    %252 = vmatprep.subr.mxu0 0.0
    %v253 = vand.u32 %v119, 4294901760
    %254 = vmatpush1.msra.mxu0 %v253
    %v255 = vand.u32 %v156, 4294901760
    %v256 = vsub.f32 %v156, %v255
    %v257 = vand.u32 %v256, 4294901760
    %v258 = vsub.f32 %v256, %v257
    %v259 = vand.u32 %v258, 4294901760
    %260 = vmatprep.mubr.f32.mxu0 %v259
    %v261 = vand.u32 %v155, 4294901760
    %v262 = vsub.f32 %v155, %v261
    %v263 = vand.u32 %v262, 4294901760
    %v264 = vsub.f32 %v262, %v263
    %v265 = vand.u32 %v264, 4294901760
    %266 = vmatmul.mubr.f32.gmra.mrb[0].mxu0 %v265
    %v267 = vpop.f32.mrb[0].mxu0
    %v268 = vadd.f32 0.0, %v267
    %v269 = vpop.f32.mrb[0].mxu0
    %270 = vdwg.mxu0
    %271 = vmatprep.subr.mxu0 0.0
    %v272 = vand.u32 %v88, 4294901760
    %v273 = vsub.f32 %v88, %v272
    %v274 = vand.u32 %v273, 4294901760
    %v275 = vsub.f32 %v273, %v274
    %v276 = vand.u32 %v275, 4294901760
    %277 = vmatpush1.msra.mxu0 %v276
    %278 = vmatprep.subr.mxu0 0.0
    %v279 = vand.u32 %v89, 4294901760
    %v280 = vsub.f32 %v89, %v279
    %v281 = vand.u32 %v280, 4294901760
    %v282 = vsub.f32 %v280, %v281
    %v283 = vand.u32 %v282, 4294901760
    %284 = vmatpush1.msra.mxu0 %v283
    %285 = vmatprep.subr.mxu0 0.0
    %v286 = vand.u32 %v90, 4294901760
    %v287 = vsub.f32 %v90, %v286
    %v288 = vand.u32 %v287, 4294901760
    %v289 = vsub.f32 %v287, %v288
    %v290 = vand.u32 %v289, 4294901760
    %291 = vmatpush1.msra.mxu0 %v290
    %292 = vmatprep.subr.mxu0 0.0
    %v293 = vand.u32 %v91, 4294901760
    %v294 = vsub.f32 %v91, %v293
    %v295 = vand.u32 %v294, 4294901760
    %v296 = vsub.f32 %v294, %v295
    %v297 = vand.u32 %v296, 4294901760
    %298 = vmatpush1.msra.mxu0 %v297
    %299 = vmatprep.subr.mxu0 0.0
    %v300 = vand.u32 %v92, 4294901760
    %v301 = vsub.f32 %v92, %v300
    %v302 = vand.u32 %v301, 4294901760
    %v303 = vsub.f32 %v301, %v302
    %v304 = vand.u32 %v303, 4294901760
    %305 = vmatpush1.msra.mxu0 %v304
    %306 = vmatprep.subr.mxu0 0.0
    %v307 = vand.u32 %v93, 4294901760
    %v308 = vsub.f32 %v93, %v307
    %v309 = vand.u32 %v308, 4294901760
    %v310 = vsub.f32 %v308, %v309
    %v311 = vand.u32 %v310, 4294901760
    %312 = vmatpush1.msra.mxu0 %v311
    %313 = vmatprep.subr.mxu0 0.0
    %v314 = vand.u32 %v94, 4294901760
    %v315 = vsub.f32 %v94, %v314
    %v316 = vand.u32 %v315, 4294901760
    %v317 = vsub.f32 %v315, %v316
    %v318 = vand.u32 %v317, 4294901760
    %319 = vmatpush1.msra.mxu0 %v318
    %320 = vmatprep.subr.mxu0 0.0
    %v321 = vand.u32 %v95, 4294901760
    %v322 = vsub.f32 %v95, %v321
    %v323 = vand.u32 %v322, 4294901760
    %v324 = vsub.f32 %v322, %v323
    %v325 = vand.u32 %v324, 4294901760
    %326 = vmatpush1.msra.mxu0 %v325
    %327 = vmatprep.subr.mxu0 0.0
    %v328 = vand.u32 %v96, 4294901760
    %v329 = vsub.f32 %v96, %v328
    %v330 = vand.u32 %v329, 4294901760
    %v331 = vsub.f32 %v329, %v330
    %v332 = vand.u32 %v331, 4294901760
    %333 = vmatpush1.msra.mxu0 %v332
    %334 = vmatprep.subr.mxu0 0.0
    %v335 = vand.u32 %v97, 4294901760
    %v336 = vsub.f32 %v97, %v335
    %v337 = vand.u32 %v336, 4294901760
    %v338 = vsub.f32 %v336, %v337
    %v339 = vand.u32 %v338, 4294901760
    %340 = vmatpush1.msra.mxu0 %v339
    %341 = vmatprep.subr.mxu0 0.0
    %v342 = vand.u32 %v98, 4294901760
    %v343 = vsub.f32 %v98, %v342
    %v344 = vand.u32 %v343, 4294901760
    %v345 = vsub.f32 %v343, %v344
    %v346 = vand.u32 %v345, 4294901760
    %347 = vmatpush1.msra.mxu0 %v346
    %348 = vmatprep.subr.mxu0 0.0
    %v349 = vand.u32 %v99, 4294901760
    %v350 = vsub.f32 %v99, %v349
    %v351 = vand.u32 %v350, 4294901760
    %v352 = vsub.f32 %v350, %v351
    %v353 = vand.u32 %v352, 4294901760
    %354 = vmatpush1.msra.mxu0 %v353
    %355 = vmatprep.subr.mxu0 0.0
    %v356 = vand.u32 %v100, 4294901760
    %v357 = vsub.f32 %v100, %v356
    %v358 = vand.u32 %v357, 4294901760
    %v359 = vsub.f32 %v357, %v358
    %v360 = vand.u32 %v359, 4294901760
    %361 = vmatpush1.msra.mxu0 %v360
    %362 = vmatprep.subr.mxu0 0.0
    %v363 = vand.u32 %v101, 4294901760
    %v364 = vsub.f32 %v101, %v363
    %v365 = vand.u32 %v364, 4294901760
    %v366 = vsub.f32 %v364, %v365
    %v367 = vand.u32 %v366, 4294901760
    %368 = vmatpush1.msra.mxu0 %v367
    %369 = vmatprep.subr.mxu0 0.0
    %v370 = vand.u32 %v102, 4294901760
    %v371 = vsub.f32 %v102, %v370
    %v372 = vand.u32 %v371, 4294901760
    %v373 = vsub.f32 %v371, %v372
    %v374 = vand.u32 %v373, 4294901760
    %375 = vmatpush1.msra.mxu0 %v374
    %376 = vmatprep.subr.mxu0 0.0
    %v377 = vand.u32 %v103, 4294901760
    %v378 = vsub.f32 %v103, %v377
    %v379 = vand.u32 %v378, 4294901760
    %v380 = vsub.f32 %v378, %v379
    %v381 = vand.u32 %v380, 4294901760
    %382 = vmatpush1.msra.mxu0 %v381
    %383 = vmatprep.subr.mxu0 0.0
    %v384 = vand.u32 %v104, 4294901760
    %v385 = vsub.f32 %v104, %v384
    %v386 = vand.u32 %v385, 4294901760
    %v387 = vsub.f32 %v385, %v386
    %v388 = vand.u32 %v387, 4294901760
    %389 = vmatpush1.msra.mxu0 %v388
    %390 = vmatprep.subr.mxu0 0.0
    %v391 = vand.u32 %v105, 4294901760
    %v392 = vsub.f32 %v105, %v391
    %v393 = vand.u32 %v392, 4294901760
    %v394 = vsub.f32 %v392, %v393
    %v395 = vand.u32 %v394, 4294901760
    %396 = vmatpush1.msra.mxu0 %v395
    %397 = vmatprep.subr.mxu0 0.0
    %v398 = vand.u32 %v106, 4294901760
    %v399 = vsub.f32 %v106, %v398
    %v400 = vand.u32 %v399, 4294901760
    %v401 = vsub.f32 %v399, %v400
    %v402 = vand.u32 %v401, 4294901760
    %403 = vmatpush1.msra.mxu0 %v402
    %404 = vmatprep.subr.mxu0 0.0
    %v405 = vand.u32 %v107, 4294901760
    %v406 = vsub.f32 %v107, %v405
    %v407 = vand.u32 %v406, 4294901760
    %v408 = vsub.f32 %v406, %v407
    %v409 = vand.u32 %v408, 4294901760
    %410 = vmatpush1.msra.mxu0 %v409
    %411 = vmatprep.subr.mxu0 0.0
    %v412 = vand.u32 %v108, 4294901760
    %v413 = vsub.f32 %v108, %v412
    %v414 = vand.u32 %v413, 4294901760
    %v415 = vsub.f32 %v413, %v414
    %v416 = vand.u32 %v415, 4294901760
    %417 = vmatpush1.msra.mxu0 %v416
    %418 = vmatprep.subr.mxu0 0.0
    %v419 = vand.u32 %v109, 4294901760
    %v420 = vsub.f32 %v109, %v419
    %v421 = vand.u32 %v420, 4294901760
    %v422 = vsub.f32 %v420, %v421
    %v423 = vand.u32 %v422, 4294901760
    %424 = vmatpush1.msra.mxu0 %v423
    %425 = vmatprep.subr.mxu0 0.0
    %v426 = vand.u32 %v110, 4294901760
    %v427 = vsub.f32 %v110, %v426
    %v428 = vand.u32 %v427, 4294901760
    %v429 = vsub.f32 %v427, %v428
    %v430 = vand.u32 %v429, 4294901760
    %431 = vmatpush1.msra.mxu0 %v430
    %432 = vmatprep.subr.mxu0 0.0
    %v433 = vand.u32 %v111, 4294901760
    %v434 = vsub.f32 %v111, %v433
    %v435 = vand.u32 %v434, 4294901760
    %v436 = vsub.f32 %v434, %v435
    %v437 = vand.u32 %v436, 4294901760
    %438 = vmatpush1.msra.mxu0 %v437
    %439 = vmatprep.subr.mxu0 0.0
    %v440 = vand.u32 %v112, 4294901760
    %v441 = vsub.f32 %v112, %v440
    %v442 = vand.u32 %v441, 4294901760
    %v443 = vsub.f32 %v441, %v442
    %v444 = vand.u32 %v443, 4294901760
    %445 = vmatpush1.msra.mxu0 %v444
    %446 = vmatprep.subr.mxu0 0.0
    %v447 = vand.u32 %v113, 4294901760
    %v448 = vsub.f32 %v113, %v447
    %v449 = vand.u32 %v448, 4294901760
    %v450 = vsub.f32 %v448, %v449
    %v451 = vand.u32 %v450, 4294901760
    %452 = vmatpush1.msra.mxu0 %v451
    %453 = vmatprep.subr.mxu0 0.0
    %v454 = vand.u32 %v114, 4294901760
    %v455 = vsub.f32 %v114, %v454
    %v456 = vand.u32 %v455, 4294901760
    %v457 = vsub.f32 %v455, %v456
    %v458 = vand.u32 %v457, 4294901760
    %459 = vmatpush1.msra.mxu0 %v458
    %460 = vmatprep.subr.mxu0 0.0
    %v461 = vand.u32 %v115, 4294901760
    %v462 = vsub.f32 %v115, %v461
    %v463 = vand.u32 %v462, 4294901760
    %v464 = vsub.f32 %v462, %v463
    %v465 = vand.u32 %v464, 4294901760
    %466 = vmatpush1.msra.mxu0 %v465
    %467 = vmatprep.subr.mxu0 0.0
    %v468 = vand.u32 %v116, 4294901760
    %v469 = vsub.f32 %v116, %v468
    %v470 = vand.u32 %v469, 4294901760
    %v471 = vsub.f32 %v469, %v470
    %v472 = vand.u32 %v471, 4294901760
    %473 = vmatpush1.msra.mxu0 %v472
    %474 = vmatprep.subr.mxu0 0.0
    %v475 = vand.u32 %v117, 4294901760
    %v476 = vsub.f32 %v117, %v475
    %v477 = vand.u32 %v476, 4294901760
    %v478 = vsub.f32 %v476, %v477
    %v479 = vand.u32 %v478, 4294901760
    %480 = vmatpush1.msra.mxu0 %v479
    %481 = vmatprep.subr.mxu0 0.0
    %v482 = vand.u32 %v118, 4294901760
    %v483 = vsub.f32 %v118, %v482
    %v484 = vand.u32 %v483, 4294901760
    %v485 = vsub.f32 %v483, %v484
    %v486 = vand.u32 %v485, 4294901760
    %487 = vmatpush1.msra.mxu0 %v486
    %488 = vmatprep.subr.mxu0 0.0
    %v489 = vand.u32 %v119, 4294901760
    %v490 = vsub.f32 %v119, %v489
    %v491 = vand.u32 %v490, 4294901760
    %v492 = vsub.f32 %v490, %v491
    %v493 = vand.u32 %v492, 4294901760
    %494 = vmatpush1.msra.mxu0 %v493
    %v495 = vand.u32 %v156, 4294901760
    %496 = vmatprep.mubr.f32.mxu0 %v495
    %v497 = vand.u32 %v155, 4294901760
    %498 = vmatmul.mubr.f32.gmra.mrb[0].mxu0 %v497
    %v499 = vpop.f32.mrb[0].mxu0
    %v500 = vadd.f32 %v268, %v499
    %v501 = vpop.f32.mrb[0].mxu0
    %502 = vdwg.mxu0
    %503 = vmatprep.subr.mxu0 0.0
    %v504 = vand.u32 %v88, 4294901760
    %v505 = vsub.f32 %v88, %v504
    %506 = vmatpush1.msra.mxu0 %v505
    %507 = vmatprep.subr.mxu0 0.0
    %v508 = vand.u32 %v89, 4294901760
    %v509 = vsub.f32 %v89, %v508
    %510 = vmatpush1.msra.mxu0 %v509
    %511 = vmatprep.subr.mxu0 0.0
    %v512 = vand.u32 %v90, 4294901760
    %v513 = vsub.f32 %v90, %v512
    %514 = vmatpush1.msra.mxu0 %v513
    %515 = vmatprep.subr.mxu0 0.0
    %v516 = vand.u32 %v91, 4294901760
    %v517 = vsub.f32 %v91, %v516
    %518 = vmatpush1.msra.mxu0 %v517
    %519 = vmatprep.subr.mxu0 0.0
    %v520 = vand.u32 %v92, 4294901760
    %v521 = vsub.f32 %v92, %v520
    %522 = vmatpush1.msra.mxu0 %v521
    %523 = vmatprep.subr.mxu0 0.0
    %v524 = vand.u32 %v93, 4294901760
    %v525 = vsub.f32 %v93, %v524
    %526 = vmatpush1.msra.mxu0 %v525
    %527 = vmatprep.subr.mxu0 0.0
    %v528 = vand.u32 %v94, 4294901760
    %v529 = vsub.f32 %v94, %v528
    %530 = vmatpush1.msra.mxu0 %v529
    %531 = vmatprep.subr.mxu0 0.0
    %v532 = vand.u32 %v95, 4294901760
    %v533 = vsub.f32 %v95, %v532
    %534 = vmatpush1.msra.mxu0 %v533
    %535 = vmatprep.subr.mxu0 0.0
    %v536 = vand.u32 %v96, 4294901760
    %v537 = vsub.f32 %v96, %v536
    %538 = vmatpush1.msra.mxu0 %v537
    %539 = vmatprep.subr.mxu0 0.0
    %v540 = vand.u32 %v97, 4294901760
    %v541 = vsub.f32 %v97, %v540
    %542 = vmatpush1.msra.mxu0 %v541
    %543 = vmatprep.subr.mxu0 0.0
    %v544 = vand.u32 %v98, 4294901760
    %v545 = vsub.f32 %v98, %v544
    %546 = vmatpush1.msra.mxu0 %v545
    %547 = vmatprep.subr.mxu0 0.0
    %v548 = vand.u32 %v99, 4294901760
    %v549 = vsub.f32 %v99, %v548
    %550 = vmatpush1.msra.mxu0 %v549
    %551 = vmatprep.subr.mxu0 0.0
    %v552 = vand.u32 %v100, 4294901760
    %v553 = vsub.f32 %v100, %v552
    %554 = vmatpush1.msra.mxu0 %v553
    %555 = vmatprep.subr.mxu0 0.0
    %v556 = vand.u32 %v101, 4294901760
    %v557 = vsub.f32 %v101, %v556
    %558 = vmatpush1.msra.mxu0 %v557
    %559 = vmatprep.subr.mxu0 0.0
    %v560 = vand.u32 %v102, 4294901760
    %v561 = vsub.f32 %v102, %v560
    %562 = vmatpush1.msra.mxu0 %v561
    %563 = vmatprep.subr.mxu0 0.0
    %v564 = vand.u32 %v103, 4294901760
    %v565 = vsub.f32 %v103, %v564
    %566 = vmatpush1.msra.mxu0 %v565
    %567 = vmatprep.subr.mxu0 0.0
    %v568 = vand.u32 %v104, 4294901760
    %v569 = vsub.f32 %v104, %v568
    %570 = vmatpush1.msra.mxu0 %v569
    %571 = vmatprep.subr.mxu0 0.0
    %v572 = vand.u32 %v105, 4294901760
    %v573 = vsub.f32 %v105, %v572
    %574 = vmatpush1.msra.mxu0 %v573
    %575 = vmatprep.subr.mxu0 0.0
    %v576 = vand.u32 %v106, 4294901760
    %v577 = vsub.f32 %v106, %v576
    %578 = vmatpush1.msra.mxu0 %v577
    %579 = vmatprep.subr.mxu0 0.0
    %v580 = vand.u32 %v107, 4294901760
    %v581 = vsub.f32 %v107, %v580
    %582 = vmatpush1.msra.mxu0 %v581
    %583 = vmatprep.subr.mxu0 0.0
    %v584 = vand.u32 %v108, 4294901760
    %v585 = vsub.f32 %v108, %v584
    %586 = vmatpush1.msra.mxu0 %v585
    %587 = vmatprep.subr.mxu0 0.0
    %v588 = vand.u32 %v109, 4294901760
    %v589 = vsub.f32 %v109, %v588
    %590 = vmatpush1.msra.mxu0 %v589
    %591 = vmatprep.subr.mxu0 0.0
    %v592 = vand.u32 %v110, 4294901760
    %v593 = vsub.f32 %v110, %v592
    %594 = vmatpush1.msra.mxu0 %v593
    %595 = vmatprep.subr.mxu0 0.0
    %v596 = vand.u32 %v111, 4294901760
    %v597 = vsub.f32 %v111, %v596
    %598 = vmatpush1.msra.mxu0 %v597
    %599 = vmatprep.subr.mxu0 0.0
    %v600 = vand.u32 %v112, 4294901760
    %v601 = vsub.f32 %v112, %v600
    %602 = vmatpush1.msra.mxu0 %v601
    %603 = vmatprep.subr.mxu0 0.0
    %v604 = vand.u32 %v113, 4294901760
    %v605 = vsub.f32 %v113, %v604
    %606 = vmatpush1.msra.mxu0 %v605
    %607 = vmatprep.subr.mxu0 0.0
    %v608 = vand.u32 %v114, 4294901760
    %v609 = vsub.f32 %v114, %v608
    %610 = vmatpush1.msra.mxu0 %v609
    %611 = vmatprep.subr.mxu0 0.0
    %v612 = vand.u32 %v115, 4294901760
    %v613 = vsub.f32 %v115, %v612
    %614 = vmatpush1.msra.mxu0 %v613
    %615 = vmatprep.subr.mxu0 0.0
    %v616 = vand.u32 %v116, 4294901760
    %v617 = vsub.f32 %v116, %v616
    %618 = vmatpush1.msra.mxu0 %v617
    %619 = vmatprep.subr.mxu0 0.0
    %v620 = vand.u32 %v117, 4294901760
    %v621 = vsub.f32 %v117, %v620
    %622 = vmatpush1.msra.mxu0 %v621
    %623 = vmatprep.subr.mxu0 0.0
    %v624 = vand.u32 %v118, 4294901760
    %v625 = vsub.f32 %v118, %v624
    %626 = vmatpush1.msra.mxu0 %v625
    %627 = vmatprep.subr.mxu0 0.0
    %v628 = vand.u32 %v119, 4294901760
    %v629 = vsub.f32 %v119, %v628
    %630 = vmatpush1.msra.mxu0 %v629
    %v631 = vand.u32 %v156, 4294901760
    %v632 = vsub.f32 %v156, %v631
    %633 = vmatprep.mubr.f32.mxu0 %v632
    %v634 = vand.u32 %v155, 4294901760
    %v635 = vsub.f32 %v155, %v634
    %636 = vmatmul.mubr.f32.gmra.mrb[0].mxu0 %v635
    %v637 = vpop.f32.mrb[0].mxu0
    %v638 = vadd.f32 %v500, %v637
    %v639 = vpop.f32.mrb[0].mxu0
    %640 = vdwg.mxu0
    %641 = vmatprep.subr.mxu0 0.0
    %v642 = vand.u32 %v88, 4294901760
    %643 = vmatpush1.msra.mxu0 %v642
    %644 = vmatprep.subr.mxu0 0.0
    %v645 = vand.u32 %v89, 4294901760
    %646 = vmatpush1.msra.mxu0 %v645
    %647 = vmatprep.subr.mxu0 0.0
    %v648 = vand.u32 %v90, 4294901760
    %649 = vmatpush1.msra.mxu0 %v648
    %650 = vmatprep.subr.mxu0 0.0
    %v651 = vand.u32 %v91, 4294901760
    %652 = vmatpush1.msra.mxu0 %v651
    %653 = vmatprep.subr.mxu0 0.0
    %v654 = vand.u32 %v92, 4294901760
    %655 = vmatpush1.msra.mxu0 %v654
    %656 = vmatprep.subr.mxu0 0.0
    %v657 = vand.u32 %v93, 4294901760
    %658 = vmatpush1.msra.mxu0 %v657
    %659 = vmatprep.subr.mxu0 0.0
    %v660 = vand.u32 %v94, 4294901760
    %661 = vmatpush1.msra.mxu0 %v660
    %662 = vmatprep.subr.mxu0 0.0
    %v663 = vand.u32 %v95, 4294901760
    %664 = vmatpush1.msra.mxu0 %v663
    %665 = vmatprep.subr.mxu0 0.0
    %v666 = vand.u32 %v96, 4294901760
    %667 = vmatpush1.msra.mxu0 %v666
    %668 = vmatprep.subr.mxu0 0.0
    %v669 = vand.u32 %v97, 4294901760
    %670 = vmatpush1.msra.mxu0 %v669
    %671 = vmatprep.subr.mxu0 0.0
    %v672 = vand.u32 %v98, 4294901760
    %673 = vmatpush1.msra.mxu0 %v672
    %674 = vmatprep.subr.mxu0 0.0
    %v675 = vand.u32 %v99, 4294901760
    %676 = vmatpush1.msra.mxu0 %v675
    %677 = vmatprep.subr.mxu0 0.0
    %v678 = vand.u32 %v100, 4294901760
    %679 = vmatpush1.msra.mxu0 %v678
    %680 = vmatprep.subr.mxu0 0.0
    %v681 = vand.u32 %v101, 4294901760
    %682 = vmatpush1.msra.mxu0 %v681
    %683 = vmatprep.subr.mxu0 0.0
    %v684 = vand.u32 %v102, 4294901760
    %685 = vmatpush1.msra.mxu0 %v684
    %686 = vmatprep.subr.mxu0 0.0
    %v687 = vand.u32 %v103, 4294901760
    %688 = vmatpush1.msra.mxu0 %v687
    %689 = vmatprep.subr.mxu0 0.0
    %v690 = vand.u32 %v104, 4294901760
    %691 = vmatpush1.msra.mxu0 %v690
    %692 = vmatprep.subr.mxu0 0.0
    %v693 = vand.u32 %v105, 4294901760
    %694 = vmatpush1.msra.mxu0 %v693
    %695 = vmatprep.subr.mxu0 0.0
    %v696 = vand.u32 %v106, 4294901760
    %697 = vmatpush1.msra.mxu0 %v696
    %698 = vmatprep.subr.mxu0 0.0
    %v699 = vand.u32 %v107, 4294901760
    %700 = vmatpush1.msra.mxu0 %v699
    %701 = vmatprep.subr.mxu0 0.0
    %v702 = vand.u32 %v108, 4294901760
    %703 = vmatpush1.msra.mxu0 %v702
    %704 = vmatprep.subr.mxu0 0.0
    %v705 = vand.u32 %v109, 4294901760
    %706 = vmatpush1.msra.mxu0 %v705
    %707 = vmatprep.subr.mxu0 0.0
    %v708 = vand.u32 %v110, 4294901760
    %709 = vmatpush1.msra.mxu0 %v708
    %710 = vmatprep.subr.mxu0 0.0
    %v711 = vand.u32 %v111, 4294901760
    %712 = vmatpush1.msra.mxu0 %v711
    %713 = vmatprep.subr.mxu0 0.0
    %v714 = vand.u32 %v112, 4294901760
    %715 = vmatpush1.msra.mxu0 %v714
    %716 = vmatprep.subr.mxu0 0.0
    %v717 = vand.u32 %v113, 4294901760
    %718 = vmatpush1.msra.mxu0 %v717
    %719 = vmatprep.subr.mxu0 0.0
    %v720 = vand.u32 %v114, 4294901760
    %721 = vmatpush1.msra.mxu0 %v720
    %722 = vmatprep.subr.mxu0 0.0
    %v723 = vand.u32 %v115, 4294901760
    %724 = vmatpush1.msra.mxu0 %v723
    %725 = vmatprep.subr.mxu0 0.0
    %v726 = vand.u32 %v116, 4294901760
    %727 = vmatpush1.msra.mxu0 %v726
    %728 = vmatprep.subr.mxu0 0.0
    %v729 = vand.u32 %v117, 4294901760
    %730 = vmatpush1.msra.mxu0 %v729
    %731 = vmatprep.subr.mxu0 0.0
    %v732 = vand.u32 %v118, 4294901760
    %733 = vmatpush1.msra.mxu0 %v732
    %734 = vmatprep.subr.mxu0 0.0
    %v735 = vand.u32 %v119, 4294901760
    %736 = vmatpush1.msra.mxu0 %v735
    %v737 = vand.u32 %v156, 4294901760
    %v738 = vsub.f32 %v156, %v737
    %v739 = vand.u32 %v738, 4294901760
    %740 = vmatprep.mubr.f32.mxu0 %v739
    %v741 = vand.u32 %v155, 4294901760
    %v742 = vsub.f32 %v155, %v741
    %v743 = vand.u32 %v742, 4294901760
    %744 = vmatmul.mubr.f32.gmra.mrb[0].mxu0 %v743
    %v745 = vpop.f32.mrb[0].mxu0
    %v746 = vadd.f32 %v638, %v745
    %v747 = vpop.f32.mrb[0].mxu0
    %748 = vdwg.mxu0
    %749 = vmatprep.subr.mxu0 0.0
    %v750 = vand.u32 %v88, 4294901760
    %v751 = vsub.f32 %v88, %v750
    %v752 = vand.u32 %v751, 4294901760
    %753 = vmatpush1.msra.mxu0 %v752
    %754 = vmatprep.subr.mxu0 0.0
    %v755 = vand.u32 %v89, 4294901760
    %v756 = vsub.f32 %v89, %v755
    %v757 = vand.u32 %v756, 4294901760
    %758 = vmatpush1.msra.mxu0 %v757
    %759 = vmatprep.subr.mxu0 0.0
    %v760 = vand.u32 %v90, 4294901760
    %v761 = vsub.f32 %v90, %v760
    %v762 = vand.u32 %v761, 4294901760
    %763 = vmatpush1.msra.mxu0 %v762
    %764 = vmatprep.subr.mxu0 0.0
    %v765 = vand.u32 %v91, 4294901760
    %v766 = vsub.f32 %v91, %v765
    %v767 = vand.u32 %v766, 4294901760
    %768 = vmatpush1.msra.mxu0 %v767
    %769 = vmatprep.subr.mxu0 0.0
    %v770 = vand.u32 %v92, 4294901760
    %v771 = vsub.f32 %v92, %v770
    %v772 = vand.u32 %v771, 4294901760
    %773 = vmatpush1.msra.mxu0 %v772
    %774 = vmatprep.subr.mxu0 0.0
    %v775 = vand.u32 %v93, 4294901760
    %v776 = vsub.f32 %v93, %v775
    %v777 = vand.u32 %v776, 4294901760
    %778 = vmatpush1.msra.mxu0 %v777
    %779 = vmatprep.subr.mxu0 0.0
    %v780 = vand.u32 %v94, 4294901760
    %v781 = vsub.f32 %v94, %v780
    %v782 = vand.u32 %v781, 4294901760
    %783 = vmatpush1.msra.mxu0 %v782
    %784 = vmatprep.subr.mxu0 0.0
    %v785 = vand.u32 %v95, 4294901760
    %v786 = vsub.f32 %v95, %v785
    %v787 = vand.u32 %v786, 4294901760
    %788 = vmatpush1.msra.mxu0 %v787
    %789 = vmatprep.subr.mxu0 0.0
    %v790 = vand.u32 %v96, 4294901760
    %v791 = vsub.f32 %v96, %v790
    %v792 = vand.u32 %v791, 4294901760
    %793 = vmatpush1.msra.mxu0 %v792
    %794 = vmatprep.subr.mxu0 0.0
    %v795 = vand.u32 %v97, 4294901760
    %v796 = vsub.f32 %v97, %v795
    %v797 = vand.u32 %v796, 4294901760
    %798 = vmatpush1.msra.mxu0 %v797
    %799 = vmatprep.subr.mxu0 0.0
    %v800 = vand.u32 %v98, 4294901760
    %v801 = vsub.f32 %v98, %v800
    %v802 = vand.u32 %v801, 4294901760
    %803 = vmatpush1.msra.mxu0 %v802
    %804 = vmatprep.subr.mxu0 0.0
    %v805 = vand.u32 %v99, 4294901760
    %v806 = vsub.f32 %v99, %v805
    %v807 = vand.u32 %v806, 4294901760
    %808 = vmatpush1.msra.mxu0 %v807
    %809 = vmatprep.subr.mxu0 0.0
    %v810 = vand.u32 %v100, 4294901760
    %v811 = vsub.f32 %v100, %v810
    %v812 = vand.u32 %v811, 4294901760
    %813 = vmatpush1.msra.mxu0 %v812
    %814 = vmatprep.subr.mxu0 0.0
    %v815 = vand.u32 %v101, 4294901760
    %v816 = vsub.f32 %v101, %v815
    %v817 = vand.u32 %v816, 4294901760
    %818 = vmatpush1.msra.mxu0 %v817
    %819 = vmatprep.subr.mxu0 0.0
    %v820 = vand.u32 %v102, 4294901760
    %v821 = vsub.f32 %v102, %v820
    %v822 = vand.u32 %v821, 4294901760
    %823 = vmatpush1.msra.mxu0 %v822
    %824 = vmatprep.subr.mxu0 0.0
    %v825 = vand.u32 %v103, 4294901760
    %v826 = vsub.f32 %v103, %v825
    %v827 = vand.u32 %v826, 4294901760
    %828 = vmatpush1.msra.mxu0 %v827
    %829 = vmatprep.subr.mxu0 0.0
    %v830 = vand.u32 %v104, 4294901760
    %v831 = vsub.f32 %v104, %v830
    %v832 = vand.u32 %v831, 4294901760
    %833 = vmatpush1.msra.mxu0 %v832
    %834 = vmatprep.subr.mxu0 0.0
    %v835 = vand.u32 %v105, 4294901760
    %v836 = vsub.f32 %v105, %v835
    %v837 = vand.u32 %v836, 4294901760
    %838 = vmatpush1.msra.mxu0 %v837
    %839 = vmatprep.subr.mxu0 0.0
    %v840 = vand.u32 %v106, 4294901760
    %v841 = vsub.f32 %v106, %v840
    %v842 = vand.u32 %v841, 4294901760
    %843 = vmatpush1.msra.mxu0 %v842
    %844 = vmatprep.subr.mxu0 0.0
    %v845 = vand.u32 %v107, 4294901760
    %v846 = vsub.f32 %v107, %v845
    %v847 = vand.u32 %v846, 4294901760
    %848 = vmatpush1.msra.mxu0 %v847
    %849 = vmatprep.subr.mxu0 0.0
    %v850 = vand.u32 %v108, 4294901760
    %v851 = vsub.f32 %v108, %v850
    %v852 = vand.u32 %v851, 4294901760
    %853 = vmatpush1.msra.mxu0 %v852
    %854 = vmatprep.subr.mxu0 0.0
    %v855 = vand.u32 %v109, 4294901760
    %v856 = vsub.f32 %v109, %v855
    %v857 = vand.u32 %v856, 4294901760
    %858 = vmatpush1.msra.mxu0 %v857
    %859 = vmatprep.subr.mxu0 0.0
    %v860 = vand.u32 %v110, 4294901760
    %v861 = vsub.f32 %v110, %v860
    %v862 = vand.u32 %v861, 4294901760
    %863 = vmatpush1.msra.mxu0 %v862
    %864 = vmatprep.subr.mxu0 0.0
    %v865 = vand.u32 %v111, 4294901760
    %v866 = vsub.f32 %v111, %v865
    %v867 = vand.u32 %v866, 4294901760
    %868 = vmatpush1.msra.mxu0 %v867
    %869 = vmatprep.subr.mxu0 0.0
    %v870 = vand.u32 %v112, 4294901760
    %v871 = vsub.f32 %v112, %v870
    %v872 = vand.u32 %v871, 4294901760
    %873 = vmatpush1.msra.mxu0 %v872
    %874 = vmatprep.subr.mxu0 0.0
    %v875 = vand.u32 %v113, 4294901760
    %v876 = vsub.f32 %v113, %v875
    %v877 = vand.u32 %v876, 4294901760
    %878 = vmatpush1.msra.mxu0 %v877
    %879 = vmatprep.subr.mxu0 0.0
    %v880 = vand.u32 %v114, 4294901760
    %v881 = vsub.f32 %v114, %v880
    %v882 = vand.u32 %v881, 4294901760
    %883 = vmatpush1.msra.mxu0 %v882
    %884 = vmatprep.subr.mxu0 0.0
    %v885 = vand.u32 %v115, 4294901760
    %v886 = vsub.f32 %v115, %v885
    %v887 = vand.u32 %v886, 4294901760
    %888 = vmatpush1.msra.mxu0 %v887
    %889 = vmatprep.subr.mxu0 0.0
    %v890 = vand.u32 %v116, 4294901760
    %v891 = vsub.f32 %v116, %v890
    %v892 = vand.u32 %v891, 4294901760
    %893 = vmatpush1.msra.mxu0 %v892
    %894 = vmatprep.subr.mxu0 0.0
    %v895 = vand.u32 %v117, 4294901760
    %v896 = vsub.f32 %v117, %v895
    %v897 = vand.u32 %v896, 4294901760
    %898 = vmatpush1.msra.mxu0 %v897
    %899 = vmatprep.subr.mxu0 0.0
    %v900 = vand.u32 %v118, 4294901760
    %v901 = vsub.f32 %v118, %v900
    %v902 = vand.u32 %v901, 4294901760
    %903 = vmatpush1.msra.mxu0 %v902
    %904 = vmatprep.subr.mxu0 0.0
    %v905 = vand.u32 %v119, 4294901760
    %v906 = vsub.f32 %v119, %v905
    %v907 = vand.u32 %v906, 4294901760
    %908 = vmatpush1.msra.mxu0 %v907
    %v909 = vand.u32 %v156, 4294901760
    %910 = vmatprep.mubr.f32.mxu0 %v909
    %v911 = vand.u32 %v155, 4294901760
    %912 = vmatmul.mubr.f32.gmra.mrb[0].mxu0 %v911
    %v913 = vpop.f32.mrb[0].mxu0
    %v914 = vadd.f32 %v746, %v913
    %v915 = vpop.f32.mrb[0].mxu0
    %916 = vdwg.mxu0
    %917 = vmatprep.subr.mxu0 0.0
    %v918 = vand.u32 %v88, 4294901760
    %919 = vmatpush1.msra.mxu0 %v918
    %920 = vmatprep.subr.mxu0 0.0
    %v921 = vand.u32 %v89, 4294901760
    %922 = vmatpush1.msra.mxu0 %v921
    %923 = vmatprep.subr.mxu0 0.0
    %v924 = vand.u32 %v90, 4294901760
    %925 = vmatpush1.msra.mxu0 %v924
    %926 = vmatprep.subr.mxu0 0.0
    %v927 = vand.u32 %v91, 4294901760
    %928 = vmatpush1.msra.mxu0 %v927
    %929 = vmatprep.subr.mxu0 0.0
    %v930 = vand.u32 %v92, 4294901760
    %931 = vmatpush1.msra.mxu0 %v930
    %932 = vmatprep.subr.mxu0 0.0
    %v933 = vand.u32 %v93, 4294901760
    %934 = vmatpush1.msra.mxu0 %v933
    %935 = vmatprep.subr.mxu0 0.0
    %v936 = vand.u32 %v94, 4294901760
    %937 = vmatpush1.msra.mxu0 %v936
    %938 = vmatprep.subr.mxu0 0.0
    %v939 = vand.u32 %v95, 4294901760
    %940 = vmatpush1.msra.mxu0 %v939
    %941 = vmatprep.subr.mxu0 0.0
    %v942 = vand.u32 %v96, 4294901760
    %943 = vmatpush1.msra.mxu0 %v942
    %944 = vmatprep.subr.mxu0 0.0
    %v945 = vand.u32 %v97, 4294901760
    %946 = vmatpush1.msra.mxu0 %v945
    %947 = vmatprep.subr.mxu0 0.0
    %v948 = vand.u32 %v98, 4294901760
    %949 = vmatpush1.msra.mxu0 %v948
    %950 = vmatprep.subr.mxu0 0.0
    %v951 = vand.u32 %v99, 4294901760
    %952 = vmatpush1.msra.mxu0 %v951
    %953 = vmatprep.subr.mxu0 0.0
    %v954 = vand.u32 %v100, 4294901760
    %955 = vmatpush1.msra.mxu0 %v954
    %956 = vmatprep.subr.mxu0 0.0
    %v957 = vand.u32 %v101, 4294901760
    %958 = vmatpush1.msra.mxu0 %v957
    %959 = vmatprep.subr.mxu0 0.0
    %v960 = vand.u32 %v102, 4294901760
    %961 = vmatpush1.msra.mxu0 %v960
    %962 = vmatprep.subr.mxu0 0.0
    %v963 = vand.u32 %v103, 4294901760
    %964 = vmatpush1.msra.mxu0 %v963
    %965 = vmatprep.subr.mxu0 0.0
    %v966 = vand.u32 %v104, 4294901760
    %967 = vmatpush1.msra.mxu0 %v966
    %968 = vmatprep.subr.mxu0 0.0
    %v969 = vand.u32 %v105, 4294901760
    %970 = vmatpush1.msra.mxu0 %v969
    %971 = vmatprep.subr.mxu0 0.0
    %v972 = vand.u32 %v106, 4294901760
    %973 = vmatpush1.msra.mxu0 %v972
    %974 = vmatprep.subr.mxu0 0.0
    %v975 = vand.u32 %v107, 4294901760
    %976 = vmatpush1.msra.mxu0 %v975
    %977 = vmatprep.subr.mxu0 0.0
    %v978 = vand.u32 %v108, 4294901760
    %979 = vmatpush1.msra.mxu0 %v978
    %980 = vmatprep.subr.mxu0 0.0
    %v981 = vand.u32 %v109, 4294901760
    %982 = vmatpush1.msra.mxu0 %v981
    %983 = vmatprep.subr.mxu0 0.0
    %v984 = vand.u32 %v110, 4294901760
    %985 = vmatpush1.msra.mxu0 %v984
    %986 = vmatprep.subr.mxu0 0.0
    %v987 = vand.u32 %v111, 4294901760
    %988 = vmatpush1.msra.mxu0 %v987
    %989 = vmatprep.subr.mxu0 0.0
    %v990 = vand.u32 %v112, 4294901760
    %991 = vmatpush1.msra.mxu0 %v990
    %992 = vmatprep.subr.mxu0 0.0
    %v993 = vand.u32 %v113, 4294901760
    %994 = vmatpush1.msra.mxu0 %v993
    %995 = vmatprep.subr.mxu0 0.0
    %v996 = vand.u32 %v114, 4294901760
    %997 = vmatpush1.msra.mxu0 %v996
    %998 = vmatprep.subr.mxu0 0.0
    %v999 = vand.u32 %v115, 4294901760
    %1000 = vmatpush1.msra.mxu0 %v999
    %1001 = vmatprep.subr.mxu0 0.0
    %v1002 = vand.u32 %v116, 4294901760
    %1003 = vmatpush1.msra.mxu0 %v1002
    %1004 = vmatprep.subr.mxu0 0.0
    %v1005 = vand.u32 %v117, 4294901760
    %1006 = vmatpush1.msra.mxu0 %v1005
    %1007 = vmatprep.subr.mxu0 0.0
    %v1008 = vand.u32 %v118, 4294901760
    %1009 = vmatpush1.msra.mxu0 %v1008
    %1010 = vmatprep.subr.mxu0 0.0
    %v1011 = vand.u32 %v119, 4294901760
    %1012 = vmatpush1.msra.mxu0 %v1011
    %v1013 = vand.u32 %v156, 4294901760
    %1014 = vmatprep.mubr.f32.mxu0 %v1013
    %v1015 = vand.u32 %v155, 4294901760
    %1016 = vmatmul.mubr.f32.gmra.mrb[0].mxu0 %v1015
    %v1017 = vpop.f32.mrb[0].mxu0
    %v1018 = vadd.f32 %v914, %v1017
    %v1019 = vpop.f32.mrb[0].mxu0
    %1020 = vdwg.mxu0
    %vm1021 = vcmask 64512
    %v1023 = vsel %vm1021, %v120, 0
    %1025 = vmatprep.subr.mxu0 0.0
    %v1026 = vand.u32 %v1018, 4294901760
    %1027 = vmatpush1.msra.mxu0 %v1026
    %1028 = vmatprep.subr.mxu0 0.0
    %1029 = vmatpush1.msra.mxu0 0.0
    %1030 = vmatprep.subr.mxu0 0.0
    %1031 = vmatpush1.msra.mxu0 0.0
    %1032 = vmatprep.subr.mxu0 0.0
    %1033 = vmatpush1.msra.mxu0 0.0
    %1034 = vmatprep.subr.mxu0 0.0
    %1035 = vmatpush1.msra.mxu0 0.0
    %1036 = vmatprep.subr.mxu0 0.0
    %1037 = vmatpush1.msra.mxu0 0.0
    %1038 = vmatprep.subr.mxu0 0.0
    %1039 = vmatpush1.msra.mxu0 0.0
    %1040 = vmatprep.subr.mxu0 0.0
    %1041 = vmatpush1.msra.mxu0 0.0
    %1042 = vmatprep.subr.mxu0 0.0
    %1043 = vmatpush1.msra.mxu0 0.0
    %1044 = vmatprep.subr.mxu0 0.0
    %1045 = vmatpush1.msra.mxu0 0.0
    %1046 = vmatprep.subr.mxu0 0.0
    %1047 = vmatpush1.msra.mxu0 0.0
    %1048 = vmatprep.subr.mxu0 0.0
    %1049 = vmatpush1.msra.mxu0 0.0
    %1050 = vmatprep.subr.mxu0 0.0
    %1051 = vmatpush1.msra.mxu0 0.0
    %1052 = vmatprep.subr.mxu0 0.0
    %1053 = vmatpush1.msra.mxu0 0.0
    %1054 = vmatprep.subr.mxu0 0.0
    %1055 = vmatpush1.msra.mxu0 0.0
    %1056 = vmatprep.subr.mxu0 0.0
    %1057 = vmatpush1.msra.mxu0 0.0
    %1058 = vmatprep.subr.mxu0 0.0
    %1059 = vmatpush1.msra.mxu0 0.0
    %1060 = vmatprep.subr.mxu0 0.0
    %1061 = vmatpush1.msra.mxu0 0.0
    %1062 = vmatprep.subr.mxu0 0.0
    %1063 = vmatpush1.msra.mxu0 0.0
    %1064 = vmatprep.subr.mxu0 0.0
    %1065 = vmatpush1.msra.mxu0 0.0
    %1066 = vmatprep.subr.mxu0 0.0
    %1067 = vmatpush1.msra.mxu0 0.0
    %1068 = vmatprep.subr.mxu0 0.0
    %1069 = vmatpush1.msra.mxu0 0.0
    %1070 = vmatprep.subr.mxu0 0.0
    %1071 = vmatpush1.msra.mxu0 0.0
    %1072 = vmatprep.subr.mxu0 0.0
    %1073 = vmatpush1.msra.mxu0 0.0
    %1074 = vmatprep.subr.mxu0 0.0
    %1075 = vmatpush1.msra.mxu0 0.0
    %1076 = vmatprep.subr.mxu0 0.0
    %1077 = vmatpush1.msra.mxu0 0.0
    %1078 = vmatprep.subr.mxu0 0.0
    %1079 = vmatpush1.msra.mxu0 0.0
    %1080 = vmatprep.subr.mxu0 0.0
    %1081 = vmatpush1.msra.mxu0 0.0
    %1082 = vmatprep.subr.mxu0 0.0
    %1083 = vmatpush1.msra.mxu0 0.0
    %1084 = vmatprep.subr.mxu0 0.0
    %1085 = vmatpush1.msra.mxu0 0.0
    %1086 = vmatprep.subr.mxu0 0.0
    %1087 = vmatpush1.msra.mxu0 0.0
    %1088 = vmatprep.subr.mxu0 0.0
    %1089 = vmatpush1.msra.mxu0 0.0
    %1090 = vmatprep.mubr.f32.mxu0 0.0
    %v1091 = vand.u32 %v1023, 4294901760
    %v1092 = vsub.f32 %v1023, %v1091
    %v1093 = vand.u32 %v1092, 4294901760
    %v1094 = vsub.f32 %v1092, %v1093
    %v1095 = vand.u32 %v1094, 4294901760
    %1096 = vmatmul.mubr.f32.gmra.mrb[0].mxu0 %v1095
    %v1097 = vpop.f32.mrb[0].mxu0
    %v1098 = vadd.f32 %v121, %v1097
    %v1099 = vpop.f32.mrb[0].mxu0
    %1100 = vdwg.mxu0
    %1101 = vmatprep.subr.mxu0 0.0
    %v1102 = vand.u32 %v1018, 4294901760
    %v1103 = vsub.f32 %v1018, %v1102
    %v1104 = vand.u32 %v1103, 4294901760
    %v1105 = vsub.f32 %v1103, %v1104
    %v1106 = vand.u32 %v1105, 4294901760
    %1107 = vmatpush1.msra.mxu0 %v1106
    %1108 = vmatprep.subr.mxu0 0.0
    %1109 = vmatpush1.msra.mxu0 0.0
    %1110 = vmatprep.subr.mxu0 0.0
    %1111 = vmatpush1.msra.mxu0 0.0
    %1112 = vmatprep.subr.mxu0 0.0
    %1113 = vmatpush1.msra.mxu0 0.0
    %1114 = vmatprep.subr.mxu0 0.0
    %1115 = vmatpush1.msra.mxu0 0.0
    %1116 = vmatprep.subr.mxu0 0.0
    %1117 = vmatpush1.msra.mxu0 0.0
    %1118 = vmatprep.subr.mxu0 0.0
    %1119 = vmatpush1.msra.mxu0 0.0
    %1120 = vmatprep.subr.mxu0 0.0
    %1121 = vmatpush1.msra.mxu0 0.0
    %1122 = vmatprep.subr.mxu0 0.0
    %1123 = vmatpush1.msra.mxu0 0.0
    %1124 = vmatprep.subr.mxu0 0.0
    %1125 = vmatpush1.msra.mxu0 0.0
    %1126 = vmatprep.subr.mxu0 0.0
    %1127 = vmatpush1.msra.mxu0 0.0
    %1128 = vmatprep.subr.mxu0 0.0
    %1129 = vmatpush1.msra.mxu0 0.0
    %1130 = vmatprep.subr.mxu0 0.0
    %1131 = vmatpush1.msra.mxu0 0.0
    %1132 = vmatprep.subr.mxu0 0.0
    %1133 = vmatpush1.msra.mxu0 0.0
    %1134 = vmatprep.subr.mxu0 0.0
    %1135 = vmatpush1.msra.mxu0 0.0
    %1136 = vmatprep.subr.mxu0 0.0
    %1137 = vmatpush1.msra.mxu0 0.0
    %1138 = vmatprep.subr.mxu0 0.0
    %1139 = vmatpush1.msra.mxu0 0.0
    %1140 = vmatprep.subr.mxu0 0.0
    %1141 = vmatpush1.msra.mxu0 0.0
    %1142 = vmatprep.subr.mxu0 0.0
    %1143 = vmatpush1.msra.mxu0 0.0
    %1144 = vmatprep.subr.mxu0 0.0
    %1145 = vmatpush1.msra.mxu0 0.0
    %1146 = vmatprep.subr.mxu0 0.0
    %1147 = vmatpush1.msra.mxu0 0.0
    %1148 = vmatprep.subr.mxu0 0.0
    %1149 = vmatpush1.msra.mxu0 0.0
    %1150 = vmatprep.subr.mxu0 0.0
    %1151 = vmatpush1.msra.mxu0 0.0
    %1152 = vmatprep.subr.mxu0 0.0
    %1153 = vmatpush1.msra.mxu0 0.0
    %1154 = vmatprep.subr.mxu0 0.0
    %1155 = vmatpush1.msra.mxu0 0.0
    %1156 = vmatprep.subr.mxu0 0.0
    %1157 = vmatpush1.msra.mxu0 0.0
    %1158 = vmatprep.subr.mxu0 0.0
    %1159 = vmatpush1.msra.mxu0 0.0
    %1160 = vmatprep.subr.mxu0 0.0
    %1161 = vmatpush1.msra.mxu0 0.0
    %1162 = vmatprep.subr.mxu0 0.0
    %1163 = vmatpush1.msra.mxu0 0.0
    %1164 = vmatprep.subr.mxu0 0.0
    %1165 = vmatpush1.msra.mxu0 0.0
    %1166 = vmatprep.subr.mxu0 0.0
    %1167 = vmatpush1.msra.mxu0 0.0
    %1168 = vmatprep.subr.mxu0 0.0
    %1169 = vmatpush1.msra.mxu0 0.0
    %1170 = vmatprep.mubr.f32.mxu0 0.0
    %v1171 = vand.u32 %v1023, 4294901760
    %1172 = vmatmul.mubr.f32.gmra.mrb[0].mxu0 %v1171
    %v1173 = vpop.f32.mrb[0].mxu0
    %v1174 = vadd.f32 %v1098, %v1173
    %v1175 = vpop.f32.mrb[0].mxu0
    %1176 = vdwg.mxu0
    %1177 = vmatprep.subr.mxu0 0.0
    %v1178 = vand.u32 %v1018, 4294901760
    %v1179 = vsub.f32 %v1018, %v1178
    %1180 = vmatpush1.msra.mxu0 %v1179
    %1181 = vmatprep.subr.mxu0 0.0
    %1182 = vmatpush1.msra.mxu0 0.0
    %1183 = vmatprep.subr.mxu0 0.0
    %1184 = vmatpush1.msra.mxu0 0.0
    %1185 = vmatprep.subr.mxu0 0.0
    %1186 = vmatpush1.msra.mxu0 0.0
    %1187 = vmatprep.subr.mxu0 0.0
    %1188 = vmatpush1.msra.mxu0 0.0
    %1189 = vmatprep.subr.mxu0 0.0
    %1190 = vmatpush1.msra.mxu0 0.0
    %1191 = vmatprep.subr.mxu0 0.0
    %1192 = vmatpush1.msra.mxu0 0.0
    %1193 = vmatprep.subr.mxu0 0.0
    %1194 = vmatpush1.msra.mxu0 0.0
    %1195 = vmatprep.subr.mxu0 0.0
    %1196 = vmatpush1.msra.mxu0 0.0
    %1197 = vmatprep.subr.mxu0 0.0
    %1198 = vmatpush1.msra.mxu0 0.0
    %1199 = vmatprep.subr.mxu0 0.0
    %1200 = vmatpush1.msra.mxu0 0.0
    %1201 = vmatprep.subr.mxu0 0.0
    %1202 = vmatpush1.msra.mxu0 0.0
    %1203 = vmatprep.subr.mxu0 0.0
    %1204 = vmatpush1.msra.mxu0 0.0
    %1205 = vmatprep.subr.mxu0 0.0
    %1206 = vmatpush1.msra.mxu0 0.0
    %1207 = vmatprep.subr.mxu0 0.0
    %1208 = vmatpush1.msra.mxu0 0.0
    %1209 = vmatprep.subr.mxu0 0.0
    %1210 = vmatpush1.msra.mxu0 0.0
    %1211 = vmatprep.subr.mxu0 0.0
    %1212 = vmatpush1.msra.mxu0 0.0
    %1213 = vmatprep.subr.mxu0 0.0
    %1214 = vmatpush1.msra.mxu0 0.0
    %1215 = vmatprep.subr.mxu0 0.0
    %1216 = vmatpush1.msra.mxu0 0.0
    %1217 = vmatprep.subr.mxu0 0.0
    %1218 = vmatpush1.msra.mxu0 0.0
    %1219 = vmatprep.subr.mxu0 0.0
    %1220 = vmatpush1.msra.mxu0 0.0
    %1221 = vmatprep.subr.mxu0 0.0
    %1222 = vmatpush1.msra.mxu0 0.0
    %1223 = vmatprep.subr.mxu0 0.0
    %1224 = vmatpush1.msra.mxu0 0.0
    %1225 = vmatprep.subr.mxu0 0.0
    %1226 = vmatpush1.msra.mxu0 0.0
    %1227 = vmatprep.subr.mxu0 0.0
    %1228 = vmatpush1.msra.mxu0 0.0
    %1229 = vmatprep.subr.mxu0 0.0
    %1230 = vmatpush1.msra.mxu0 0.0
    %1231 = vmatprep.subr.mxu0 0.0
    %1232 = vmatpush1.msra.mxu0 0.0
    %1233 = vmatprep.subr.mxu0 0.0
    %1234 = vmatpush1.msra.mxu0 0.0
    %1235 = vmatprep.subr.mxu0 0.0
    %1236 = vmatpush1.msra.mxu0 0.0
    %1237 = vmatprep.subr.mxu0 0.0
    %1238 = vmatpush1.msra.mxu0 0.0
    %1239 = vmatprep.subr.mxu0 0.0
    %1240 = vmatpush1.msra.mxu0 0.0
    %1241 = vmatprep.subr.mxu0 0.0
    %1242 = vmatpush1.msra.mxu0 0.0
    %1243 = vmatprep.mubr.f32.mxu0 0.0
    %v1244 = vand.u32 %v1023, 4294901760
    %v1245 = vsub.f32 %v1023, %v1244
    %1246 = vmatmul.mubr.f32.gmra.mrb[0].mxu0 %v1245
    %v1247 = vpop.f32.mrb[0].mxu0
    %v1248 = vadd.f32 %v1174, %v1247
    %v1249 = vpop.f32.mrb[0].mxu0
    %1250 = vdwg.mxu0
    %1251 = vmatprep.subr.mxu0 0.0
    %v1252 = vand.u32 %v1018, 4294901760
    %1253 = vmatpush1.msra.mxu0 %v1252
    %1254 = vmatprep.subr.mxu0 0.0
    %1255 = vmatpush1.msra.mxu0 0.0
    %1256 = vmatprep.subr.mxu0 0.0
    %1257 = vmatpush1.msra.mxu0 0.0
    %1258 = vmatprep.subr.mxu0 0.0
    %1259 = vmatpush1.msra.mxu0 0.0
    %1260 = vmatprep.subr.mxu0 0.0
    %1261 = vmatpush1.msra.mxu0 0.0
    %1262 = vmatprep.subr.mxu0 0.0
    %1263 = vmatpush1.msra.mxu0 0.0
    %1264 = vmatprep.subr.mxu0 0.0
    %1265 = vmatpush1.msra.mxu0 0.0
    %1266 = vmatprep.subr.mxu0 0.0
    %1267 = vmatpush1.msra.mxu0 0.0
    %1268 = vmatprep.subr.mxu0 0.0
    %1269 = vmatpush1.msra.mxu0 0.0
    %1270 = vmatprep.subr.mxu0 0.0
    %1271 = vmatpush1.msra.mxu0 0.0
    %1272 = vmatprep.subr.mxu0 0.0
    %1273 = vmatpush1.msra.mxu0 0.0
    %1274 = vmatprep.subr.mxu0 0.0
    %1275 = vmatpush1.msra.mxu0 0.0
    %1276 = vmatprep.subr.mxu0 0.0
    %1277 = vmatpush1.msra.mxu0 0.0
    %1278 = vmatprep.subr.mxu0 0.0
    %1279 = vmatpush1.msra.mxu0 0.0
    %1280 = vmatprep.subr.mxu0 0.0
    %1281 = vmatpush1.msra.mxu0 0.0
    %1282 = vmatprep.subr.mxu0 0.0
    %1283 = vmatpush1.msra.mxu0 0.0
    %1284 = vmatprep.subr.mxu0 0.0
    %1285 = vmatpush1.msra.mxu0 0.0
    %1286 = vmatprep.subr.mxu0 0.0
    %1287 = vmatpush1.msra.mxu0 0.0
    %1288 = vmatprep.subr.mxu0 0.0
    %1289 = vmatpush1.msra.mxu0 0.0
    %1290 = vmatprep.subr.mxu0 0.0
    %1291 = vmatpush1.msra.mxu0 0.0
    %1292 = vmatprep.subr.mxu0 0.0
    %1293 = vmatpush1.msra.mxu0 0.0
    %1294 = vmatprep.subr.mxu0 0.0
    %1295 = vmatpush1.msra.mxu0 0.0
    %1296 = vmatprep.subr.mxu0 0.0
    %1297 = vmatpush1.msra.mxu0 0.0
    %1298 = vmatprep.subr.mxu0 0.0
    %1299 = vmatpush1.msra.mxu0 0.0
    %1300 = vmatprep.subr.mxu0 0.0
    %1301 = vmatpush1.msra.mxu0 0.0
    %1302 = vmatprep.subr.mxu0 0.0
    %1303 = vmatpush1.msra.mxu0 0.0
    %1304 = vmatprep.subr.mxu0 0.0
    %1305 = vmatpush1.msra.mxu0 0.0
    %1306 = vmatprep.subr.mxu0 0.0
    %1307 = vmatpush1.msra.mxu0 0.0
    %1308 = vmatprep.subr.mxu0 0.0
    %1309 = vmatpush1.msra.mxu0 0.0
    %1310 = vmatprep.subr.mxu0 0.0
    %1311 = vmatpush1.msra.mxu0 0.0
    %1312 = vmatprep.subr.mxu0 0.0
    %1313 = vmatpush1.msra.mxu0 0.0
    %1314 = vmatprep.subr.mxu0 0.0
    %1315 = vmatpush1.msra.mxu0 0.0
    %1316 = vmatprep.mubr.f32.mxu0 0.0
    %v1317 = vand.u32 %v1023, 4294901760
    %v1318 = vsub.f32 %v1023, %v1317
    %v1319 = vand.u32 %v1318, 4294901760
    %1320 = vmatmul.mubr.f32.gmra.mrb[0].mxu0 %v1319
    %v1321 = vpop.f32.mrb[0].mxu0
    %v1322 = vadd.f32 %v1248, %v1321
    %v1323 = vpop.f32.mrb[0].mxu0
    %1324 = vdwg.mxu0
    %1325 = vmatprep.subr.mxu0 0.0
    %v1326 = vand.u32 %v1018, 4294901760
    %v1327 = vsub.f32 %v1018, %v1326
    %v1328 = vand.u32 %v1327, 4294901760
    %1329 = vmatpush1.msra.mxu0 %v1328
    %1330 = vmatprep.subr.mxu0 0.0
    %1331 = vmatpush1.msra.mxu0 0.0
    %1332 = vmatprep.subr.mxu0 0.0
    %1333 = vmatpush1.msra.mxu0 0.0
    %1334 = vmatprep.subr.mxu0 0.0
    %1335 = vmatpush1.msra.mxu0 0.0
    %1336 = vmatprep.subr.mxu0 0.0
    %1337 = vmatpush1.msra.mxu0 0.0
    %1338 = vmatprep.subr.mxu0 0.0
    %1339 = vmatpush1.msra.mxu0 0.0
    %1340 = vmatprep.subr.mxu0 0.0
    %1341 = vmatpush1.msra.mxu0 0.0
    %1342 = vmatprep.subr.mxu0 0.0
    %1343 = vmatpush1.msra.mxu0 0.0
    %1344 = vmatprep.subr.mxu0 0.0
    %1345 = vmatpush1.msra.mxu0 0.0
    %1346 = vmatprep.subr.mxu0 0.0
    %1347 = vmatpush1.msra.mxu0 0.0
    %1348 = vmatprep.subr.mxu0 0.0
    %1349 = vmatpush1.msra.mxu0 0.0
    %1350 = vmatprep.subr.mxu0 0.0
    %1351 = vmatpush1.msra.mxu0 0.0
    %1352 = vmatprep.subr.mxu0 0.0
    %1353 = vmatpush1.msra.mxu0 0.0
    %1354 = vmatprep.subr.mxu0 0.0
    %1355 = vmatpush1.msra.mxu0 0.0
    %1356 = vmatprep.subr.mxu0 0.0
    %1357 = vmatpush1.msra.mxu0 0.0
    %1358 = vmatprep.subr.mxu0 0.0
    %1359 = vmatpush1.msra.mxu0 0.0
    %1360 = vmatprep.subr.mxu0 0.0
    %1361 = vmatpush1.msra.mxu0 0.0
    %1362 = vmatprep.subr.mxu0 0.0
    %1363 = vmatpush1.msra.mxu0 0.0
    %1364 = vmatprep.subr.mxu0 0.0
    %1365 = vmatpush1.msra.mxu0 0.0
    %1366 = vmatprep.subr.mxu0 0.0
    %1367 = vmatpush1.msra.mxu0 0.0
    %1368 = vmatprep.subr.mxu0 0.0
    %1369 = vmatpush1.msra.mxu0 0.0
    %1370 = vmatprep.subr.mxu0 0.0
    %1371 = vmatpush1.msra.mxu0 0.0
    %1372 = vmatprep.subr.mxu0 0.0
    %1373 = vmatpush1.msra.mxu0 0.0
    %1374 = vmatprep.subr.mxu0 0.0
    %1375 = vmatpush1.msra.mxu0 0.0
    %1376 = vmatprep.subr.mxu0 0.0
    %1377 = vmatpush1.msra.mxu0 0.0
    %1378 = vmatprep.subr.mxu0 0.0
    %1379 = vmatpush1.msra.mxu0 0.0
    %1380 = vmatprep.subr.mxu0 0.0
    %1381 = vmatpush1.msra.mxu0 0.0
    %1382 = vmatprep.subr.mxu0 0.0
    %1383 = vmatpush1.msra.mxu0 0.0
    %1384 = vmatprep.subr.mxu0 0.0
    %1385 = vmatpush1.msra.mxu0 0.0
    %1386 = vmatprep.subr.mxu0 0.0
    %1387 = vmatpush1.msra.mxu0 0.0
    %1388 = vmatprep.subr.mxu0 0.0
    %1389 = vmatpush1.msra.mxu0 0.0
    %1390 = vmatprep.subr.mxu0 0.0
    %1391 = vmatpush1.msra.mxu0 0.0
    %1392 = vmatprep.mubr.f32.mxu0 0.0
    %v1393 = vand.u32 %v1023, 4294901760
    %1394 = vmatmul.mubr.f32.gmra.mrb[0].mxu0 %v1393
    %v1395 = vpop.f32.mrb[0].mxu0
    %v1396 = vadd.f32 %v1322, %v1395
    %v1397 = vpop.f32.mrb[0].mxu0
    %1398 = vdwg.mxu0
    %1399 = vmatprep.subr.mxu0 0.0
    %v1400 = vand.u32 %v1018, 4294901760
    %1401 = vmatpush1.msra.mxu0 %v1400
    %1402 = vmatprep.subr.mxu0 0.0
    %1403 = vmatpush1.msra.mxu0 0.0
    %1404 = vmatprep.subr.mxu0 0.0
    %1405 = vmatpush1.msra.mxu0 0.0
    %1406 = vmatprep.subr.mxu0 0.0
    %1407 = vmatpush1.msra.mxu0 0.0
    %1408 = vmatprep.subr.mxu0 0.0
    %1409 = vmatpush1.msra.mxu0 0.0
    %1410 = vmatprep.subr.mxu0 0.0
    %1411 = vmatpush1.msra.mxu0 0.0
    %1412 = vmatprep.subr.mxu0 0.0
    %1413 = vmatpush1.msra.mxu0 0.0
    %1414 = vmatprep.subr.mxu0 0.0
    %1415 = vmatpush1.msra.mxu0 0.0
    %1416 = vmatprep.subr.mxu0 0.0
    %1417 = vmatpush1.msra.mxu0 0.0
    %1418 = vmatprep.subr.mxu0 0.0
    %1419 = vmatpush1.msra.mxu0 0.0
    %1420 = vmatprep.subr.mxu0 0.0
    %1421 = vmatpush1.msra.mxu0 0.0
    %1422 = vmatprep.subr.mxu0 0.0
    %1423 = vmatpush1.msra.mxu0 0.0
    %1424 = vmatprep.subr.mxu0 0.0
    %1425 = vmatpush1.msra.mxu0 0.0
    %1426 = vmatprep.subr.mxu0 0.0
    %1427 = vmatpush1.msra.mxu0 0.0
    %1428 = vmatprep.subr.mxu0 0.0
    %1429 = vmatpush1.msra.mxu0 0.0
    %1430 = vmatprep.subr.mxu0 0.0
    %1431 = vmatpush1.msra.mxu0 0.0
    %1432 = vmatprep.subr.mxu0 0.0
    %1433 = vmatpush1.msra.mxu0 0.0
    %1434 = vmatprep.subr.mxu0 0.0
    %1435 = vmatpush1.msra.mxu0 0.0
    %1436 = vmatprep.subr.mxu0 0.0
    %1437 = vmatpush1.msra.mxu0 0.0
    %1438 = vmatprep.subr.mxu0 0.0
    %1439 = vmatpush1.msra.mxu0 0.0
    %1440 = vmatprep.subr.mxu0 0.0
    %1441 = vmatpush1.msra.mxu0 0.0
    %1442 = vmatprep.subr.mxu0 0.0
    %1443 = vmatpush1.msra.mxu0 0.0
    %1444 = vmatprep.subr.mxu0 0.0
    %1445 = vmatpush1.msra.mxu0 0.0
    %1446 = vmatprep.subr.mxu0 0.0
    %1447 = vmatpush1.msra.mxu0 0.0
    %1448 = vmatprep.subr.mxu0 0.0
    %1449 = vmatpush1.msra.mxu0 0.0
    %1450 = vmatprep.subr.mxu0 0.0
    %1451 = vmatpush1.msra.mxu0 0.0
    %1452 = vmatprep.subr.mxu0 0.0
    %1453 = vmatpush1.msra.mxu0 0.0
    %1454 = vmatprep.subr.mxu0 0.0
    %1455 = vmatpush1.msra.mxu0 0.0
    %1456 = vmatprep.subr.mxu0 0.0
    %1457 = vmatpush1.msra.mxu0 0.0
    %1458 = vmatprep.subr.mxu0 0.0
    %1459 = vmatpush1.msra.mxu0 0.0
    %1460 = vmatprep.subr.mxu0 0.0
    %1461 = vmatpush1.msra.mxu0 0.0
    %1462 = vmatprep.subr.mxu0 0.0
    %1463 = vmatpush1.msra.mxu0 0.0
    %1464 = vmatprep.mubr.f32.mxu0 0.0
    %v1465 = vand.u32 %v1023, 4294901760
    %1466 = vmatmul.mubr.f32.gmra.mrb[0].mxu0 %v1465
    %v1467 = vpop.f32.mrb[0].mxu0
    %v1468 = vadd.f32 %v1396, %v1467
    %v1469 = vpop.f32.mrb[0].mxu0
    %1470 = vdwg.mxu0
    %v1471 = vmax.f32 %v1468, 0.0
    %v1472 = vmul.f32 %v1471, %v122
    %v1473 = vand.u32 %v124, 4294901760
    %1474 = vmatprep.subr.mxu0 %v1473
    %v1475 = vand.u32 %v123, 4294901760
    %1476 = vmatpush1.msra.mxu0 %v1475
    %v1477 = vand.u32 %v126, 4294901760
    %1478 = vmatprep.subr.mxu0 %v1477
    %v1479 = vand.u32 %v125, 4294901760
    %1480 = vmatpush1.msra.mxu0 %v1479
    %v1481 = vand.u32 %v128, 4294901760
    %1482 = vmatprep.subr.mxu0 %v1481
    %v1483 = vand.u32 %v127, 4294901760
    %1484 = vmatpush1.msra.mxu0 %v1483
    %v1485 = vand.u32 %v130, 4294901760
    %1486 = vmatprep.subr.mxu0 %v1485
    %v1487 = vand.u32 %v129, 4294901760
    %1488 = vmatpush1.msra.mxu0 %v1487
    %v1489 = vand.u32 %v132, 4294901760
    %1490 = vmatprep.subr.mxu0 %v1489
    %v1491 = vand.u32 %v131, 4294901760
    %1492 = vmatpush1.msra.mxu0 %v1491
    %v1493 = vand.u32 %v134, 4294901760
    %1494 = vmatprep.subr.mxu0 %v1493
    %v1495 = vand.u32 %v133, 4294901760
    %1496 = vmatpush1.msra.mxu0 %v1495
    %v1497 = vand.u32 %v136, 4294901760
    %1498 = vmatprep.subr.mxu0 %v1497
    %v1499 = vand.u32 %v135, 4294901760
    %1500 = vmatpush1.msra.mxu0 %v1499
    %v1501 = vand.u32 %v138, 4294901760
    %1502 = vmatprep.subr.mxu0 %v1501
    %v1503 = vand.u32 %v137, 4294901760
    %1504 = vmatpush1.msra.mxu0 %v1503
    %v1505 = vand.u32 %v140, 4294901760
    %1506 = vmatprep.subr.mxu0 %v1505
    %v1507 = vand.u32 %v139, 4294901760
    %1508 = vmatpush1.msra.mxu0 %v1507
    %v1509 = vand.u32 %v142, 4294901760
    %1510 = vmatprep.subr.mxu0 %v1509
    %v1511 = vand.u32 %v141, 4294901760
    %1512 = vmatpush1.msra.mxu0 %v1511
    %v1513 = vand.u32 %v144, 4294901760
    %1514 = vmatprep.subr.mxu0 %v1513
    %v1515 = vand.u32 %v143, 4294901760
    %1516 = vmatpush1.msra.mxu0 %v1515
    %v1517 = vand.u32 %v146, 4294901760
    %1518 = vmatprep.subr.mxu0 %v1517
    %v1519 = vand.u32 %v145, 4294901760
    %1520 = vmatpush1.msra.mxu0 %v1519
    %v1521 = vand.u32 %v148, 4294901760
    %1522 = vmatprep.subr.mxu0 %v1521
    %v1523 = vand.u32 %v147, 4294901760
    %1524 = vmatpush1.msra.mxu0 %v1523
    %v1525 = vand.u32 %v150, 4294901760
    %1526 = vmatprep.subr.mxu0 %v1525
    %v1527 = vand.u32 %v149, 4294901760
    %1528 = vmatpush1.msra.mxu0 %v1527
    %v1529 = vand.u32 %v152, 4294901760
    %1530 = vmatprep.subr.mxu0 %v1529
    %v1531 = vand.u32 %v151, 4294901760
    %1532 = vmatpush1.msra.mxu0 %v1531
    %v1533 = vand.u32 %v154, 4294901760
    %1534 = vmatprep.subr.mxu0 %v1533
    %v1535 = vand.u32 %v153, 4294901760
    %1536 = vmatpush1.msra.mxu0 %v1535
    %1537 = vmatprep.subr.mxu0 0.0
    %1538 = vmatpush1.msra.mxu0 0.0
    %1539 = vmatprep.subr.mxu0 0.0
    %1540 = vmatpush1.msra.mxu0 0.0
    %1541 = vmatprep.subr.mxu0 0.0
    %1542 = vmatpush1.msra.mxu0 0.0
    %1543 = vmatprep.subr.mxu0 0.0
    %1544 = vmatpush1.msra.mxu0 0.0
    %1545 = vmatprep.subr.mxu0 0.0
    %1546 = vmatpush1.msra.mxu0 0.0
    %1547 = vmatprep.subr.mxu0 0.0
    %1548 = vmatpush1.msra.mxu0 0.0
    %1549 = vmatprep.subr.mxu0 0.0
    %1550 = vmatpush1.msra.mxu0 0.0
    %1551 = vmatprep.subr.mxu0 0.0
    %1552 = vmatpush1.msra.mxu0 0.0
    %1553 = vmatprep.subr.mxu0 0.0
    %1554 = vmatpush1.msra.mxu0 0.0
    %1555 = vmatprep.subr.mxu0 0.0
    %1556 = vmatpush1.msra.mxu0 0.0
    %1557 = vmatprep.subr.mxu0 0.0
    %1558 = vmatpush1.msra.mxu0 0.0
    %1559 = vmatprep.subr.mxu0 0.0
    %1560 = vmatpush1.msra.mxu0 0.0
    %1561 = vmatprep.subr.mxu0 0.0
    %1562 = vmatpush1.msra.mxu0 0.0
    %1563 = vmatprep.subr.mxu0 0.0
    %1564 = vmatpush1.msra.mxu0 0.0
    %1565 = vmatprep.subr.mxu0 0.0
    %1566 = vmatpush1.msra.mxu0 0.0
    %1567 = vmatprep.subr.mxu0 0.0
    %1568 = vmatpush1.msra.mxu0 0.0
    %1569 = vmatprep.mubr.f32.mxu0 0.0
    %v1570 = vand.u32 %v1472, 4294901760
    %v1571 = vsub.f32 %v1472, %v1570
    %v1572 = vand.u32 %v1571, 4294901760
    %v1573 = vsub.f32 %v1571, %v1572
    %v1574 = vand.u32 %v1573, 4294901760
    %1575 = vmatmul.mubr.f32.gmra.mrb[0].mxu0 %v1574
    %v1576 = vpop.f32.mrb[0].mxu0
    %v1577 = vadd.f32 0.0, %v1576
    %v1578 = vpop.f32.mrb[0].mxu0
    %v1579 = vadd.f32 0.0, %v1578
    %1580 = vdwg.mxu0
    %v1581 = vand.u32 %v124, 4294901760
    %v1582 = vsub.f32 %v124, %v1581
    %v1583 = vand.u32 %v1582, 4294901760
    %v1584 = vsub.f32 %v1582, %v1583
    %v1585 = vand.u32 %v1584, 4294901760
    %1586 = vmatprep.subr.mxu0 %v1585
    %v1587 = vand.u32 %v123, 4294901760
    %v1588 = vsub.f32 %v123, %v1587
    %v1589 = vand.u32 %v1588, 4294901760
    %v1590 = vsub.f32 %v1588, %v1589
    %v1591 = vand.u32 %v1590, 4294901760
    %1592 = vmatpush1.msra.mxu0 %v1591
    %v1593 = vand.u32 %v126, 4294901760
    %v1594 = vsub.f32 %v126, %v1593
    %v1595 = vand.u32 %v1594, 4294901760
    %v1596 = vsub.f32 %v1594, %v1595
    %v1597 = vand.u32 %v1596, 4294901760
    %1598 = vmatprep.subr.mxu0 %v1597
    %v1599 = vand.u32 %v125, 4294901760
    %v1600 = vsub.f32 %v125, %v1599
    %v1601 = vand.u32 %v1600, 4294901760
    %v1602 = vsub.f32 %v1600, %v1601
    %v1603 = vand.u32 %v1602, 4294901760
    %1604 = vmatpush1.msra.mxu0 %v1603
    %v1605 = vand.u32 %v128, 4294901760
    %v1606 = vsub.f32 %v128, %v1605
    %v1607 = vand.u32 %v1606, 4294901760
    %v1608 = vsub.f32 %v1606, %v1607
    %v1609 = vand.u32 %v1608, 4294901760
    %1610 = vmatprep.subr.mxu0 %v1609
    %v1611 = vand.u32 %v127, 4294901760
    %v1612 = vsub.f32 %v127, %v1611
    %v1613 = vand.u32 %v1612, 4294901760
    %v1614 = vsub.f32 %v1612, %v1613
    %v1615 = vand.u32 %v1614, 4294901760
    %1616 = vmatpush1.msra.mxu0 %v1615
    %v1617 = vand.u32 %v130, 4294901760
    %v1618 = vsub.f32 %v130, %v1617
    %v1619 = vand.u32 %v1618, 4294901760
    %v1620 = vsub.f32 %v1618, %v1619
    %v1621 = vand.u32 %v1620, 4294901760
    %1622 = vmatprep.subr.mxu0 %v1621
    %v1623 = vand.u32 %v129, 4294901760
    %v1624 = vsub.f32 %v129, %v1623
    %v1625 = vand.u32 %v1624, 4294901760
    %v1626 = vsub.f32 %v1624, %v1625
    %v1627 = vand.u32 %v1626, 4294901760
    %1628 = vmatpush1.msra.mxu0 %v1627
    %v1629 = vand.u32 %v132, 4294901760
    %v1630 = vsub.f32 %v132, %v1629
    %v1631 = vand.u32 %v1630, 4294901760
    %v1632 = vsub.f32 %v1630, %v1631
    %v1633 = vand.u32 %v1632, 4294901760
    %1634 = vmatprep.subr.mxu0 %v1633
    %v1635 = vand.u32 %v131, 4294901760
    %v1636 = vsub.f32 %v131, %v1635
    %v1637 = vand.u32 %v1636, 4294901760
    %v1638 = vsub.f32 %v1636, %v1637
    %v1639 = vand.u32 %v1638, 4294901760
    %1640 = vmatpush1.msra.mxu0 %v1639
    %v1641 = vand.u32 %v134, 4294901760
    %v1642 = vsub.f32 %v134, %v1641
    %v1643 = vand.u32 %v1642, 4294901760
    %v1644 = vsub.f32 %v1642, %v1643
    %v1645 = vand.u32 %v1644, 4294901760
    %1646 = vmatprep.subr.mxu0 %v1645
    %v1647 = vand.u32 %v133, 4294901760
    %v1648 = vsub.f32 %v133, %v1647
    %v1649 = vand.u32 %v1648, 4294901760
    %v1650 = vsub.f32 %v1648, %v1649
    %v1651 = vand.u32 %v1650, 4294901760
    %1652 = vmatpush1.msra.mxu0 %v1651
    %v1653 = vand.u32 %v136, 4294901760
    %v1654 = vsub.f32 %v136, %v1653
    %v1655 = vand.u32 %v1654, 4294901760
    %v1656 = vsub.f32 %v1654, %v1655
    %v1657 = vand.u32 %v1656, 4294901760
    %1658 = vmatprep.subr.mxu0 %v1657
    %v1659 = vand.u32 %v135, 4294901760
    %v1660 = vsub.f32 %v135, %v1659
    %v1661 = vand.u32 %v1660, 4294901760
    %v1662 = vsub.f32 %v1660, %v1661
    %v1663 = vand.u32 %v1662, 4294901760
    %1664 = vmatpush1.msra.mxu0 %v1663
    %v1665 = vand.u32 %v138, 4294901760
    %v1666 = vsub.f32 %v138, %v1665
    %v1667 = vand.u32 %v1666, 4294901760
    %v1668 = vsub.f32 %v1666, %v1667
    %v1669 = vand.u32 %v1668, 4294901760
    %1670 = vmatprep.subr.mxu0 %v1669
    %v1671 = vand.u32 %v137, 4294901760
    %v1672 = vsub.f32 %v137, %v1671
    %v1673 = vand.u32 %v1672, 4294901760
    %v1674 = vsub.f32 %v1672, %v1673
    %v1675 = vand.u32 %v1674, 4294901760
    %1676 = vmatpush1.msra.mxu0 %v1675
    %v1677 = vand.u32 %v140, 4294901760
    %v1678 = vsub.f32 %v140, %v1677
    %v1679 = vand.u32 %v1678, 4294901760
    %v1680 = vsub.f32 %v1678, %v1679
    %v1681 = vand.u32 %v1680, 4294901760
    %1682 = vmatprep.subr.mxu0 %v1681
    %v1683 = vand.u32 %v139, 4294901760
    %v1684 = vsub.f32 %v139, %v1683
    %v1685 = vand.u32 %v1684, 4294901760
    %v1686 = vsub.f32 %v1684, %v1685
    %v1687 = vand.u32 %v1686, 4294901760
    %1688 = vmatpush1.msra.mxu0 %v1687
    %v1689 = vand.u32 %v142, 4294901760
    %v1690 = vsub.f32 %v142, %v1689
    %v1691 = vand.u32 %v1690, 4294901760
    %v1692 = vsub.f32 %v1690, %v1691
    %v1693 = vand.u32 %v1692, 4294901760
    %1694 = vmatprep.subr.mxu0 %v1693
    %v1695 = vand.u32 %v141, 4294901760
    %v1696 = vsub.f32 %v141, %v1695
    %v1697 = vand.u32 %v1696, 4294901760
    %v1698 = vsub.f32 %v1696, %v1697
    %v1699 = vand.u32 %v1698, 4294901760
    %1700 = vmatpush1.msra.mxu0 %v1699
    %v1701 = vand.u32 %v144, 4294901760
    %v1702 = vsub.f32 %v144, %v1701
    %v1703 = vand.u32 %v1702, 4294901760
    %v1704 = vsub.f32 %v1702, %v1703
    %v1705 = vand.u32 %v1704, 4294901760
    %1706 = vmatprep.subr.mxu0 %v1705
    %v1707 = vand.u32 %v143, 4294901760
    %v1708 = vsub.f32 %v143, %v1707
    %v1709 = vand.u32 %v1708, 4294901760
    %v1710 = vsub.f32 %v1708, %v1709
    %v1711 = vand.u32 %v1710, 4294901760
    %1712 = vmatpush1.msra.mxu0 %v1711
    %v1713 = vand.u32 %v146, 4294901760
    %v1714 = vsub.f32 %v146, %v1713
    %v1715 = vand.u32 %v1714, 4294901760
    %v1716 = vsub.f32 %v1714, %v1715
    %v1717 = vand.u32 %v1716, 4294901760
    %1718 = vmatprep.subr.mxu0 %v1717
    %v1719 = vand.u32 %v145, 4294901760
    %v1720 = vsub.f32 %v145, %v1719
    %v1721 = vand.u32 %v1720, 4294901760
    %v1722 = vsub.f32 %v1720, %v1721
    %v1723 = vand.u32 %v1722, 4294901760
    %1724 = vmatpush1.msra.mxu0 %v1723
    %v1725 = vand.u32 %v148, 4294901760
    %v1726 = vsub.f32 %v148, %v1725
    %v1727 = vand.u32 %v1726, 4294901760
    %v1728 = vsub.f32 %v1726, %v1727
    %v1729 = vand.u32 %v1728, 4294901760
    %1730 = vmatprep.subr.mxu0 %v1729
    %v1731 = vand.u32 %v147, 4294901760
    %v1732 = vsub.f32 %v147, %v1731
    %v1733 = vand.u32 %v1732, 4294901760
    %v1734 = vsub.f32 %v1732, %v1733
    %v1735 = vand.u32 %v1734, 4294901760
    %1736 = vmatpush1.msra.mxu0 %v1735
    %v1737 = vand.u32 %v150, 4294901760
    %v1738 = vsub.f32 %v150, %v1737
    %v1739 = vand.u32 %v1738, 4294901760
    %v1740 = vsub.f32 %v1738, %v1739
    %v1741 = vand.u32 %v1740, 4294901760
    %1742 = vmatprep.subr.mxu0 %v1741
    %v1743 = vand.u32 %v149, 4294901760
    %v1744 = vsub.f32 %v149, %v1743
    %v1745 = vand.u32 %v1744, 4294901760
    %v1746 = vsub.f32 %v1744, %v1745
    %v1747 = vand.u32 %v1746, 4294901760
    %1748 = vmatpush1.msra.mxu0 %v1747
    %v1749 = vand.u32 %v152, 4294901760
    %v1750 = vsub.f32 %v152, %v1749
    %v1751 = vand.u32 %v1750, 4294901760
    %v1752 = vsub.f32 %v1750, %v1751
    %v1753 = vand.u32 %v1752, 4294901760
    %1754 = vmatprep.subr.mxu0 %v1753
    %v1755 = vand.u32 %v151, 4294901760
    %v1756 = vsub.f32 %v151, %v1755
    %v1757 = vand.u32 %v1756, 4294901760
    %v1758 = vsub.f32 %v1756, %v1757
    %v1759 = vand.u32 %v1758, 4294901760
    %1760 = vmatpush1.msra.mxu0 %v1759
    %v1761 = vand.u32 %v154, 4294901760
    %v1762 = vsub.f32 %v154, %v1761
    %v1763 = vand.u32 %v1762, 4294901760
    %v1764 = vsub.f32 %v1762, %v1763
    %v1765 = vand.u32 %v1764, 4294901760
    %1766 = vmatprep.subr.mxu0 %v1765
    %v1767 = vand.u32 %v153, 4294901760
    %v1768 = vsub.f32 %v153, %v1767
    %v1769 = vand.u32 %v1768, 4294901760
    %v1770 = vsub.f32 %v1768, %v1769
    %v1771 = vand.u32 %v1770, 4294901760
    %1772 = vmatpush1.msra.mxu0 %v1771
    %1773 = vmatprep.subr.mxu0 0.0
    %1774 = vmatpush1.msra.mxu0 0.0
    %1775 = vmatprep.subr.mxu0 0.0
    %1776 = vmatpush1.msra.mxu0 0.0
    %1777 = vmatprep.subr.mxu0 0.0
    %1778 = vmatpush1.msra.mxu0 0.0
    %1779 = vmatprep.subr.mxu0 0.0
    %1780 = vmatpush1.msra.mxu0 0.0
    %1781 = vmatprep.subr.mxu0 0.0
    %1782 = vmatpush1.msra.mxu0 0.0
    %1783 = vmatprep.subr.mxu0 0.0
    %1784 = vmatpush1.msra.mxu0 0.0
    %1785 = vmatprep.subr.mxu0 0.0
    %1786 = vmatpush1.msra.mxu0 0.0
    %1787 = vmatprep.subr.mxu0 0.0
    %1788 = vmatpush1.msra.mxu0 0.0
    %1789 = vmatprep.subr.mxu0 0.0
    %1790 = vmatpush1.msra.mxu0 0.0
    %1791 = vmatprep.subr.mxu0 0.0
    %1792 = vmatpush1.msra.mxu0 0.0
    %1793 = vmatprep.subr.mxu0 0.0
    %1794 = vmatpush1.msra.mxu0 0.0
    %1795 = vmatprep.subr.mxu0 0.0
    %1796 = vmatpush1.msra.mxu0 0.0
    %1797 = vmatprep.subr.mxu0 0.0
    %1798 = vmatpush1.msra.mxu0 0.0
    %1799 = vmatprep.subr.mxu0 0.0
    %1800 = vmatpush1.msra.mxu0 0.0
    %1801 = vmatprep.subr.mxu0 0.0
    %1802 = vmatpush1.msra.mxu0 0.0
    %1803 = vmatprep.subr.mxu0 0.0
    %1804 = vmatpush1.msra.mxu0 0.0
    %1805 = vmatprep.mubr.f32.mxu0 0.0
    %v1806 = vand.u32 %v1472, 4294901760
    %1807 = vmatmul.mubr.f32.gmra.mrb[0].mxu0 %v1806
    %v1808 = vpop.f32.mrb[0].mxu0
    %v1809 = vadd.f32 %v1577, %v1808
    %v1810 = vpop.f32.mrb[0].mxu0
    %v1811 = vadd.f32 %v1579, %v1810
    %1812 = vdwg.mxu0
    %v1813 = vand.u32 %v124, 4294901760
    %v1814 = vsub.f32 %v124, %v1813
    %1815 = vmatprep.subr.mxu0 %v1814
    %v1816 = vand.u32 %v123, 4294901760
    %v1817 = vsub.f32 %v123, %v1816
    %1818 = vmatpush1.msra.mxu0 %v1817
    %v1819 = vand.u32 %v126, 4294901760
    %v1820 = vsub.f32 %v126, %v1819
    %1821 = vmatprep.subr.mxu0 %v1820
    %v1822 = vand.u32 %v125, 4294901760
    %v1823 = vsub.f32 %v125, %v1822
    %1824 = vmatpush1.msra.mxu0 %v1823
    %v1825 = vand.u32 %v128, 4294901760
    %v1826 = vsub.f32 %v128, %v1825
    %1827 = vmatprep.subr.mxu0 %v1826
    %v1828 = vand.u32 %v127, 4294901760
    %v1829 = vsub.f32 %v127, %v1828
    %1830 = vmatpush1.msra.mxu0 %v1829
    %v1831 = vand.u32 %v130, 4294901760
    %v1832 = vsub.f32 %v130, %v1831
    %1833 = vmatprep.subr.mxu0 %v1832
    %v1834 = vand.u32 %v129, 4294901760
    %v1835 = vsub.f32 %v129, %v1834
    %1836 = vmatpush1.msra.mxu0 %v1835
    %v1837 = vand.u32 %v132, 4294901760
    %v1838 = vsub.f32 %v132, %v1837
    %1839 = vmatprep.subr.mxu0 %v1838
    %v1840 = vand.u32 %v131, 4294901760
    %v1841 = vsub.f32 %v131, %v1840
    %1842 = vmatpush1.msra.mxu0 %v1841
    %v1843 = vand.u32 %v134, 4294901760
    %v1844 = vsub.f32 %v134, %v1843
    %1845 = vmatprep.subr.mxu0 %v1844
    %v1846 = vand.u32 %v133, 4294901760
    %v1847 = vsub.f32 %v133, %v1846
    %1848 = vmatpush1.msra.mxu0 %v1847
    %v1849 = vand.u32 %v136, 4294901760
    %v1850 = vsub.f32 %v136, %v1849
    %1851 = vmatprep.subr.mxu0 %v1850
    %v1852 = vand.u32 %v135, 4294901760
    %v1853 = vsub.f32 %v135, %v1852
    %1854 = vmatpush1.msra.mxu0 %v1853
    %v1855 = vand.u32 %v138, 4294901760
    %v1856 = vsub.f32 %v138, %v1855
    %1857 = vmatprep.subr.mxu0 %v1856
    %v1858 = vand.u32 %v137, 4294901760
    %v1859 = vsub.f32 %v137, %v1858
    %1860 = vmatpush1.msra.mxu0 %v1859
    %v1861 = vand.u32 %v140, 4294901760
    %v1862 = vsub.f32 %v140, %v1861
    %1863 = vmatprep.subr.mxu0 %v1862
    %v1864 = vand.u32 %v139, 4294901760
    %v1865 = vsub.f32 %v139, %v1864
    %1866 = vmatpush1.msra.mxu0 %v1865
    %v1867 = vand.u32 %v142, 4294901760
    %v1868 = vsub.f32 %v142, %v1867
    %1869 = vmatprep.subr.mxu0 %v1868
    %v1870 = vand.u32 %v141, 4294901760
    %v1871 = vsub.f32 %v141, %v1870
    %1872 = vmatpush1.msra.mxu0 %v1871
    %v1873 = vand.u32 %v144, 4294901760
    %v1874 = vsub.f32 %v144, %v1873
    %1875 = vmatprep.subr.mxu0 %v1874
    %v1876 = vand.u32 %v143, 4294901760
    %v1877 = vsub.f32 %v143, %v1876
    %1878 = vmatpush1.msra.mxu0 %v1877
    %v1879 = vand.u32 %v146, 4294901760
    %v1880 = vsub.f32 %v146, %v1879
    %1881 = vmatprep.subr.mxu0 %v1880
    %v1882 = vand.u32 %v145, 4294901760
    %v1883 = vsub.f32 %v145, %v1882
    %1884 = vmatpush1.msra.mxu0 %v1883
    %v1885 = vand.u32 %v148, 4294901760
    %v1886 = vsub.f32 %v148, %v1885
    %1887 = vmatprep.subr.mxu0 %v1886
    %v1888 = vand.u32 %v147, 4294901760
    %v1889 = vsub.f32 %v147, %v1888
    %1890 = vmatpush1.msra.mxu0 %v1889
    %v1891 = vand.u32 %v150, 4294901760
    %v1892 = vsub.f32 %v150, %v1891
    %1893 = vmatprep.subr.mxu0 %v1892
    %v1894 = vand.u32 %v149, 4294901760
    %v1895 = vsub.f32 %v149, %v1894
    %1896 = vmatpush1.msra.mxu0 %v1895
    %v1897 = vand.u32 %v152, 4294901760
    %v1898 = vsub.f32 %v152, %v1897
    %1899 = vmatprep.subr.mxu0 %v1898
    %v1900 = vand.u32 %v151, 4294901760
    %v1901 = vsub.f32 %v151, %v1900
    %1902 = vmatpush1.msra.mxu0 %v1901
    %v1903 = vand.u32 %v154, 4294901760
    %v1904 = vsub.f32 %v154, %v1903
    %1905 = vmatprep.subr.mxu0 %v1904
    %v1906 = vand.u32 %v153, 4294901760
    %v1907 = vsub.f32 %v153, %v1906
    %1908 = vmatpush1.msra.mxu0 %v1907
    %1909 = vmatprep.subr.mxu0 0.0
    %1910 = vmatpush1.msra.mxu0 0.0
    %1911 = vmatprep.subr.mxu0 0.0
    %1912 = vmatpush1.msra.mxu0 0.0
    %1913 = vmatprep.subr.mxu0 0.0
    %1914 = vmatpush1.msra.mxu0 0.0
    %1915 = vmatprep.subr.mxu0 0.0
    %1916 = vmatpush1.msra.mxu0 0.0
    %1917 = vmatprep.subr.mxu0 0.0
    %1918 = vmatpush1.msra.mxu0 0.0
    %1919 = vmatprep.subr.mxu0 0.0
    %1920 = vmatpush1.msra.mxu0 0.0
    %1921 = vmatprep.subr.mxu0 0.0
    %1922 = vmatpush1.msra.mxu0 0.0
    %1923 = vmatprep.subr.mxu0 0.0
    %1924 = vmatpush1.msra.mxu0 0.0
    %1925 = vmatprep.subr.mxu0 0.0
    %1926 = vmatpush1.msra.mxu0 0.0
    %1927 = vmatprep.subr.mxu0 0.0
    %1928 = vmatpush1.msra.mxu0 0.0
    %1929 = vmatprep.subr.mxu0 0.0
    %1930 = vmatpush1.msra.mxu0 0.0
    %1931 = vmatprep.subr.mxu0 0.0
    %1932 = vmatpush1.msra.mxu0 0.0
    %1933 = vmatprep.subr.mxu0 0.0
    %1934 = vmatpush1.msra.mxu0 0.0
    %1935 = vmatprep.subr.mxu0 0.0
    %1936 = vmatpush1.msra.mxu0 0.0
    %1937 = vmatprep.subr.mxu0 0.0
    %1938 = vmatpush1.msra.mxu0 0.0
    %1939 = vmatprep.subr.mxu0 0.0
    %1940 = vmatpush1.msra.mxu0 0.0
    %1941 = vmatprep.mubr.f32.mxu0 0.0
    %v1942 = vand.u32 %v1472, 4294901760
    %v1943 = vsub.f32 %v1472, %v1942
    %1944 = vmatmul.mubr.f32.gmra.mrb[0].mxu0 %v1943
    %v1945 = vpop.f32.mrb[0].mxu0
    %v1946 = vadd.f32 %v1809, %v1945
    %v1947 = vpop.f32.mrb[0].mxu0
    %v1948 = vadd.f32 %v1811, %v1947
    %1949 = vdwg.mxu0
    %v1950 = vand.u32 %v124, 4294901760
    %1951 = vmatprep.subr.mxu0 %v1950
    %v1952 = vand.u32 %v123, 4294901760
    %1953 = vmatpush1.msra.mxu0 %v1952
    %v1954 = vand.u32 %v126, 4294901760
    %1955 = vmatprep.subr.mxu0 %v1954
    %v1956 = vand.u32 %v125, 4294901760
    %1957 = vmatpush1.msra.mxu0 %v1956
    %v1958 = vand.u32 %v128, 4294901760
    %1959 = vmatprep.subr.mxu0 %v1958
    %v1960 = vand.u32 %v127, 4294901760
    %1961 = vmatpush1.msra.mxu0 %v1960
    %v1962 = vand.u32 %v130, 4294901760
    %1963 = vmatprep.subr.mxu0 %v1962
    %v1964 = vand.u32 %v129, 4294901760
    %1965 = vmatpush1.msra.mxu0 %v1964
    %v1966 = vand.u32 %v132, 4294901760
    %1967 = vmatprep.subr.mxu0 %v1966
    %v1968 = vand.u32 %v131, 4294901760
    %1969 = vmatpush1.msra.mxu0 %v1968
    %v1970 = vand.u32 %v134, 4294901760
    %1971 = vmatprep.subr.mxu0 %v1970
    %v1972 = vand.u32 %v133, 4294901760
    %1973 = vmatpush1.msra.mxu0 %v1972
    %v1974 = vand.u32 %v136, 4294901760
    %1975 = vmatprep.subr.mxu0 %v1974
    %v1976 = vand.u32 %v135, 4294901760
    %1977 = vmatpush1.msra.mxu0 %v1976
    %v1978 = vand.u32 %v138, 4294901760
    %1979 = vmatprep.subr.mxu0 %v1978
    %v1980 = vand.u32 %v137, 4294901760
    %1981 = vmatpush1.msra.mxu0 %v1980
    %v1982 = vand.u32 %v140, 4294901760
    %1983 = vmatprep.subr.mxu0 %v1982
    %v1984 = vand.u32 %v139, 4294901760
    %1985 = vmatpush1.msra.mxu0 %v1984
    %v1986 = vand.u32 %v142, 4294901760
    %1987 = vmatprep.subr.mxu0 %v1986
    %v1988 = vand.u32 %v141, 4294901760
    %1989 = vmatpush1.msra.mxu0 %v1988
    %v1990 = vand.u32 %v144, 4294901760
    %1991 = vmatprep.subr.mxu0 %v1990
    %v1992 = vand.u32 %v143, 4294901760
    %1993 = vmatpush1.msra.mxu0 %v1992
    %v1994 = vand.u32 %v146, 4294901760
    %1995 = vmatprep.subr.mxu0 %v1994
    %v1996 = vand.u32 %v145, 4294901760
    %1997 = vmatpush1.msra.mxu0 %v1996
    %v1998 = vand.u32 %v148, 4294901760
    %1999 = vmatprep.subr.mxu0 %v1998
    %v2000 = vand.u32 %v147, 4294901760
    %2001 = vmatpush1.msra.mxu0 %v2000
    %v2002 = vand.u32 %v150, 4294901760
    %2003 = vmatprep.subr.mxu0 %v2002
    %v2004 = vand.u32 %v149, 4294901760
    %2005 = vmatpush1.msra.mxu0 %v2004
    %v2006 = vand.u32 %v152, 4294901760
    %2007 = vmatprep.subr.mxu0 %v2006
    %v2008 = vand.u32 %v151, 4294901760
    %2009 = vmatpush1.msra.mxu0 %v2008
    %v2010 = vand.u32 %v154, 4294901760
    %2011 = vmatprep.subr.mxu0 %v2010
    %v2012 = vand.u32 %v153, 4294901760
    %2013 = vmatpush1.msra.mxu0 %v2012
    %2014 = vmatprep.subr.mxu0 0.0
    %2015 = vmatpush1.msra.mxu0 0.0
    %2016 = vmatprep.subr.mxu0 0.0
    %2017 = vmatpush1.msra.mxu0 0.0
    %2018 = vmatprep.subr.mxu0 0.0
    %2019 = vmatpush1.msra.mxu0 0.0
    %2020 = vmatprep.subr.mxu0 0.0
    %2021 = vmatpush1.msra.mxu0 0.0
    %2022 = vmatprep.subr.mxu0 0.0
    %2023 = vmatpush1.msra.mxu0 0.0
    %2024 = vmatprep.subr.mxu0 0.0
    %2025 = vmatpush1.msra.mxu0 0.0
    %2026 = vmatprep.subr.mxu0 0.0
    %2027 = vmatpush1.msra.mxu0 0.0
    %2028 = vmatprep.subr.mxu0 0.0
    %2029 = vmatpush1.msra.mxu0 0.0
    %2030 = vmatprep.subr.mxu0 0.0
    %2031 = vmatpush1.msra.mxu0 0.0
    %2032 = vmatprep.subr.mxu0 0.0
    %2033 = vmatpush1.msra.mxu0 0.0
    %2034 = vmatprep.subr.mxu0 0.0
    %2035 = vmatpush1.msra.mxu0 0.0
    %2036 = vmatprep.subr.mxu0 0.0
    %2037 = vmatpush1.msra.mxu0 0.0
    %2038 = vmatprep.subr.mxu0 0.0
    %2039 = vmatpush1.msra.mxu0 0.0
    %2040 = vmatprep.subr.mxu0 0.0
    %2041 = vmatpush1.msra.mxu0 0.0
    %2042 = vmatprep.subr.mxu0 0.0
    %2043 = vmatpush1.msra.mxu0 0.0
    %2044 = vmatprep.subr.mxu0 0.0
    %2045 = vmatpush1.msra.mxu0 0.0
    %2046 = vmatprep.mubr.f32.mxu0 0.0
    %v2047 = vand.u32 %v1472, 4294901760
    %v2048 = vsub.f32 %v1472, %v2047
    %v2049 = vand.u32 %v2048, 4294901760
    %2050 = vmatmul.mubr.f32.gmra.mrb[0].mxu0 %v2049
    %v2051 = vpop.f32.mrb[0].mxu0
    %v2052 = vadd.f32 %v1946, %v2051
    %v2053 = vpop.f32.mrb[0].mxu0
    %v2054 = vadd.f32 %v1948, %v2053
    %2055 = vdwg.mxu0
    %v2056 = vand.u32 %v124, 4294901760
    %v2057 = vsub.f32 %v124, %v2056
    %v2058 = vand.u32 %v2057, 4294901760
    %2059 = vmatprep.subr.mxu0 %v2058
    %v2060 = vand.u32 %v123, 4294901760
    %v2061 = vsub.f32 %v123, %v2060
    %v2062 = vand.u32 %v2061, 4294901760
    %2063 = vmatpush1.msra.mxu0 %v2062
    %v2064 = vand.u32 %v126, 4294901760
    %v2065 = vsub.f32 %v126, %v2064
    %v2066 = vand.u32 %v2065, 4294901760
    %2067 = vmatprep.subr.mxu0 %v2066
    %v2068 = vand.u32 %v125, 4294901760
    %v2069 = vsub.f32 %v125, %v2068
    %v2070 = vand.u32 %v2069, 4294901760
    %2071 = vmatpush1.msra.mxu0 %v2070
    %v2072 = vand.u32 %v128, 4294901760
    %v2073 = vsub.f32 %v128, %v2072
    %v2074 = vand.u32 %v2073, 4294901760
    %2075 = vmatprep.subr.mxu0 %v2074
    %v2076 = vand.u32 %v127, 4294901760
    %v2077 = vsub.f32 %v127, %v2076
    %v2078 = vand.u32 %v2077, 4294901760
    %2079 = vmatpush1.msra.mxu0 %v2078
    %v2080 = vand.u32 %v130, 4294901760
    %v2081 = vsub.f32 %v130, %v2080
    %v2082 = vand.u32 %v2081, 4294901760
    %2083 = vmatprep.subr.mxu0 %v2082
    %v2084 = vand.u32 %v129, 4294901760
    %v2085 = vsub.f32 %v129, %v2084
    %v2086 = vand.u32 %v2085, 4294901760
    %2087 = vmatpush1.msra.mxu0 %v2086
    %v2088 = vand.u32 %v132, 4294901760
    %v2089 = vsub.f32 %v132, %v2088
    %v2090 = vand.u32 %v2089, 4294901760
    %2091 = vmatprep.subr.mxu0 %v2090
    %v2092 = vand.u32 %v131, 4294901760
    %v2093 = vsub.f32 %v131, %v2092
    %v2094 = vand.u32 %v2093, 4294901760
    %2095 = vmatpush1.msra.mxu0 %v2094
    %v2096 = vand.u32 %v134, 4294901760
    %v2097 = vsub.f32 %v134, %v2096
    %v2098 = vand.u32 %v2097, 4294901760
    %2099 = vmatprep.subr.mxu0 %v2098
    %v2100 = vand.u32 %v133, 4294901760
    %v2101 = vsub.f32 %v133, %v2100
    %v2102 = vand.u32 %v2101, 4294901760
    %2103 = vmatpush1.msra.mxu0 %v2102
    %v2104 = vand.u32 %v136, 4294901760
    %v2105 = vsub.f32 %v136, %v2104
    %v2106 = vand.u32 %v2105, 4294901760
    %2107 = vmatprep.subr.mxu0 %v2106
    %v2108 = vand.u32 %v135, 4294901760
    %v2109 = vsub.f32 %v135, %v2108
    %v2110 = vand.u32 %v2109, 4294901760
    %2111 = vmatpush1.msra.mxu0 %v2110
    %v2112 = vand.u32 %v138, 4294901760
    %v2113 = vsub.f32 %v138, %v2112
    %v2114 = vand.u32 %v2113, 4294901760
    %2115 = vmatprep.subr.mxu0 %v2114
    %v2116 = vand.u32 %v137, 4294901760
    %v2117 = vsub.f32 %v137, %v2116
    %v2118 = vand.u32 %v2117, 4294901760
    %2119 = vmatpush1.msra.mxu0 %v2118
    %v2120 = vand.u32 %v140, 4294901760
    %v2121 = vsub.f32 %v140, %v2120
    %v2122 = vand.u32 %v2121, 4294901760
    %2123 = vmatprep.subr.mxu0 %v2122
    %v2124 = vand.u32 %v139, 4294901760
    %v2125 = vsub.f32 %v139, %v2124
    %v2126 = vand.u32 %v2125, 4294901760
    %2127 = vmatpush1.msra.mxu0 %v2126
    %v2128 = vand.u32 %v142, 4294901760
    %v2129 = vsub.f32 %v142, %v2128
    %v2130 = vand.u32 %v2129, 4294901760
    %2131 = vmatprep.subr.mxu0 %v2130
    %v2132 = vand.u32 %v141, 4294901760
    %v2133 = vsub.f32 %v141, %v2132
    %v2134 = vand.u32 %v2133, 4294901760
    %2135 = vmatpush1.msra.mxu0 %v2134
    %v2136 = vand.u32 %v144, 4294901760
    %v2137 = vsub.f32 %v144, %v2136
    %v2138 = vand.u32 %v2137, 4294901760
    %2139 = vmatprep.subr.mxu0 %v2138
    %v2140 = vand.u32 %v143, 4294901760
    %v2141 = vsub.f32 %v143, %v2140
    %v2142 = vand.u32 %v2141, 4294901760
    %2143 = vmatpush1.msra.mxu0 %v2142
    %v2144 = vand.u32 %v146, 4294901760
    %v2145 = vsub.f32 %v146, %v2144
    %v2146 = vand.u32 %v2145, 4294901760
    %2147 = vmatprep.subr.mxu0 %v2146
    %v2148 = vand.u32 %v145, 4294901760
    %v2149 = vsub.f32 %v145, %v2148
    %v2150 = vand.u32 %v2149, 4294901760
    %2151 = vmatpush1.msra.mxu0 %v2150
    %v2152 = vand.u32 %v148, 4294901760
    %v2153 = vsub.f32 %v148, %v2152
    %v2154 = vand.u32 %v2153, 4294901760
    %2155 = vmatprep.subr.mxu0 %v2154
    %v2156 = vand.u32 %v147, 4294901760
    %v2157 = vsub.f32 %v147, %v2156
    %v2158 = vand.u32 %v2157, 4294901760
    %2159 = vmatpush1.msra.mxu0 %v2158
    %v2160 = vand.u32 %v150, 4294901760
    %v2161 = vsub.f32 %v150, %v2160
    %v2162 = vand.u32 %v2161, 4294901760
    %2163 = vmatprep.subr.mxu0 %v2162
    %v2164 = vand.u32 %v149, 4294901760
    %v2165 = vsub.f32 %v149, %v2164
    %v2166 = vand.u32 %v2165, 4294901760
    %2167 = vmatpush1.msra.mxu0 %v2166
    %v2168 = vand.u32 %v152, 4294901760
    %v2169 = vsub.f32 %v152, %v2168
    %v2170 = vand.u32 %v2169, 4294901760
    %2171 = vmatprep.subr.mxu0 %v2170
    %v2172 = vand.u32 %v151, 4294901760
    %v2173 = vsub.f32 %v151, %v2172
    %v2174 = vand.u32 %v2173, 4294901760
    %2175 = vmatpush1.msra.mxu0 %v2174
    %v2176 = vand.u32 %v154, 4294901760
    %v2177 = vsub.f32 %v154, %v2176
    %v2178 = vand.u32 %v2177, 4294901760
    %2179 = vmatprep.subr.mxu0 %v2178
    %v2180 = vand.u32 %v153, 4294901760
    %v2181 = vsub.f32 %v153, %v2180
    %v2182 = vand.u32 %v2181, 4294901760
    %2183 = vmatpush1.msra.mxu0 %v2182
    %2184 = vmatprep.subr.mxu0 0.0
    %2185 = vmatpush1.msra.mxu0 0.0
    %2186 = vmatprep.subr.mxu0 0.0
    %2187 = vmatpush1.msra.mxu0 0.0
    %2188 = vmatprep.subr.mxu0 0.0
    %2189 = vmatpush1.msra.mxu0 0.0
    %2190 = vmatprep.subr.mxu0 0.0
    %2191 = vmatpush1.msra.mxu0 0.0
    %2192 = vmatprep.subr.mxu0 0.0
    %2193 = vmatpush1.msra.mxu0 0.0
    %2194 = vmatprep.subr.mxu0 0.0
    %2195 = vmatpush1.msra.mxu0 0.0
    %2196 = vmatprep.subr.mxu0 0.0
    %2197 = vmatpush1.msra.mxu0 0.0
    %2198 = vmatprep.subr.mxu0 0.0
    %2199 = vmatpush1.msra.mxu0 0.0
    %2200 = vmatprep.subr.mxu0 0.0
    %2201 = vmatpush1.msra.mxu0 0.0
    %2202 = vmatprep.subr.mxu0 0.0
    %2203 = vmatpush1.msra.mxu0 0.0
    %2204 = vmatprep.subr.mxu0 0.0
    %2205 = vmatpush1.msra.mxu0 0.0
    %2206 = vmatprep.subr.mxu0 0.0
    %2207 = vmatpush1.msra.mxu0 0.0
    %2208 = vmatprep.subr.mxu0 0.0
    %2209 = vmatpush1.msra.mxu0 0.0
    %2210 = vmatprep.subr.mxu0 0.0
    %2211 = vmatpush1.msra.mxu0 0.0
    %2212 = vmatprep.subr.mxu0 0.0
    %2213 = vmatpush1.msra.mxu0 0.0
    %2214 = vmatprep.subr.mxu0 0.0
    %2215 = vmatpush1.msra.mxu0 0.0
    %2216 = vmatprep.mubr.f32.mxu0 0.0
    %v2217 = vand.u32 %v1472, 4294901760
    %2218 = vmatmul.mubr.f32.gmra.mrb[0].mxu0 %v2217
    %v2219 = vpop.f32.mrb[0].mxu0
    %v2220 = vadd.f32 %v2052, %v2219
    %v2221 = vpop.f32.mrb[0].mxu0
    %v2222 = vadd.f32 %v2054, %v2221
    %2223 = vdwg.mxu0
    %v2224 = vand.u32 %v124, 4294901760
    %2225 = vmatprep.subr.mxu0 %v2224
    %v2226 = vand.u32 %v123, 4294901760
    %2227 = vmatpush1.msra.mxu0 %v2226
    %v2228 = vand.u32 %v126, 4294901760
    %2229 = vmatprep.subr.mxu0 %v2228
    %v2230 = vand.u32 %v125, 4294901760
    %2231 = vmatpush1.msra.mxu0 %v2230
    %v2232 = vand.u32 %v128, 4294901760
    %2233 = vmatprep.subr.mxu0 %v2232
    %v2234 = vand.u32 %v127, 4294901760
    %2235 = vmatpush1.msra.mxu0 %v2234
    %v2236 = vand.u32 %v130, 4294901760
    %2237 = vmatprep.subr.mxu0 %v2236
    %v2238 = vand.u32 %v129, 4294901760
    %2239 = vmatpush1.msra.mxu0 %v2238
    %v2240 = vand.u32 %v132, 4294901760
    %2241 = vmatprep.subr.mxu0 %v2240
    %v2242 = vand.u32 %v131, 4294901760
    %2243 = vmatpush1.msra.mxu0 %v2242
    %v2244 = vand.u32 %v134, 4294901760
    %2245 = vmatprep.subr.mxu0 %v2244
    %v2246 = vand.u32 %v133, 4294901760
    %2247 = vmatpush1.msra.mxu0 %v2246
    %v2248 = vand.u32 %v136, 4294901760
    %2249 = vmatprep.subr.mxu0 %v2248
    %v2250 = vand.u32 %v135, 4294901760
    %2251 = vmatpush1.msra.mxu0 %v2250
    %v2252 = vand.u32 %v138, 4294901760
    %2253 = vmatprep.subr.mxu0 %v2252
    %v2254 = vand.u32 %v137, 4294901760
    %2255 = vmatpush1.msra.mxu0 %v2254
    %v2256 = vand.u32 %v140, 4294901760
    %2257 = vmatprep.subr.mxu0 %v2256
    %v2258 = vand.u32 %v139, 4294901760
    %2259 = vmatpush1.msra.mxu0 %v2258
    %v2260 = vand.u32 %v142, 4294901760
    %2261 = vmatprep.subr.mxu0 %v2260
    %v2262 = vand.u32 %v141, 4294901760
    %2263 = vmatpush1.msra.mxu0 %v2262
    %v2264 = vand.u32 %v144, 4294901760
    %2265 = vmatprep.subr.mxu0 %v2264
    %v2266 = vand.u32 %v143, 4294901760
    %2267 = vmatpush1.msra.mxu0 %v2266
    %v2268 = vand.u32 %v146, 4294901760
    %2269 = vmatprep.subr.mxu0 %v2268
    %v2270 = vand.u32 %v145, 4294901760
    %2271 = vmatpush1.msra.mxu0 %v2270
    %v2272 = vand.u32 %v148, 4294901760
    %2273 = vmatprep.subr.mxu0 %v2272
    %v2274 = vand.u32 %v147, 4294901760
    %2275 = vmatpush1.msra.mxu0 %v2274
    %v2276 = vand.u32 %v150, 4294901760
    %2277 = vmatprep.subr.mxu0 %v2276
    %v2278 = vand.u32 %v149, 4294901760
    %2279 = vmatpush1.msra.mxu0 %v2278
    %v2280 = vand.u32 %v152, 4294901760
    %2281 = vmatprep.subr.mxu0 %v2280
    %v2282 = vand.u32 %v151, 4294901760
    %2283 = vmatpush1.msra.mxu0 %v2282
    %v2284 = vand.u32 %v154, 4294901760
    %2285 = vmatprep.subr.mxu0 %v2284
    %v2286 = vand.u32 %v153, 4294901760
    %2287 = vmatpush1.msra.mxu0 %v2286
    %2288 = vmatprep.subr.mxu0 0.0
    %2289 = vmatpush1.msra.mxu0 0.0
    %2290 = vmatprep.subr.mxu0 0.0
    %2291 = vmatpush1.msra.mxu0 0.0
    %2292 = vmatprep.subr.mxu0 0.0
    %2293 = vmatpush1.msra.mxu0 0.0
    %2294 = vmatprep.subr.mxu0 0.0
    %2295 = vmatpush1.msra.mxu0 0.0
    %2296 = vmatprep.subr.mxu0 0.0
    %2297 = vmatpush1.msra.mxu0 0.0
    %2298 = vmatprep.subr.mxu0 0.0
    %2299 = vmatpush1.msra.mxu0 0.0
    %2300 = vmatprep.subr.mxu0 0.0
    %2301 = vmatpush1.msra.mxu0 0.0
    %2302 = vmatprep.subr.mxu0 0.0
    %2303 = vmatpush1.msra.mxu0 0.0
    %2304 = vmatprep.subr.mxu0 0.0
    %2305 = vmatpush1.msra.mxu0 0.0
    %2306 = vmatprep.subr.mxu0 0.0
    %2307 = vmatpush1.msra.mxu0 0.0
    %2308 = vmatprep.subr.mxu0 0.0
    %2309 = vmatpush1.msra.mxu0 0.0
    %2310 = vmatprep.subr.mxu0 0.0
    %2311 = vmatpush1.msra.mxu0 0.0
    %2312 = vmatprep.subr.mxu0 0.0
    %2313 = vmatpush1.msra.mxu0 0.0
    %2314 = vmatprep.subr.mxu0 0.0
    %2315 = vmatpush1.msra.mxu0 0.0
    %2316 = vmatprep.subr.mxu0 0.0
    %2317 = vmatpush1.msra.mxu0 0.0
    %2318 = vmatprep.subr.mxu0 0.0
    %2319 = vmatpush1.msra.mxu0 0.0
    %2320 = vmatprep.mubr.f32.mxu0 0.0
    %v2321 = vand.u32 %v1472, 4294901760
    %2322 = vmatmul.mubr.f32.gmra.mrb[0].mxu0 %v2321
    %v2323 = vpop.f32.mrb[0].mxu0
    %v2324 = vadd.f32 %v2220, %v2323
    %v2325 = vpop.f32.mrb[0].mxu0
    %v2326 = vadd.f32 %v2222, %v2325
    %2327 = vdwg.mxu0
    %2328 = vst [vmem:[#allocation11 + $0x10] sm:$0xff] %v2324
    %2329 = vst [vmem:[#allocation11 + $0x18] sm:$0xff] %v2326
    %s2330 = scalar_lea.vmem [#allocation2], 16
    %v2331 = vld [vmem:[%s2330] sm:$0xff]
    %v2332 = vld [vmem:[%s2330 + $0x8] sm:$0xff]
    %s2333 = scalar_lea.vmem [#allocation11], 32
    %2334 = vst [vmem:[%s2333] sm:$0xff] %v2331
    %2335 = vst [vmem:[%s2333 + $0x8] sm:$0xff] %v2332
    %2336 = vmatprep.subr.mxu0 0.0
    %v2337 = vand.u32 %v88, 4294901760
    %2338 = vmatpush1.msra.mxu0 %v2337
    %2339 = vmatprep.subr.mxu0 0.0
    %v2340 = vand.u32 %v89, 4294901760
    %2341 = vmatpush1.msra.mxu0 %v2340
    %2342 = vmatprep.subr.mxu0 0.0
    %v2343 = vand.u32 %v90, 4294901760
    %2344 = vmatpush1.msra.mxu0 %v2343
    %2345 = vmatprep.subr.mxu0 0.0
    %v2346 = vand.u32 %v91, 4294901760
    %2347 = vmatpush1.msra.mxu0 %v2346
    %2348 = vmatprep.subr.mxu0 0.0
    %v2349 = vand.u32 %v92, 4294901760
    %2350 = vmatpush1.msra.mxu0 %v2349
    %2351 = vmatprep.subr.mxu0 0.0
    %v2352 = vand.u32 %v93, 4294901760
    %2353 = vmatpush1.msra.mxu0 %v2352
    %2354 = vmatprep.subr.mxu0 0.0
    %v2355 = vand.u32 %v94, 4294901760
    %2356 = vmatpush1.msra.mxu0 %v2355
    %2357 = vmatprep.subr.mxu0 0.0
    %v2358 = vand.u32 %v95, 4294901760
    %2359 = vmatpush1.msra.mxu0 %v2358
    %2360 = vmatprep.subr.mxu0 0.0
    %v2361 = vand.u32 %v96, 4294901760
    %2362 = vmatpush1.msra.mxu0 %v2361
    %2363 = vmatprep.subr.mxu0 0.0
    %v2364 = vand.u32 %v97, 4294901760
    %2365 = vmatpush1.msra.mxu0 %v2364
    %2366 = vmatprep.subr.mxu0 0.0
    %v2367 = vand.u32 %v98, 4294901760
    %2368 = vmatpush1.msra.mxu0 %v2367
    %2369 = vmatprep.subr.mxu0 0.0
    %v2370 = vand.u32 %v99, 4294901760
    %2371 = vmatpush1.msra.mxu0 %v2370
    %2372 = vmatprep.subr.mxu0 0.0
    %v2373 = vand.u32 %v100, 4294901760
    %2374 = vmatpush1.msra.mxu0 %v2373
    %2375 = vmatprep.subr.mxu0 0.0
    %v2376 = vand.u32 %v101, 4294901760
    %2377 = vmatpush1.msra.mxu0 %v2376
    %2378 = vmatprep.subr.mxu0 0.0
    %v2379 = vand.u32 %v102, 4294901760
    %2380 = vmatpush1.msra.mxu0 %v2379
    %2381 = vmatprep.subr.mxu0 0.0
    %v2382 = vand.u32 %v103, 4294901760
    %2383 = vmatpush1.msra.mxu0 %v2382
    %2384 = vmatprep.subr.mxu0 0.0
    %v2385 = vand.u32 %v104, 4294901760
    %2386 = vmatpush1.msra.mxu0 %v2385
    %2387 = vmatprep.subr.mxu0 0.0
    %v2388 = vand.u32 %v105, 4294901760
    %2389 = vmatpush1.msra.mxu0 %v2388
    %2390 = vmatprep.subr.mxu0 0.0
    %v2391 = vand.u32 %v106, 4294901760
    %2392 = vmatpush1.msra.mxu0 %v2391
    %2393 = vmatprep.subr.mxu0 0.0
    %v2394 = vand.u32 %v107, 4294901760
    %2395 = vmatpush1.msra.mxu0 %v2394
    %2396 = vmatprep.subr.mxu0 0.0
    %v2397 = vand.u32 %v108, 4294901760
    %2398 = vmatpush1.msra.mxu0 %v2397
    %2399 = vmatprep.subr.mxu0 0.0
    %v2400 = vand.u32 %v109, 4294901760
    %2401 = vmatpush1.msra.mxu0 %v2400
    %2402 = vmatprep.subr.mxu0 0.0
    %v2403 = vand.u32 %v110, 4294901760
    %2404 = vmatpush1.msra.mxu0 %v2403
    %2405 = vmatprep.subr.mxu0 0.0
    %v2406 = vand.u32 %v111, 4294901760
    %2407 = vmatpush1.msra.mxu0 %v2406
    %2408 = vmatprep.subr.mxu0 0.0
    %v2409 = vand.u32 %v112, 4294901760
    %2410 = vmatpush1.msra.mxu0 %v2409
    %2411 = vmatprep.subr.mxu0 0.0
    %v2412 = vand.u32 %v113, 4294901760
    %2413 = vmatpush1.msra.mxu0 %v2412
    %2414 = vmatprep.subr.mxu0 0.0
    %v2415 = vand.u32 %v114, 4294901760
    %2416 = vmatpush1.msra.mxu0 %v2415
    %2417 = vmatprep.subr.mxu0 0.0
    %v2418 = vand.u32 %v115, 4294901760
    %2419 = vmatpush1.msra.mxu0 %v2418
    %2420 = vmatprep.subr.mxu0 0.0
    %v2421 = vand.u32 %v116, 4294901760
    %2422 = vmatpush1.msra.mxu0 %v2421
    %2423 = vmatprep.subr.mxu0 0.0
    %v2424 = vand.u32 %v117, 4294901760
    %2425 = vmatpush1.msra.mxu0 %v2424
    %2426 = vmatprep.subr.mxu0 0.0
    %v2427 = vand.u32 %v118, 4294901760
    %2428 = vmatpush1.msra.mxu0 %v2427
    %2429 = vmatprep.subr.mxu0 0.0
    %v2430 = vand.u32 %v119, 4294901760
    %2431 = vmatpush1.msra.mxu0 %v2430
    %v2432 = vand.u32 %v2332, 4294901760
    %v2433 = vsub.f32 %v2332, %v2432
    %v2434 = vand.u32 %v2433, 4294901760
    %v2435 = vsub.f32 %v2433, %v2434
    %v2436 = vand.u32 %v2435, 4294901760
    %2437 = vmatprep.mubr.f32.mxu0 %v2436
    %v2438 = vand.u32 %v2331, 4294901760
    %v2439 = vsub.f32 %v2331, %v2438
    %v2440 = vand.u32 %v2439, 4294901760
    %v2441 = vsub.f32 %v2439, %v2440
    %v2442 = vand.u32 %v2441, 4294901760
    %2443 = vmatmul.mubr.f32.gmra.mrb[0].mxu0 %v2442
    %v2444 = vpop.f32.mrb[0].mxu0
    %v2445 = vadd.f32 0.0, %v2444
    %v2446 = vpop.f32.mrb[0].mxu0
    %2447 = vdwg.mxu0
    %2448 = vmatprep.subr.mxu0 0.0
    %v2449 = vand.u32 %v88, 4294901760
    %v2450 = vsub.f32 %v88, %v2449
    %v2451 = vand.u32 %v2450, 4294901760
    %v2452 = vsub.f32 %v2450, %v2451
    %v2453 = vand.u32 %v2452, 4294901760
    %2454 = vmatpush1.msra.mxu0 %v2453
    %2455 = vmatprep.subr.mxu0 0.0
    %v2456 = vand.u32 %v89, 4294901760
    %v2457 = vsub.f32 %v89, %v2456
    %v2458 = vand.u32 %v2457, 4294901760
    %v2459 = vsub.f32 %v2457, %v2458
    %v2460 = vand.u32 %v2459, 4294901760
    %2461 = vmatpush1.msra.mxu0 %v2460
    %2462 = vmatprep.subr.mxu0 0.0
    %v2463 = vand.u32 %v90, 4294901760
    %v2464 = vsub.f32 %v90, %v2463
    %v2465 = vand.u32 %v2464, 4294901760
    %v2466 = vsub.f32 %v2464, %v2465
    %v2467 = vand.u32 %v2466, 4294901760
    %2468 = vmatpush1.msra.mxu0 %v2467
    %2469 = vmatprep.subr.mxu0 0.0
    %v2470 = vand.u32 %v91, 4294901760
    %v2471 = vsub.f32 %v91, %v2470
    %v2472 = vand.u32 %v2471, 4294901760
    %v2473 = vsub.f32 %v2471, %v2472
    %v2474 = vand.u32 %v2473, 4294901760
    %2475 = vmatpush1.msra.mxu0 %v2474
    %2476 = vmatprep.subr.mxu0 0.0
    %v2477 = vand.u32 %v92, 4294901760
    %v2478 = vsub.f32 %v92, %v2477
    %v2479 = vand.u32 %v2478, 4294901760
    %v2480 = vsub.f32 %v2478, %v2479
    %v2481 = vand.u32 %v2480, 4294901760
    %2482 = vmatpush1.msra.mxu0 %v2481
    %2483 = vmatprep.subr.mxu0 0.0
    %v2484 = vand.u32 %v93, 4294901760
    %v2485 = vsub.f32 %v93, %v2484
    %v2486 = vand.u32 %v2485, 4294901760
    %v2487 = vsub.f32 %v2485, %v2486
    %v2488 = vand.u32 %v2487, 4294901760
    %2489 = vmatpush1.msra.mxu0 %v2488
    %2490 = vmatprep.subr.mxu0 0.0
    %v2491 = vand.u32 %v94, 4294901760
    %v2492 = vsub.f32 %v94, %v2491
    %v2493 = vand.u32 %v2492, 4294901760
    %v2494 = vsub.f32 %v2492, %v2493
    %v2495 = vand.u32 %v2494, 4294901760
    %2496 = vmatpush1.msra.mxu0 %v2495
    %2497 = vmatprep.subr.mxu0 0.0
    %v2498 = vand.u32 %v95, 4294901760
    %v2499 = vsub.f32 %v95, %v2498
    %v2500 = vand.u32 %v2499, 4294901760
    %v2501 = vsub.f32 %v2499, %v2500
    %v2502 = vand.u32 %v2501, 4294901760
    %2503 = vmatpush1.msra.mxu0 %v2502
    %2504 = vmatprep.subr.mxu0 0.0
    %v2505 = vand.u32 %v96, 4294901760
    %v2506 = vsub.f32 %v96, %v2505
    %v2507 = vand.u32 %v2506, 4294901760
    %v2508 = vsub.f32 %v2506, %v2507
    %v2509 = vand.u32 %v2508, 4294901760
    %2510 = vmatpush1.msra.mxu0 %v2509
    %2511 = vmatprep.subr.mxu0 0.0
    %v2512 = vand.u32 %v97, 4294901760
    %v2513 = vsub.f32 %v97, %v2512
    %v2514 = vand.u32 %v2513, 4294901760
    %v2515 = vsub.f32 %v2513, %v2514
    %v2516 = vand.u32 %v2515, 4294901760
    %2517 = vmatpush1.msra.mxu0 %v2516
    %2518 = vmatprep.subr.mxu0 0.0
    %v2519 = vand.u32 %v98, 4294901760
    %v2520 = vsub.f32 %v98, %v2519
    %v2521 = vand.u32 %v2520, 4294901760
    %v2522 = vsub.f32 %v2520, %v2521
    %v2523 = vand.u32 %v2522, 4294901760
    %2524 = vmatpush1.msra.mxu0 %v2523
    %2525 = vmatprep.subr.mxu0 0.0
    %v2526 = vand.u32 %v99, 4294901760
    %v2527 = vsub.f32 %v99, %v2526
    %v2528 = vand.u32 %v2527, 4294901760
    %v2529 = vsub.f32 %v2527, %v2528
    %v2530 = vand.u32 %v2529, 4294901760
    %2531 = vmatpush1.msra.mxu0 %v2530
    %2532 = vmatprep.subr.mxu0 0.0
    %v2533 = vand.u32 %v100, 4294901760
    %v2534 = vsub.f32 %v100, %v2533
    %v2535 = vand.u32 %v2534, 4294901760
    %v2536 = vsub.f32 %v2534, %v2535
    %v2537 = vand.u32 %v2536, 4294901760
    %2538 = vmatpush1.msra.mxu0 %v2537
    %2539 = vmatprep.subr.mxu0 0.0
    %v2540 = vand.u32 %v101, 4294901760
    %v2541 = vsub.f32 %v101, %v2540
    %v2542 = vand.u32 %v2541, 4294901760
    %v2543 = vsub.f32 %v2541, %v2542
    %v2544 = vand.u32 %v2543, 4294901760
    %2545 = vmatpush1.msra.mxu0 %v2544
    %2546 = vmatprep.subr.mxu0 0.0
    %v2547 = vand.u32 %v102, 4294901760
    %v2548 = vsub.f32 %v102, %v2547
    %v2549 = vand.u32 %v2548, 4294901760
    %v2550 = vsub.f32 %v2548, %v2549
    %v2551 = vand.u32 %v2550, 4294901760
    %2552 = vmatpush1.msra.mxu0 %v2551
    %2553 = vmatprep.subr.mxu0 0.0
    %v2554 = vand.u32 %v103, 4294901760
    %v2555 = vsub.f32 %v103, %v2554
    %v2556 = vand.u32 %v2555, 4294901760
    %v2557 = vsub.f32 %v2555, %v2556
    %v2558 = vand.u32 %v2557, 4294901760
    %2559 = vmatpush1.msra.mxu0 %v2558
    %2560 = vmatprep.subr.mxu0 0.0
    %v2561 = vand.u32 %v104, 4294901760
    %v2562 = vsub.f32 %v104, %v2561
    %v2563 = vand.u32 %v2562, 4294901760
    %v2564 = vsub.f32 %v2562, %v2563
    %v2565 = vand.u32 %v2564, 4294901760
    %2566 = vmatpush1.msra.mxu0 %v2565
    %2567 = vmatprep.subr.mxu0 0.0
    %v2568 = vand.u32 %v105, 4294901760
    %v2569 = vsub.f32 %v105, %v2568
    %v2570 = vand.u32 %v2569, 4294901760
    %v2571 = vsub.f32 %v2569, %v2570
    %v2572 = vand.u32 %v2571, 4294901760
    %2573 = vmatpush1.msra.mxu0 %v2572
    %2574 = vmatprep.subr.mxu0 0.0
    %v2575 = vand.u32 %v106, 4294901760
    %v2576 = vsub.f32 %v106, %v2575
    %v2577 = vand.u32 %v2576, 4294901760
    %v2578 = vsub.f32 %v2576, %v2577
    %v2579 = vand.u32 %v2578, 4294901760
    %2580 = vmatpush1.msra.mxu0 %v2579
    %2581 = vmatprep.subr.mxu0 0.0
    %v2582 = vand.u32 %v107, 4294901760
    %v2583 = vsub.f32 %v107, %v2582
    %v2584 = vand.u32 %v2583, 4294901760
    %v2585 = vsub.f32 %v2583, %v2584
    %v2586 = vand.u32 %v2585, 4294901760
    %2587 = vmatpush1.msra.mxu0 %v2586
    %2588 = vmatprep.subr.mxu0 0.0
    %v2589 = vand.u32 %v108, 4294901760
    %v2590 = vsub.f32 %v108, %v2589
    %v2591 = vand.u32 %v2590, 4294901760
    %v2592 = vsub.f32 %v2590, %v2591
    %v2593 = vand.u32 %v2592, 4294901760
    %2594 = vmatpush1.msra.mxu0 %v2593
    %2595 = vmatprep.subr.mxu0 0.0
    %v2596 = vand.u32 %v109, 4294901760
    %v2597 = vsub.f32 %v109, %v2596
    %v2598 = vand.u32 %v2597, 4294901760
    %v2599 = vsub.f32 %v2597, %v2598
    %v2600 = vand.u32 %v2599, 4294901760
    %2601 = vmatpush1.msra.mxu0 %v2600
    %2602 = vmatprep.subr.mxu0 0.0
    %v2603 = vand.u32 %v110, 4294901760
    %v2604 = vsub.f32 %v110, %v2603
    %v2605 = vand.u32 %v2604, 4294901760
    %v2606 = vsub.f32 %v2604, %v2605
    %v2607 = vand.u32 %v2606, 4294901760
    %2608 = vmatpush1.msra.mxu0 %v2607
    %2609 = vmatprep.subr.mxu0 0.0
    %v2610 = vand.u32 %v111, 4294901760
    %v2611 = vsub.f32 %v111, %v2610
    %v2612 = vand.u32 %v2611, 4294901760
    %v2613 = vsub.f32 %v2611, %v2612
    %v2614 = vand.u32 %v2613, 4294901760
    %2615 = vmatpush1.msra.mxu0 %v2614
    %2616 = vmatprep.subr.mxu0 0.0
    %v2617 = vand.u32 %v112, 4294901760
    %v2618 = vsub.f32 %v112, %v2617
    %v2619 = vand.u32 %v2618, 4294901760
    %v2620 = vsub.f32 %v2618, %v2619
    %v2621 = vand.u32 %v2620, 4294901760
    %2622 = vmatpush1.msra.mxu0 %v2621
    %2623 = vmatprep.subr.mxu0 0.0
    %v2624 = vand.u32 %v113, 4294901760
    %v2625 = vsub.f32 %v113, %v2624
    %v2626 = vand.u32 %v2625, 4294901760
    %v2627 = vsub.f32 %v2625, %v2626
    %v2628 = vand.u32 %v2627, 4294901760
    %2629 = vmatpush1.msra.mxu0 %v2628
    %2630 = vmatprep.subr.mxu0 0.0
    %v2631 = vand.u32 %v114, 4294901760
    %v2632 = vsub.f32 %v114, %v2631
    %v2633 = vand.u32 %v2632, 4294901760
    %v2634 = vsub.f32 %v2632, %v2633
    %v2635 = vand.u32 %v2634, 4294901760
    %2636 = vmatpush1.msra.mxu0 %v2635
    %2637 = vmatprep.subr.mxu0 0.0
    %v2638 = vand.u32 %v115, 4294901760
    %v2639 = vsub.f32 %v115, %v2638
    %v2640 = vand.u32 %v2639, 4294901760
    %v2641 = vsub.f32 %v2639, %v2640
    %v2642 = vand.u32 %v2641, 4294901760
    %2643 = vmatpush1.msra.mxu0 %v2642
    %2644 = vmatprep.subr.mxu0 0.0
    %v2645 = vand.u32 %v116, 4294901760
    %v2646 = vsub.f32 %v116, %v2645
    %v2647 = vand.u32 %v2646, 4294901760
    %v2648 = vsub.f32 %v2646, %v2647
    %v2649 = vand.u32 %v2648, 4294901760
    %2650 = vmatpush1.msra.mxu0 %v2649
    %2651 = vmatprep.subr.mxu0 0.0
    %v2652 = vand.u32 %v117, 4294901760
    %v2653 = vsub.f32 %v117, %v2652
    %v2654 = vand.u32 %v2653, 4294901760
    %v2655 = vsub.f32 %v2653, %v2654
    %v2656 = vand.u32 %v2655, 4294901760
    %2657 = vmatpush1.msra.mxu0 %v2656
    %2658 = vmatprep.subr.mxu0 0.0
    %v2659 = vand.u32 %v118, 4294901760
    %v2660 = vsub.f32 %v118, %v2659
    %v2661 = vand.u32 %v2660, 4294901760
    %v2662 = vsub.f32 %v2660, %v2661
    %v2663 = vand.u32 %v2662, 4294901760
    %2664 = vmatpush1.msra.mxu0 %v2663
    %2665 = vmatprep.subr.mxu0 0.0
    %v2666 = vand.u32 %v119, 4294901760
    %v2667 = vsub.f32 %v119, %v2666
    %v2668 = vand.u32 %v2667, 4294901760
    %v2669 = vsub.f32 %v2667, %v2668
    %v2670 = vand.u32 %v2669, 4294901760
    %2671 = vmatpush1.msra.mxu0 %v2670
    %v2672 = vand.u32 %v2332, 4294901760
    %2673 = vmatprep.mubr.f32.mxu0 %v2672
    %v2674 = vand.u32 %v2331, 4294901760
    %2675 = vmatmul.mubr.f32.gmra.mrb[0].mxu0 %v2674
    %v2676 = vpop.f32.mrb[0].mxu0
    %v2677 = vadd.f32 %v2445, %v2676
    %v2678 = vpop.f32.mrb[0].mxu0
    %2679 = vdwg.mxu0
    %2680 = vmatprep.subr.mxu0 0.0
    %v2681 = vand.u32 %v88, 4294901760
    %v2682 = vsub.f32 %v88, %v2681
    %2683 = vmatpush1.msra.mxu0 %v2682
    %2684 = vmatprep.subr.mxu0 0.0
    %v2685 = vand.u32 %v89, 4294901760
    %v2686 = vsub.f32 %v89, %v2685
    %2687 = vmatpush1.msra.mxu0 %v2686
    %2688 = vmatprep.subr.mxu0 0.0
    %v2689 = vand.u32 %v90, 4294901760
    %v2690 = vsub.f32 %v90, %v2689
    %2691 = vmatpush1.msra.mxu0 %v2690
    %2692 = vmatprep.subr.mxu0 0.0
    %v2693 = vand.u32 %v91, 4294901760
    %v2694 = vsub.f32 %v91, %v2693
    %2695 = vmatpush1.msra.mxu0 %v2694
    %2696 = vmatprep.subr.mxu0 0.0
    %v2697 = vand.u32 %v92, 4294901760
    %v2698 = vsub.f32 %v92, %v2697
    %2699 = vmatpush1.msra.mxu0 %v2698
    %2700 = vmatprep.subr.mxu0 0.0
    %v2701 = vand.u32 %v93, 4294901760
    %v2702 = vsub.f32 %v93, %v2701
    %2703 = vmatpush1.msra.mxu0 %v2702
    %2704 = vmatprep.subr.mxu0 0.0
    %v2705 = vand.u32 %v94, 4294901760
    %v2706 = vsub.f32 %v94, %v2705
    %2707 = vmatpush1.msra.mxu0 %v2706
    %2708 = vmatprep.subr.mxu0 0.0
    %v2709 = vand.u32 %v95, 4294901760
    %v2710 = vsub.f32 %v95, %v2709
    %2711 = vmatpush1.msra.mxu0 %v2710
    %2712 = vmatprep.subr.mxu0 0.0
    %v2713 = vand.u32 %v96, 4294901760
    %v2714 = vsub.f32 %v96, %v2713
    %2715 = vmatpush1.msra.mxu0 %v2714
    %2716 = vmatprep.subr.mxu0 0.0
    %v2717 = vand.u32 %v97, 4294901760
    %v2718 = vsub.f32 %v97, %v2717
    %2719 = vmatpush1.msra.mxu0 %v2718
    %2720 = vmatprep.subr.mxu0 0.0
    %v2721 = vand.u32 %v98, 4294901760
    %v2722 = vsub.f32 %v98, %v2721
    %2723 = vmatpush1.msra.mxu0 %v2722
    %2724 = vmatprep.subr.mxu0 0.0
    %v2725 = vand.u32 %v99, 4294901760
    %v2726 = vsub.f32 %v99, %v2725
    %2727 = vmatpush1.msra.mxu0 %v2726
    %2728 = vmatprep.subr.mxu0 0.0
    %v2729 = vand.u32 %v100, 4294901760
    %v2730 = vsub.f32 %v100, %v2729
    %2731 = vmatpush1.msra.mxu0 %v2730
    %2732 = vmatprep.subr.mxu0 0.0
    %v2733 = vand.u32 %v101, 4294901760
    %v2734 = vsub.f32 %v101, %v2733
    %2735 = vmatpush1.msra.mxu0 %v2734
    %2736 = vmatprep.subr.mxu0 0.0
    %v2737 = vand.u32 %v102, 4294901760
    %v2738 = vsub.f32 %v102, %v2737
    %2739 = vmatpush1.msra.mxu0 %v2738
    %2740 = vmatprep.subr.mxu0 0.0
    %v2741 = vand.u32 %v103, 4294901760
    %v2742 = vsub.f32 %v103, %v2741
    %2743 = vmatpush1.msra.mxu0 %v2742
    %2744 = vmatprep.subr.mxu0 0.0
    %v2745 = vand.u32 %v104, 4294901760
    %v2746 = vsub.f32 %v104, %v2745
    %2747 = vmatpush1.msra.mxu0 %v2746
    %2748 = vmatprep.subr.mxu0 0.0
    %v2749 = vand.u32 %v105, 4294901760
    %v2750 = vsub.f32 %v105, %v2749
    %2751 = vmatpush1.msra.mxu0 %v2750
    %2752 = vmatprep.subr.mxu0 0.0
    %v2753 = vand.u32 %v106, 4294901760
    %v2754 = vsub.f32 %v106, %v2753
    %2755 = vmatpush1.msra.mxu0 %v2754
    %2756 = vmatprep.subr.mxu0 0.0
    %v2757 = vand.u32 %v107, 4294901760
    %v2758 = vsub.f32 %v107, %v2757
    %2759 = vmatpush1.msra.mxu0 %v2758
    %2760 = vmatprep.subr.mxu0 0.0
    %v2761 = vand.u32 %v108, 4294901760
    %v2762 = vsub.f32 %v108, %v2761
    %2763 = vmatpush1.msra.mxu0 %v2762
    %2764 = vmatprep.subr.mxu0 0.0
    %v2765 = vand.u32 %v109, 4294901760
    %v2766 = vsub.f32 %v109, %v2765
    %2767 = vmatpush1.msra.mxu0 %v2766
    %2768 = vmatprep.subr.mxu0 0.0
    %v2769 = vand.u32 %v110, 4294901760
    %v2770 = vsub.f32 %v110, %v2769
    %2771 = vmatpush1.msra.mxu0 %v2770
    %2772 = vmatprep.subr.mxu0 0.0
    %v2773 = vand.u32 %v111, 4294901760
    %v2774 = vsub.f32 %v111, %v2773
    %2775 = vmatpush1.msra.mxu0 %v2774
    %2776 = vmatprep.subr.mxu0 0.0
    %v2777 = vand.u32 %v112, 4294901760
    %v2778 = vsub.f32 %v112, %v2777
    %2779 = vmatpush1.msra.mxu0 %v2778
    %2780 = vmatprep.subr.mxu0 0.0
    %v2781 = vand.u32 %v113, 4294901760
    %v2782 = vsub.f32 %v113, %v2781
    %2783 = vmatpush1.msra.mxu0 %v2782
    %2784 = vmatprep.subr.mxu0 0.0
    %v2785 = vand.u32 %v114, 4294901760
    %v2786 = vsub.f32 %v114, %v2785
    %2787 = vmatpush1.msra.mxu0 %v2786
    %2788 = vmatprep.subr.mxu0 0.0
    %v2789 = vand.u32 %v115, 4294901760
    %v2790 = vsub.f32 %v115, %v2789
    %2791 = vmatpush1.msra.mxu0 %v2790
    %2792 = vmatprep.subr.mxu0 0.0
    %v2793 = vand.u32 %v116, 4294901760
    %v2794 = vsub.f32 %v116, %v2793
    %2795 = vmatpush1.msra.mxu0 %v2794
    %2796 = vmatprep.subr.mxu0 0.0
    %v2797 = vand.u32 %v117, 4294901760
    %v2798 = vsub.f32 %v117, %v2797
    %2799 = vmatpush1.msra.mxu0 %v2798
    %2800 = vmatprep.subr.mxu0 0.0
    %v2801 = vand.u32 %v118, 4294901760
    %v2802 = vsub.f32 %v118, %v2801
    %2803 = vmatpush1.msra.mxu0 %v2802
    %2804 = vmatprep.subr.mxu0 0.0
    %v2805 = vand.u32 %v119, 4294901760
    %v2806 = vsub.f32 %v119, %v2805
    %2807 = vmatpush1.msra.mxu0 %v2806
    %v2808 = vand.u32 %v2332, 4294901760
    %v2809 = vsub.f32 %v2332, %v2808
    %2810 = vmatprep.mubr.f32.mxu0 %v2809
    %v2811 = vand.u32 %v2331, 4294901760
    %v2812 = vsub.f32 %v2331, %v2811
    %2813 = vmatmul.mubr.f32.gmra.mrb[0].mxu0 %v2812
    %v2814 = vpop.f32.mrb[0].mxu0
    %v2815 = vadd.f32 %v2677, %v2814
    %v2816 = vpop.f32.mrb[0].mxu0
    %2817 = vdwg.mxu0
    %2818 = vmatprep.subr.mxu0 0.0
    %v2819 = vand.u32 %v88, 4294901760
    %2820 = vmatpush1.msra.mxu0 %v2819
    %2821 = vmatprep.subr.mxu0 0.0
    %v2822 = vand.u32 %v89, 4294901760
    %2823 = vmatpush1.msra.mxu0 %v2822
    %2824 = vmatprep.subr.mxu0 0.0
    %v2825 = vand.u32 %v90, 4294901760
    %2826 = vmatpush1.msra.mxu0 %v2825
    %2827 = vmatprep.subr.mxu0 0.0
    %v2828 = vand.u32 %v91, 4294901760
    %2829 = vmatpush1.msra.mxu0 %v2828
    %2830 = vmatprep.subr.mxu0 0.0
    %v2831 = vand.u32 %v92, 4294901760
    %2832 = vmatpush1.msra.mxu0 %v2831
    %2833 = vmatprep.subr.mxu0 0.0
    %v2834 = vand.u32 %v93, 4294901760
    %2835 = vmatpush1.msra.mxu0 %v2834
    %2836 = vmatprep.subr.mxu0 0.0
    %v2837 = vand.u32 %v94, 4294901760
    %2838 = vmatpush1.msra.mxu0 %v2837
    %2839 = vmatprep.subr.mxu0 0.0
    %v2840 = vand.u32 %v95, 4294901760
    %2841 = vmatpush1.msra.mxu0 %v2840
    %2842 = vmatprep.subr.mxu0 0.0
    %v2843 = vand.u32 %v96, 4294901760
    %2844 = vmatpush1.msra.mxu0 %v2843
    %2845 = vmatprep.subr.mxu0 0.0
    %v2846 = vand.u32 %v97, 4294901760
    %2847 = vmatpush1.msra.mxu0 %v2846
    %2848 = vmatprep.subr.mxu0 0.0
    %v2849 = vand.u32 %v98, 4294901760
    %2850 = vmatpush1.msra.mxu0 %v2849
    %2851 = vmatprep.subr.mxu0 0.0
    %v2852 = vand.u32 %v99, 4294901760
    %2853 = vmatpush1.msra.mxu0 %v2852
    %2854 = vmatprep.subr.mxu0 0.0
    %v2855 = vand.u32 %v100, 4294901760
    %2856 = vmatpush1.msra.mxu0 %v2855
    %2857 = vmatprep.subr.mxu0 0.0
    %v2858 = vand.u32 %v101, 4294901760
    %2859 = vmatpush1.msra.mxu0 %v2858
    %2860 = vmatprep.subr.mxu0 0.0
    %v2861 = vand.u32 %v102, 4294901760
    %2862 = vmatpush1.msra.mxu0 %v2861
    %2863 = vmatprep.subr.mxu0 0.0
    %v2864 = vand.u32 %v103, 4294901760
    %2865 = vmatpush1.msra.mxu0 %v2864
    %2866 = vmatprep.subr.mxu0 0.0
    %v2867 = vand.u32 %v104, 4294901760
    %2868 = vmatpush1.msra.mxu0 %v2867
    %2869 = vmatprep.subr.mxu0 0.0
    %v2870 = vand.u32 %v105, 4294901760
    %2871 = vmatpush1.msra.mxu0 %v2870
    %2872 = vmatprep.subr.mxu0 0.0
    %v2873 = vand.u32 %v106, 4294901760
    %2874 = vmatpush1.msra.mxu0 %v2873
    %2875 = vmatprep.subr.mxu0 0.0
    %v2876 = vand.u32 %v107, 4294901760
    %2877 = vmatpush1.msra.mxu0 %v2876
    %2878 = vmatprep.subr.mxu0 0.0
    %v2879 = vand.u32 %v108, 4294901760
    %2880 = vmatpush1.msra.mxu0 %v2879
    %2881 = vmatprep.subr.mxu0 0.0
    %v2882 = vand.u32 %v109, 4294901760
    %2883 = vmatpush1.msra.mxu0 %v2882
    %2884 = vmatprep.subr.mxu0 0.0
    %v2885 = vand.u32 %v110, 4294901760
    %2886 = vmatpush1.msra.mxu0 %v2885
    %2887 = vmatprep.subr.mxu0 0.0
    %v2888 = vand.u32 %v111, 4294901760
    %2889 = vmatpush1.msra.mxu0 %v2888
    %2890 = vmatprep.subr.mxu0 0.0
    %v2891 = vand.u32 %v112, 4294901760
    %2892 = vmatpush1.msra.mxu0 %v2891
    %2893 = vmatprep.subr.mxu0 0.0
    %v2894 = vand.u32 %v113, 4294901760
    %2895 = vmatpush1.msra.mxu0 %v2894
    %2896 = vmatprep.subr.mxu0 0.0
    %v2897 = vand.u32 %v114, 4294901760
    %2898 = vmatpush1.msra.mxu0 %v2897
    %2899 = vmatprep.subr.mxu0 0.0
    %v2900 = vand.u32 %v115, 4294901760
    %2901 = vmatpush1.msra.mxu0 %v2900
    %2902 = vmatprep.subr.mxu0 0.0
    %v2903 = vand.u32 %v116, 4294901760
    %2904 = vmatpush1.msra.mxu0 %v2903
    %2905 = vmatprep.subr.mxu0 0.0
    %v2906 = vand.u32 %v117, 4294901760
    %2907 = vmatpush1.msra.mxu0 %v2906
    %2908 = vmatprep.subr.mxu0 0.0
    %v2909 = vand.u32 %v118, 4294901760
    %2910 = vmatpush1.msra.mxu0 %v2909
    %2911 = vmatprep.subr.mxu0 0.0
    %v2912 = vand.u32 %v119, 4294901760
    %2913 = vmatpush1.msra.mxu0 %v2912
    %v2914 = vand.u32 %v2332, 4294901760
    %v2915 = vsub.f32 %v2332, %v2914
    %v2916 = vand.u32 %v2915, 4294901760
    %2917 = vmatprep.mubr.f32.mxu0 %v2916
    %v2918 = vand.u32 %v2331, 4294901760
    %v2919 = vsub.f32 %v2331, %v2918
    %v2920 = vand.u32 %v2919, 4294901760
    %2921 = vmatmul.mubr.f32.gmra.mrb[0].mxu0 %v2920
    %v2922 = vpop.f32.mrb[0].mxu0
    %v2923 = vadd.f32 %v2815, %v2922
    %v2924 = vpop.f32.mrb[0].mxu0
    %2925 = vdwg.mxu0
    %2926 = vmatprep.subr.mxu0 0.0
    %v2927 = vand.u32 %v88, 4294901760
    %v2928 = vsub.f32 %v88, %v2927
    %v2929 = vand.u32 %v2928, 4294901760
    %2930 = vmatpush1.msra.mxu0 %v2929
    %2931 = vmatprep.subr.mxu0 0.0
    %v2932 = vand.u32 %v89, 4294901760
    %v2933 = vsub.f32 %v89, %v2932
    %v2934 = vand.u32 %v2933, 4294901760
    %2935 = vmatpush1.msra.mxu0 %v2934
    %2936 = vmatprep.subr.mxu0 0.0
    %v2937 = vand.u32 %v90, 4294901760
    %v2938 = vsub.f32 %v90, %v2937
    %v2939 = vand.u32 %v2938, 4294901760
    %2940 = vmatpush1.msra.mxu0 %v2939
    %2941 = vmatprep.subr.mxu0 0.0
    %v2942 = vand.u32 %v91, 4294901760
    %v2943 = vsub.f32 %v91, %v2942
    %v2944 = vand.u32 %v2943, 4294901760
    %2945 = vmatpush1.msra.mxu0 %v2944
    %2946 = vmatprep.subr.mxu0 0.0
    %v2947 = vand.u32 %v92, 4294901760
    %v2948 = vsub.f32 %v92, %v2947
    %v2949 = vand.u32 %v2948, 4294901760
    %2950 = vmatpush1.msra.mxu0 %v2949
    %2951 = vmatprep.subr.mxu0 0.0
    %v2952 = vand.u32 %v93, 4294901760
    %v2953 = vsub.f32 %v93, %v2952
    %v2954 = vand.u32 %v2953, 4294901760
    %2955 = vmatpush1.msra.mxu0 %v2954
    %2956 = vmatprep.subr.mxu0 0.0
    %v2957 = vand.u32 %v94, 4294901760
    %v2958 = vsub.f32 %v94, %v2957
    %v2959 = vand.u32 %v2958, 4294901760
    %2960 = vmatpush1.msra.mxu0 %v2959
    %2961 = vmatprep.subr.mxu0 0.0
    %v2962 = vand.u32 %v95, 4294901760
    %v2963 = vsub.f32 %v95, %v2962
    %v2964 = vand.u32 %v2963, 4294901760
    %2965 = vmatpush1.msra.mxu0 %v2964
    %2966 = vmatprep.subr.mxu0 0.0
    %v2967 = vand.u32 %v96, 4294901760
    %v2968 = vsub.f32 %v96, %v2967
    %v2969 = vand.u32 %v2968, 4294901760
    %2970 = vmatpush1.msra.mxu0 %v2969
    %2971 = vmatprep.subr.mxu0 0.0
    %v2972 = vand.u32 %v97, 4294901760
    %v2973 = vsub.f32 %v97, %v2972
    %v2974 = vand.u32 %v2973, 4294901760
    %2975 = vmatpush1.msra.mxu0 %v2974
    %2976 = vmatprep.subr.mxu0 0.0
    %v2977 = vand.u32 %v98, 4294901760
    %v2978 = vsub.f32 %v98, %v2977
    %v2979 = vand.u32 %v2978, 4294901760
    %2980 = vmatpush1.msra.mxu0 %v2979
    %2981 = vmatprep.subr.mxu0 0.0
    %v2982 = vand.u32 %v99, 4294901760
    %v2983 = vsub.f32 %v99, %v2982
    %v2984 = vand.u32 %v2983, 4294901760
    %2985 = vmatpush1.msra.mxu0 %v2984
    %2986 = vmatprep.subr.mxu0 0.0
    %v2987 = vand.u32 %v100, 4294901760
    %v2988 = vsub.f32 %v100, %v2987
    %v2989 = vand.u32 %v2988, 4294901760
    %2990 = vmatpush1.msra.mxu0 %v2989
    %2991 = vmatprep.subr.mxu0 0.0
    %v2992 = vand.u32 %v101, 4294901760
    %v2993 = vsub.f32 %v101, %v2992
    %v2994 = vand.u32 %v2993, 4294901760
    %2995 = vmatpush1.msra.mxu0 %v2994
    %2996 = vmatprep.subr.mxu0 0.0
    %v2997 = vand.u32 %v102, 4294901760
    %v2998 = vsub.f32 %v102, %v2997
    %v2999 = vand.u32 %v2998, 4294901760
    %3000 = vmatpush1.msra.mxu0 %v2999
    %3001 = vmatprep.subr.mxu0 0.0
    %v3002 = vand.u32 %v103, 4294901760
    %v3003 = vsub.f32 %v103, %v3002
    %v3004 = vand.u32 %v3003, 4294901760
    %3005 = vmatpush1.msra.mxu0 %v3004
    %3006 = vmatprep.subr.mxu0 0.0
    %v3007 = vand.u32 %v104, 4294901760
    %v3008 = vsub.f32 %v104, %v3007
    %v3009 = vand.u32 %v3008, 4294901760
    %3010 = vmatpush1.msra.mxu0 %v3009
    %3011 = vmatprep.subr.mxu0 0.0
    %v3012 = vand.u32 %v105, 4294901760
    %v3013 = vsub.f32 %v105, %v3012
    %v3014 = vand.u32 %v3013, 4294901760
    %3015 = vmatpush1.msra.mxu0 %v3014
    %3016 = vmatprep.subr.mxu0 0.0
    %v3017 = vand.u32 %v106, 4294901760
    %v3018 = vsub.f32 %v106, %v3017
    %v3019 = vand.u32 %v3018, 4294901760
    %3020 = vmatpush1.msra.mxu0 %v3019
    %3021 = vmatprep.subr.mxu0 0.0
    %v3022 = vand.u32 %v107, 4294901760
    %v3023 = vsub.f32 %v107, %v3022
    %v3024 = vand.u32 %v3023, 4294901760
    %3025 = vmatpush1.msra.mxu0 %v3024
    %3026 = vmatprep.subr.mxu0 0.0
    %v3027 = vand.u32 %v108, 4294901760
    %v3028 = vsub.f32 %v108, %v3027
    %v3029 = vand.u32 %v3028, 4294901760
    %3030 = vmatpush1.msra.mxu0 %v3029
    %3031 = vmatprep.subr.mxu0 0.0
    %v3032 = vand.u32 %v109, 4294901760
    %v3033 = vsub.f32 %v109, %v3032
    %v3034 = vand.u32 %v3033, 4294901760
    %3035 = vmatpush1.msra.mxu0 %v3034
    %3036 = vmatprep.subr.mxu0 0.0
    %v3037 = vand.u32 %v110, 4294901760
    %v3038 = vsub.f32 %v110, %v3037
    %v3039 = vand.u32 %v3038, 4294901760
    %3040 = vmatpush1.msra.mxu0 %v3039
    %3041 = vmatprep.subr.mxu0 0.0
    %v3042 = vand.u32 %v111, 4294901760
    %v3043 = vsub.f32 %v111, %v3042
    %v3044 = vand.u32 %v3043, 4294901760
    %3045 = vmatpush1.msra.mxu0 %v3044
    %3046 = vmatprep.subr.mxu0 0.0
    %v3047 = vand.u32 %v112, 4294901760
    %v3048 = vsub.f32 %v112, %v3047
    %v3049 = vand.u32 %v3048, 4294901760
    %3050 = vmatpush1.msra.mxu0 %v3049
    %3051 = vmatprep.subr.mxu0 0.0
    %v3052 = vand.u32 %v113, 4294901760
    %v3053 = vsub.f32 %v113, %v3052
    %v3054 = vand.u32 %v3053, 4294901760
    %3055 = vmatpush1.msra.mxu0 %v3054
    %3056 = vmatprep.subr.mxu0 0.0
    %v3057 = vand.u32 %v114, 4294901760
    %v3058 = vsub.f32 %v114, %v3057
    %v3059 = vand.u32 %v3058, 4294901760
    %3060 = vmatpush1.msra.mxu0 %v3059
    %3061 = vmatprep.subr.mxu0 0.0
    %v3062 = vand.u32 %v115, 4294901760
    %v3063 = vsub.f32 %v115, %v3062
    %v3064 = vand.u32 %v3063, 4294901760
    %3065 = vmatpush1.msra.mxu0 %v3064
    %3066 = vmatprep.subr.mxu0 0.0
    %v3067 = vand.u32 %v116, 4294901760
    %v3068 = vsub.f32 %v116, %v3067
    %v3069 = vand.u32 %v3068, 4294901760
    %3070 = vmatpush1.msra.mxu0 %v3069
    %3071 = vmatprep.subr.mxu0 0.0
    %v3072 = vand.u32 %v117, 4294901760
    %v3073 = vsub.f32 %v117, %v3072
    %v3074 = vand.u32 %v3073, 4294901760
    %3075 = vmatpush1.msra.mxu0 %v3074
    %3076 = vmatprep.subr.mxu0 0.0
    %v3077 = vand.u32 %v118, 4294901760
    %v3078 = vsub.f32 %v118, %v3077
    %v3079 = vand.u32 %v3078, 4294901760
    %3080 = vmatpush1.msra.mxu0 %v3079
    %3081 = vmatprep.subr.mxu0 0.0
    %v3082 = vand.u32 %v119, 4294901760
    %v3083 = vsub.f32 %v119, %v3082
    %v3084 = vand.u32 %v3083, 4294901760
    %3085 = vmatpush1.msra.mxu0 %v3084
    %v3086 = vand.u32 %v2332, 4294901760
    %3087 = vmatprep.mubr.f32.mxu0 %v3086
    %v3088 = vand.u32 %v2331, 4294901760
    %3089 = vmatmul.mubr.f32.gmra.mrb[0].mxu0 %v3088
    %v3090 = vpop.f32.mrb[0].mxu0
    %v3091 = vadd.f32 %v2923, %v3090
    %v3092 = vpop.f32.mrb[0].mxu0
    %3093 = vdwg.mxu0
    %3094 = vmatprep.subr.mxu0 0.0
    %v3095 = vand.u32 %v88, 4294901760
    %3096 = vmatpush1.msra.mxu0 %v3095
    %3097 = vmatprep.subr.mxu0 0.0
    %v3098 = vand.u32 %v89, 4294901760
    %3099 = vmatpush1.msra.mxu0 %v3098
    %3100 = vmatprep.subr.mxu0 0.0
    %v3101 = vand.u32 %v90, 4294901760
    %3102 = vmatpush1.msra.mxu0 %v3101
    %3103 = vmatprep.subr.mxu0 0.0
    %v3104 = vand.u32 %v91, 4294901760
    %3105 = vmatpush1.msra.mxu0 %v3104
    %3106 = vmatprep.subr.mxu0 0.0
    %v3107 = vand.u32 %v92, 4294901760
    %3108 = vmatpush1.msra.mxu0 %v3107
    %3109 = vmatprep.subr.mxu0 0.0
    %v3110 = vand.u32 %v93, 4294901760
    %3111 = vmatpush1.msra.mxu0 %v3110
    %3112 = vmatprep.subr.mxu0 0.0
    %v3113 = vand.u32 %v94, 4294901760
    %3114 = vmatpush1.msra.mxu0 %v3113
    %3115 = vmatprep.subr.mxu0 0.0
    %v3116 = vand.u32 %v95, 4294901760
    %3117 = vmatpush1.msra.mxu0 %v3116
    %3118 = vmatprep.subr.mxu0 0.0
    %v3119 = vand.u32 %v96, 4294901760
    %3120 = vmatpush1.msra.mxu0 %v3119
    %3121 = vmatprep.subr.mxu0 0.0
    %v3122 = vand.u32 %v97, 4294901760
    %3123 = vmatpush1.msra.mxu0 %v3122
    %3124 = vmatprep.subr.mxu0 0.0
    %v3125 = vand.u32 %v98, 4294901760
    %3126 = vmatpush1.msra.mxu0 %v3125
    %3127 = vmatprep.subr.mxu0 0.0
    %v3128 = vand.u32 %v99, 4294901760
    %3129 = vmatpush1.msra.mxu0 %v3128
    %3130 = vmatprep.subr.mxu0 0.0
    %v3131 = vand.u32 %v100, 4294901760
    %3132 = vmatpush1.msra.mxu0 %v3131
    %3133 = vmatprep.subr.mxu0 0.0
    %v3134 = vand.u32 %v101, 4294901760
    %3135 = vmatpush1.msra.mxu0 %v3134
    %3136 = vmatprep.subr.mxu0 0.0
    %v3137 = vand.u32 %v102, 4294901760
    %3138 = vmatpush1.msra.mxu0 %v3137
    %3139 = vmatprep.subr.mxu0 0.0
    %v3140 = vand.u32 %v103, 4294901760
    %3141 = vmatpush1.msra.mxu0 %v3140
    %3142 = vmatprep.subr.mxu0 0.0
    %v3143 = vand.u32 %v104, 4294901760
    %3144 = vmatpush1.msra.mxu0 %v3143
    %3145 = vmatprep.subr.mxu0 0.0
    %v3146 = vand.u32 %v105, 4294901760
    %3147 = vmatpush1.msra.mxu0 %v3146
    %3148 = vmatprep.subr.mxu0 0.0
    %v3149 = vand.u32 %v106, 4294901760
    %3150 = vmatpush1.msra.mxu0 %v3149
    %3151 = vmatprep.subr.mxu0 0.0
    %v3152 = vand.u32 %v107, 4294901760
    %3153 = vmatpush1.msra.mxu0 %v3152
    %3154 = vmatprep.subr.mxu0 0.0
    %v3155 = vand.u32 %v108, 4294901760
    %3156 = vmatpush1.msra.mxu0 %v3155
    %3157 = vmatprep.subr.mxu0 0.0
    %v3158 = vand.u32 %v109, 4294901760
    %3159 = vmatpush1.msra.mxu0 %v3158
    %3160 = vmatprep.subr.mxu0 0.0
    %v3161 = vand.u32 %v110, 4294901760
    %3162 = vmatpush1.msra.mxu0 %v3161
    %3163 = vmatprep.subr.mxu0 0.0
    %v3164 = vand.u32 %v111, 4294901760
    %3165 = vmatpush1.msra.mxu0 %v3164
    %3166 = vmatprep.subr.mxu0 0.0
    %v3167 = vand.u32 %v112, 4294901760
    %3168 = vmatpush1.msra.mxu0 %v3167
    %3169 = vmatprep.subr.mxu0 0.0
    %v3170 = vand.u32 %v113, 4294901760
    %3171 = vmatpush1.msra.mxu0 %v3170
    %3172 = vmatprep.subr.mxu0 0.0
    %v3173 = vand.u32 %v114, 4294901760
    %3174 = vmatpush1.msra.mxu0 %v3173
    %3175 = vmatprep.subr.mxu0 0.0
    %v3176 = vand.u32 %v115, 4294901760
    %3177 = vmatpush1.msra.mxu0 %v3176
    %3178 = vmatprep.subr.mxu0 0.0
    %v3179 = vand.u32 %v116, 4294901760
    %3180 = vmatpush1.msra.mxu0 %v3179
    %3181 = vmatprep.subr.mxu0 0.0
    %v3182 = vand.u32 %v117, 4294901760
    %3183 = vmatpush1.msra.mxu0 %v3182
    %3184 = vmatprep.subr.mxu0 0.0
    %v3185 = vand.u32 %v118, 4294901760
    %3186 = vmatpush1.msra.mxu0 %v3185
    %3187 = vmatprep.subr.mxu0 0.0
    %v3188 = vand.u32 %v119, 4294901760
    %3189 = vmatpush1.msra.mxu0 %v3188
    %v3190 = vand.u32 %v2332, 4294901760
    %3191 = vmatprep.mubr.f32.mxu0 %v3190
    %v3192 = vand.u32 %v2331, 4294901760
    %3193 = vmatmul.mubr.f32.gmra.mrb[0].mxu0 %v3192
    %v3194 = vpop.f32.mrb[0].mxu0
    %v3195 = vadd.f32 %v3091, %v3194
    %v3196 = vpop.f32.mrb[0].mxu0
    %3197 = vdwg.mxu0
    %3198 = vmatprep.subr.mxu0 0.0
    %v3199 = vand.u32 %v3195, 4294901760
    %3200 = vmatpush1.msra.mxu0 %v3199
    %3201 = vmatprep.subr.mxu0 0.0
    %3202 = vmatpush1.msra.mxu0 0.0
    %3203 = vmatprep.subr.mxu0 0.0
    %3204 = vmatpush1.msra.mxu0 0.0
    %3205 = vmatprep.subr.mxu0 0.0
    %3206 = vmatpush1.msra.mxu0 0.0
    %3207 = vmatprep.subr.mxu0 0.0
    %3208 = vmatpush1.msra.mxu0 0.0
    %3209 = vmatprep.subr.mxu0 0.0
    %3210 = vmatpush1.msra.mxu0 0.0
    %3211 = vmatprep.subr.mxu0 0.0
    %3212 = vmatpush1.msra.mxu0 0.0
    %3213 = vmatprep.subr.mxu0 0.0
    %3214 = vmatpush1.msra.mxu0 0.0
    %3215 = vmatprep.subr.mxu0 0.0
    %3216 = vmatpush1.msra.mxu0 0.0
    %3217 = vmatprep.subr.mxu0 0.0
    %3218 = vmatpush1.msra.mxu0 0.0
    %3219 = vmatprep.subr.mxu0 0.0
    %3220 = vmatpush1.msra.mxu0 0.0
    %3221 = vmatprep.subr.mxu0 0.0
    %3222 = vmatpush1.msra.mxu0 0.0
    %3223 = vmatprep.subr.mxu0 0.0
    %3224 = vmatpush1.msra.mxu0 0.0
    %3225 = vmatprep.subr.mxu0 0.0
    %3226 = vmatpush1.msra.mxu0 0.0
    %3227 = vmatprep.subr.mxu0 0.0
    %3228 = vmatpush1.msra.mxu0 0.0
    %3229 = vmatprep.subr.mxu0 0.0
    %3230 = vmatpush1.msra.mxu0 0.0
    %3231 = vmatprep.subr.mxu0 0.0
    %3232 = vmatpush1.msra.mxu0 0.0
    %3233 = vmatprep.subr.mxu0 0.0
    %3234 = vmatpush1.msra.mxu0 0.0
    %3235 = vmatprep.subr.mxu0 0.0
    %3236 = vmatpush1.msra.mxu0 0.0
    %3237 = vmatprep.subr.mxu0 0.0
    %3238 = vmatpush1.msra.mxu0 0.0
    %3239 = vmatprep.subr.mxu0 0.0
    %3240 = vmatpush1.msra.mxu0 0.0
    %3241 = vmatprep.subr.mxu0 0.0
    %3242 = vmatpush1.msra.mxu0 0.0
    %3243 = vmatprep.subr.mxu0 0.0
    %3244 = vmatpush1.msra.mxu0 0.0
    %3245 = vmatprep.subr.mxu0 0.0
    %3246 = vmatpush1.msra.mxu0 0.0
    %3247 = vmatprep.subr.mxu0 0.0
    %3248 = vmatpush1.msra.mxu0 0.0
    %3249 = vmatprep.subr.mxu0 0.0
    %3250 = vmatpush1.msra.mxu0 0.0
    %3251 = vmatprep.subr.mxu0 0.0
    %3252 = vmatpush1.msra.mxu0 0.0
    %3253 = vmatprep.subr.mxu0 0.0
    %3254 = vmatpush1.msra.mxu0 0.0
    %3255 = vmatprep.subr.mxu0 0.0
    %3256 = vmatpush1.msra.mxu0 0.0
    %3257 = vmatprep.subr.mxu0 0.0
    %3258 = vmatpush1.msra.mxu0 0.0
    %3259 = vmatprep.subr.mxu0 0.0
    %3260 = vmatpush1.msra.mxu0 0.0
    %3261 = vmatprep.subr.mxu0 0.0
    %3262 = vmatpush1.msra.mxu0 0.0
    %3263 = vmatprep.mubr.f32.mxu0 0.0
    %v3264 = vand.u32 %v1023, 4294901760
    %v3265 = vsub.f32 %v1023, %v3264
    %v3266 = vand.u32 %v3265, 4294901760
    %v3267 = vsub.f32 %v3265, %v3266
    %v3268 = vand.u32 %v3267, 4294901760
    %3269 = vmatmul.mubr.f32.gmra.mrb[0].mxu0 %v3268
    %v3270 = vpop.f32.mrb[0].mxu0
    %v3271 = vadd.f32 %v121, %v3270
    %v3272 = vpop.f32.mrb[0].mxu0
    %3273 = vdwg.mxu0
    %3274 = vmatprep.subr.mxu0 0.0
    %v3275 = vand.u32 %v3195, 4294901760
    %v3276 = vsub.f32 %v3195, %v3275
    %v3277 = vand.u32 %v3276, 4294901760
    %v3278 = vsub.f32 %v3276, %v3277
    %v3279 = vand.u32 %v3278, 4294901760
    %3280 = vmatpush1.msra.mxu0 %v3279
    %3281 = vmatprep.subr.mxu0 0.0
    %3282 = vmatpush1.msra.mxu0 0.0
    %3283 = vmatprep.subr.mxu0 0.0
    %3284 = vmatpush1.msra.mxu0 0.0
    %3285 = vmatprep.subr.mxu0 0.0
    %3286 = vmatpush1.msra.mxu0 0.0
    %3287 = vmatprep.subr.mxu0 0.0
    %3288 = vmatpush1.msra.mxu0 0.0
    %3289 = vmatprep.subr.mxu0 0.0
    %3290 = vmatpush1.msra.mxu0 0.0
    %3291 = vmatprep.subr.mxu0 0.0
    %3292 = vmatpush1.msra.mxu0 0.0
    %3293 = vmatprep.subr.mxu0 0.0
    %3294 = vmatpush1.msra.mxu0 0.0
    %3295 = vmatprep.subr.mxu0 0.0
    %3296 = vmatpush1.msra.mxu0 0.0
    %3297 = vmatprep.subr.mxu0 0.0
    %3298 = vmatpush1.msra.mxu0 0.0
    %3299 = vmatprep.subr.mxu0 0.0
    %3300 = vmatpush1.msra.mxu0 0.0
    %3301 = vmatprep.subr.mxu0 0.0
    %3302 = vmatpush1.msra.mxu0 0.0
    %3303 = vmatprep.subr.mxu0 0.0
    %3304 = vmatpush1.msra.mxu0 0.0
    %3305 = vmatprep.subr.mxu0 0.0
    %3306 = vmatpush1.msra.mxu0 0.0
    %3307 = vmatprep.subr.mxu0 0.0
    %3308 = vmatpush1.msra.mxu0 0.0
    %3309 = vmatprep.subr.mxu0 0.0
    %3310 = vmatpush1.msra.mxu0 0.0
    %3311 = vmatprep.subr.mxu0 0.0
    %3312 = vmatpush1.msra.mxu0 0.0
    %3313 = vmatprep.subr.mxu0 0.0
    %3314 = vmatpush1.msra.mxu0 0.0
    %3315 = vmatprep.subr.mxu0 0.0
    %3316 = vmatpush1.msra.mxu0 0.0
    %3317 = vmatprep.subr.mxu0 0.0
    %3318 = vmatpush1.msra.mxu0 0.0
    %3319 = vmatprep.subr.mxu0 0.0
    %3320 = vmatpush1.msra.mxu0 0.0
    %3321 = vmatprep.subr.mxu0 0.0
    %3322 = vmatpush1.msra.mxu0 0.0
    %3323 = vmatprep.subr.mxu0 0.0
    %3324 = vmatpush1.msra.mxu0 0.0
    %3325 = vmatprep.subr.mxu0 0.0
    %3326 = vmatpush1.msra.mxu0 0.0
    %3327 = vmatprep.subr.mxu0 0.0
    %3328 = vmatpush1.msra.mxu0 0.0
    %3329 = vmatprep.subr.mxu0 0.0
    %3330 = vmatpush1.msra.mxu0 0.0
    %3331 = vmatprep.subr.mxu0 0.0
    %3332 = vmatpush1.msra.mxu0 0.0
    %3333 = vmatprep.subr.mxu0 0.0
    %3334 = vmatpush1.msra.mxu0 0.0
    %3335 = vmatprep.subr.mxu0 0.0
    %3336 = vmatpush1.msra.mxu0 0.0
    %3337 = vmatprep.subr.mxu0 0.0
    %3338 = vmatpush1.msra.mxu0 0.0
    %3339 = vmatprep.subr.mxu0 0.0
    %3340 = vmatpush1.msra.mxu0 0.0
    %3341 = vmatprep.subr.mxu0 0.0
    %3342 = vmatpush1.msra.mxu0 0.0
    %3343 = vmatprep.mubr.f32.mxu0 0.0
    %v3344 = vand.u32 %v1023, 4294901760
    %3345 = vmatmul.mubr.f32.gmra.mrb[0].mxu0 %v3344
    %v3346 = vpop.f32.mrb[0].mxu0
    %v3347 = vadd.f32 %v3271, %v3346
    %v3348 = vpop.f32.mrb[0].mxu0
    %3349 = vdwg.mxu0
    %3350 = vmatprep.subr.mxu0 0.0
    %v3351 = vand.u32 %v3195, 4294901760
    %v3352 = vsub.f32 %v3195, %v3351
    %3353 = vmatpush1.msra.mxu0 %v3352
    %3354 = vmatprep.subr.mxu0 0.0
    %3355 = vmatpush1.msra.mxu0 0.0
    %3356 = vmatprep.subr.mxu0 0.0
    %3357 = vmatpush1.msra.mxu0 0.0
    %3358 = vmatprep.subr.mxu0 0.0
    %3359 = vmatpush1.msra.mxu0 0.0
    %3360 = vmatprep.subr.mxu0 0.0
    %3361 = vmatpush1.msra.mxu0 0.0
    %3362 = vmatprep.subr.mxu0 0.0
    %3363 = vmatpush1.msra.mxu0 0.0
    %3364 = vmatprep.subr.mxu0 0.0
    %3365 = vmatpush1.msra.mxu0 0.0
    %3366 = vmatprep.subr.mxu0 0.0
    %3367 = vmatpush1.msra.mxu0 0.0
    %3368 = vmatprep.subr.mxu0 0.0
    %3369 = vmatpush1.msra.mxu0 0.0
    %3370 = vmatprep.subr.mxu0 0.0
    %3371 = vmatpush1.msra.mxu0 0.0
    %3372 = vmatprep.subr.mxu0 0.0
    %3373 = vmatpush1.msra.mxu0 0.0
    %3374 = vmatprep.subr.mxu0 0.0
    %3375 = vmatpush1.msra.mxu0 0.0
    %3376 = vmatprep.subr.mxu0 0.0
    %3377 = vmatpush1.msra.mxu0 0.0
    %3378 = vmatprep.subr.mxu0 0.0
    %3379 = vmatpush1.msra.mxu0 0.0
    %3380 = vmatprep.subr.mxu0 0.0
    %3381 = vmatpush1.msra.mxu0 0.0
    %3382 = vmatprep.subr.mxu0 0.0
    %3383 = vmatpush1.msra.mxu0 0.0
    %3384 = vmatprep.subr.mxu0 0.0
    %3385 = vmatpush1.msra.mxu0 0.0
    %3386 = vmatprep.subr.mxu0 0.0
    %3387 = vmatpush1.msra.mxu0 0.0
    %3388 = vmatprep.subr.mxu0 0.0
    %3389 = vmatpush1.msra.mxu0 0.0
    %3390 = vmatprep.subr.mxu0 0.0
    %3391 = vmatpush1.msra.mxu0 0.0
    %3392 = vmatprep.subr.mxu0 0.0
    %3393 = vmatpush1.msra.mxu0 0.0
    %3394 = vmatprep.subr.mxu0 0.0
    %3395 = vmatpush1.msra.mxu0 0.0
    %3396 = vmatprep.subr.mxu0 0.0
    %3397 = vmatpush1.msra.mxu0 0.0
    %3398 = vmatprep.subr.mxu0 0.0
    %3399 = vmatpush1.msra.mxu0 0.0
    %3400 = vmatprep.subr.mxu0 0.0
    %3401 = vmatpush1.msra.mxu0 0.0
    %3402 = vmatprep.subr.mxu0 0.0
    %3403 = vmatpush1.msra.mxu0 0.0
    %3404 = vmatprep.subr.mxu0 0.0
    %3405 = vmatpush1.msra.mxu0 0.0
    %3406 = vmatprep.subr.mxu0 0.0
    %3407 = vmatpush1.msra.mxu0 0.0
    %3408 = vmatprep.subr.mxu0 0.0
    %3409 = vmatpush1.msra.mxu0 0.0
    %3410 = vmatprep.subr.mxu0 0.0
    %3411 = vmatpush1.msra.mxu0 0.0
    %3412 = vmatprep.subr.mxu0 0.0
    %3413 = vmatpush1.msra.mxu0 0.0
    %3414 = vmatprep.subr.mxu0 0.0
    %3415 = vmatpush1.msra.mxu0 0.0
    %3416 = vmatprep.mubr.f32.mxu0 0.0
    %v3417 = vand.u32 %v1023, 4294901760
    %v3418 = vsub.f32 %v1023, %v3417
    %3419 = vmatmul.mubr.f32.gmra.mrb[0].mxu0 %v3418
    %v3420 = vpop.f32.mrb[0].mxu0
    %v3421 = vadd.f32 %v3347, %v3420
    %v3422 = vpop.f32.mrb[0].mxu0
    %3423 = vdwg.mxu0
    %3424 = vmatprep.subr.mxu0 0.0
    %v3425 = vand.u32 %v3195, 4294901760
    %3426 = vmatpush1.msra.mxu0 %v3425
    %3427 = vmatprep.subr.mxu0 0.0
    %3428 = vmatpush1.msra.mxu0 0.0
    %3429 = vmatprep.subr.mxu0 0.0
    %3430 = vmatpush1.msra.mxu0 0.0
    %3431 = vmatprep.subr.mxu0 0.0
    %3432 = vmatpush1.msra.mxu0 0.0
    %3433 = vmatprep.subr.mxu0 0.0
    %3434 = vmatpush1.msra.mxu0 0.0
    %3435 = vmatprep.subr.mxu0 0.0
    %3436 = vmatpush1.msra.mxu0 0.0
    %3437 = vmatprep.subr.mxu0 0.0
    %3438 = vmatpush1.msra.mxu0 0.0
    %3439 = vmatprep.subr.mxu0 0.0
    %3440 = vmatpush1.msra.mxu0 0.0
    %3441 = vmatprep.subr.mxu0 0.0
    %3442 = vmatpush1.msra.mxu0 0.0
    %3443 = vmatprep.subr.mxu0 0.0
    %3444 = vmatpush1.msra.mxu0 0.0
    %3445 = vmatprep.subr.mxu0 0.0
    %3446 = vmatpush1.msra.mxu0 0.0
    %3447 = vmatprep.subr.mxu0 0.0
    %3448 = vmatpush1.msra.mxu0 0.0
    %3449 = vmatprep.subr.mxu0 0.0
    %3450 = vmatpush1.msra.mxu0 0.0
    %3451 = vmatprep.subr.mxu0 0.0
    %3452 = vmatpush1.msra.mxu0 0.0
    %3453 = vmatprep.subr.mxu0 0.0
    %3454 = vmatpush1.msra.mxu0 0.0
    %3455 = vmatprep.subr.mxu0 0.0
    %3456 = vmatpush1.msra.mxu0 0.0
    %3457 = vmatprep.subr.mxu0 0.0
    %3458 = vmatpush1.msra.mxu0 0.0
    %3459 = vmatprep.subr.mxu0 0.0
    %3460 = vmatpush1.msra.mxu0 0.0
    %3461 = vmatprep.subr.mxu0 0.0
    %3462 = vmatpush1.msra.mxu0 0.0
    %3463 = vmatprep.subr.mxu0 0.0
    %3464 = vmatpush1.msra.mxu0 0.0
    %3465 = vmatprep.subr.mxu0 0.0
    %3466 = vmatpush1.msra.mxu0 0.0
    %3467 = vmatprep.subr.mxu0 0.0
    %3468 = vmatpush1.msra.mxu0 0.0
    %3469 = vmatprep.subr.mxu0 0.0
    %3470 = vmatpush1.msra.mxu0 0.0
    %3471 = vmatprep.subr.mxu0 0.0
    %3472 = vmatpush1.msra.mxu0 0.0
    %3473 = vmatprep.subr.mxu0 0.0
    %3474 = vmatpush1.msra.mxu0 0.0
    %3475 = vmatprep.subr.mxu0 0.0
    %3476 = vmatpush1.msra.mxu0 0.0
    %3477 = vmatprep.subr.mxu0 0.0
    %3478 = vmatpush1.msra.mxu0 0.0
    %3479 = vmatprep.subr.mxu0 0.0
    %3480 = vmatpush1.msra.mxu0 0.0
    %3481 = vmatprep.subr.mxu0 0.0
    %3482 = vmatpush1.msra.mxu0 0.0
    %3483 = vmatprep.subr.mxu0 0.0
    %3484 = vmatpush1.msra.mxu0 0.0
    %3485 = vmatprep.subr.mxu0 0.0
    %3486 = vmatpush1.msra.mxu0 0.0
    %3487 = vmatprep.subr.mxu0 0.0
    %3488 = vmatpush1.msra.mxu0 0.0
    %3489 = vmatprep.mubr.f32.mxu0 0.0
    %v3490 = vand.u32 %v1023, 4294901760
    %v3491 = vsub.f32 %v1023, %v3490
    %v3492 = vand.u32 %v3491, 4294901760
    %3493 = vmatmul.mubr.f32.gmra.mrb[0].mxu0 %v3492
    %v3494 = vpop.f32.mrb[0].mxu0
    %v3495 = vadd.f32 %v3421, %v3494
    %v3496 = vpop.f32.mrb[0].mxu0
    %3497 = vdwg.mxu0
    %3498 = vmatprep.subr.mxu0 0.0
    %v3499 = vand.u32 %v3195, 4294901760
    %v3500 = vsub.f32 %v3195, %v3499
    %v3501 = vand.u32 %v3500, 4294901760
    %3502 = vmatpush1.msra.mxu0 %v3501
    %3503 = vmatprep.subr.mxu0 0.0
    %3504 = vmatpush1.msra.mxu0 0.0
    %3505 = vmatprep.subr.mxu0 0.0
    %3506 = vmatpush1.msra.mxu0 0.0
    %3507 = vmatprep.subr.mxu0 0.0
    %3508 = vmatpush1.msra.mxu0 0.0
    %3509 = vmatprep.subr.mxu0 0.0
    %3510 = vmatpush1.msra.mxu0 0.0
    %3511 = vmatprep.subr.mxu0 0.0
    %3512 = vmatpush1.msra.mxu0 0.0
    %3513 = vmatprep.subr.mxu0 0.0
    %3514 = vmatpush1.msra.mxu0 0.0
    %3515 = vmatprep.subr.mxu0 0.0
    %3516 = vmatpush1.msra.mxu0 0.0
    %3517 = vmatprep.subr.mxu0 0.0
    %3518 = vmatpush1.msra.mxu0 0.0
    %3519 = vmatprep.subr.mxu0 0.0
    %3520 = vmatpush1.msra.mxu0 0.0
    %3521 = vmatprep.subr.mxu0 0.0
    %3522 = vmatpush1.msra.mxu0 0.0
    %3523 = vmatprep.subr.mxu0 0.0
    %3524 = vmatpush1.msra.mxu0 0.0
    %3525 = vmatprep.subr.mxu0 0.0
    %3526 = vmatpush1.msra.mxu0 0.0
    %3527 = vmatprep.subr.mxu0 0.0
    %3528 = vmatpush1.msra.mxu0 0.0
    %3529 = vmatprep.subr.mxu0 0.0
    %3530 = vmatpush1.msra.mxu0 0.0
    %3531 = vmatprep.subr.mxu0 0.0
    %3532 = vmatpush1.msra.mxu0 0.0
    %3533 = vmatprep.subr.mxu0 0.0
    %3534 = vmatpush1.msra.mxu0 0.0
    %3535 = vmatprep.subr.mxu0 0.0
    %3536 = vmatpush1.msra.mxu0 0.0
    %3537 = vmatprep.subr.mxu0 0.0
    %3538 = vmatpush1.msra.mxu0 0.0
    %3539 = vmatprep.subr.mxu0 0.0
    %3540 = vmatpush1.msra.mxu0 0.0
    %3541 = vmatprep.subr.mxu0 0.0
    %3542 = vmatpush1.msra.mxu0 0.0
    %3543 = vmatprep.subr.mxu0 0.0
    %3544 = vmatpush1.msra.mxu0 0.0
    %3545 = vmatprep.subr.mxu0 0.0
    %3546 = vmatpush1.msra.mxu0 0.0
    %3547 = vmatprep.subr.mxu0 0.0
    %3548 = vmatpush1.msra.mxu0 0.0
    %3549 = vmatprep.subr.mxu0 0.0
    %3550 = vmatpush1.msra.mxu0 0.0
    %3551 = vmatprep.subr.mxu0 0.0
    %3552 = vmatpush1.msra.mxu0 0.0
    %3553 = vmatprep.subr.mxu0 0.0
    %3554 = vmatpush1.msra.mxu0 0.0
    %3555 = vmatprep.subr.mxu0 0.0
    %3556 = vmatpush1.msra.mxu0 0.0
    %3557 = vmatprep.subr.mxu0 0.0
    %3558 = vmatpush1.msra.mxu0 0.0
    %3559 = vmatprep.subr.mxu0 0.0
    %3560 = vmatpush1.msra.mxu0 0.0
    %3561 = vmatprep.subr.mxu0 0.0
    %3562 = vmatpush1.msra.mxu0 0.0
    %3563 = vmatprep.subr.mxu0 0.0
    %3564 = vmatpush1.msra.mxu0 0.0
    %3565 = vmatprep.mubr.f32.mxu0 0.0
    %v3566 = vand.u32 %v1023, 4294901760
    %3567 = vmatmul.mubr.f32.gmra.mrb[0].mxu0 %v3566
    %v3568 = vpop.f32.mrb[0].mxu0
    %v3569 = vadd.f32 %v3495, %v3568
    %v3570 = vpop.f32.mrb[0].mxu0
    %3571 = vdwg.mxu0
    %3572 = vmatprep.subr.mxu0 0.0
    %v3573 = vand.u32 %v3195, 4294901760
    %3574 = vmatpush1.msra.mxu0 %v3573
    %3575 = vmatprep.subr.mxu0 0.0
    %3576 = vmatpush1.msra.mxu0 0.0
    %3577 = vmatprep.subr.mxu0 0.0
    %3578 = vmatpush1.msra.mxu0 0.0
    %3579 = vmatprep.subr.mxu0 0.0
    %3580 = vmatpush1.msra.mxu0 0.0
    %3581 = vmatprep.subr.mxu0 0.0
    %3582 = vmatpush1.msra.mxu0 0.0
    %3583 = vmatprep.subr.mxu0 0.0
    %3584 = vmatpush1.msra.mxu0 0.0
    %3585 = vmatprep.subr.mxu0 0.0
    %3586 = vmatpush1.msra.mxu0 0.0
    %3587 = vmatprep.subr.mxu0 0.0
    %3588 = vmatpush1.msra.mxu0 0.0
    %3589 = vmatprep.subr.mxu0 0.0
    %3590 = vmatpush1.msra.mxu0 0.0
    %3591 = vmatprep.subr.mxu0 0.0
    %3592 = vmatpush1.msra.mxu0 0.0
    %3593 = vmatprep.subr.mxu0 0.0
    %3594 = vmatpush1.msra.mxu0 0.0
    %3595 = vmatprep.subr.mxu0 0.0
    %3596 = vmatpush1.msra.mxu0 0.0
    %3597 = vmatprep.subr.mxu0 0.0
    %3598 = vmatpush1.msra.mxu0 0.0
    %3599 = vmatprep.subr.mxu0 0.0
    %3600 = vmatpush1.msra.mxu0 0.0
    %3601 = vmatprep.subr.mxu0 0.0
    %3602 = vmatpush1.msra.mxu0 0.0
    %3603 = vmatprep.subr.mxu0 0.0
    %3604 = vmatpush1.msra.mxu0 0.0
    %3605 = vmatprep.subr.mxu0 0.0
    %3606 = vmatpush1.msra.mxu0 0.0
    %3607 = vmatprep.subr.mxu0 0.0
    %3608 = vmatpush1.msra.mxu0 0.0
    %3609 = vmatprep.subr.mxu0 0.0
    %3610 = vmatpush1.msra.mxu0 0.0
    %3611 = vmatprep.subr.mxu0 0.0
    %3612 = vmatpush1.msra.mxu0 0.0
    %3613 = vmatprep.subr.mxu0 0.0
    %3614 = vmatpush1.msra.mxu0 0.0
    %3615 = vmatprep.subr.mxu0 0.0
    %3616 = vmatpush1.msra.mxu0 0.0
    %3617 = vmatprep.subr.mxu0 0.0
    %3618 = vmatpush1.msra.mxu0 0.0
    %3619 = vmatprep.subr.mxu0 0.0
    %3620 = vmatpush1.msra.mxu0 0.0
    %3621 = vmatprep.subr.mxu0 0.0
    %3622 = vmatpush1.msra.mxu0 0.0
    %3623 = vmatprep.subr.mxu0 0.0
    %3624 = vmatpush1.msra.mxu0 0.0
    %3625 = vmatprep.subr.mxu0 0.0
    %3626 = vmatpush1.msra.mxu0 0.0
    %3627 = vmatprep.subr.mxu0 0.0
    %3628 = vmatpush1.msra.mxu0 0.0
    %3629 = vmatprep.subr.mxu0 0.0
    %3630 = vmatpush1.msra.mxu0 0.0
    %3631 = vmatprep.subr.mxu0 0.0
    %3632 = vmatpush1.msra.mxu0 0.0
    %3633 = vmatprep.subr.mxu0 0.0
    %3634 = vmatpush1.msra.mxu0 0.0
    %3635 = vmatprep.subr.mxu0 0.0
    %3636 = vmatpush1.msra.mxu0 0.0
    %3637 = vmatprep.mubr.f32.mxu0 0.0
    %v3638 = vand.u32 %v1023, 4294901760
    %3639 = vmatmul.mubr.f32.gmra.mrb[0].mxu0 %v3638
    %v3640 = vpop.f32.mrb[0].mxu0
    %v3641 = vadd.f32 %v3569, %v3640
    %v3642 = vpop.f32.mrb[0].mxu0
    %3643 = vdwg.mxu0
    %v3644 = vmax.f32 %v3641, 0.0
    %v3645 = vmul.f32 %v3644, %v122
    %v3646 = vand.u32 %v124, 4294901760
    %3647 = vmatprep.subr.mxu0 %v3646
    %v3648 = vand.u32 %v123, 4294901760
    %3649 = vmatpush1.msra.mxu0 %v3648
    %v3650 = vand.u32 %v126, 4294901760
    %3651 = vmatprep.subr.mxu0 %v3650
    %v3652 = vand.u32 %v125, 4294901760
    %3653 = vmatpush1.msra.mxu0 %v3652
    %v3654 = vand.u32 %v128, 4294901760
    %3655 = vmatprep.subr.mxu0 %v3654
    %v3656 = vand.u32 %v127, 4294901760
    %3657 = vmatpush1.msra.mxu0 %v3656
    %v3658 = vand.u32 %v130, 4294901760
    %3659 = vmatprep.subr.mxu0 %v3658
    %v3660 = vand.u32 %v129, 4294901760
    %3661 = vmatpush1.msra.mxu0 %v3660
    %v3662 = vand.u32 %v132, 4294901760
    %3663 = vmatprep.subr.mxu0 %v3662
    %v3664 = vand.u32 %v131, 4294901760
    %3665 = vmatpush1.msra.mxu0 %v3664
    %v3666 = vand.u32 %v134, 4294901760
    %3667 = vmatprep.subr.mxu0 %v3666
    %v3668 = vand.u32 %v133, 4294901760
    %3669 = vmatpush1.msra.mxu0 %v3668
    %v3670 = vand.u32 %v136, 4294901760
    %3671 = vmatprep.subr.mxu0 %v3670
    %v3672 = vand.u32 %v135, 4294901760
    %3673 = vmatpush1.msra.mxu0 %v3672
    %v3674 = vand.u32 %v138, 4294901760
    %3675 = vmatprep.subr.mxu0 %v3674
    %v3676 = vand.u32 %v137, 4294901760
    %3677 = vmatpush1.msra.mxu0 %v3676
    %v3678 = vand.u32 %v140, 4294901760
    %3679 = vmatprep.subr.mxu0 %v3678
    %v3680 = vand.u32 %v139, 4294901760
    %3681 = vmatpush1.msra.mxu0 %v3680
    %v3682 = vand.u32 %v142, 4294901760
    %3683 = vmatprep.subr.mxu0 %v3682
    %v3684 = vand.u32 %v141, 4294901760
    %3685 = vmatpush1.msra.mxu0 %v3684
    %v3686 = vand.u32 %v144, 4294901760
    %3687 = vmatprep.subr.mxu0 %v3686
    %v3688 = vand.u32 %v143, 4294901760
    %3689 = vmatpush1.msra.mxu0 %v3688
    %v3690 = vand.u32 %v146, 4294901760
    %3691 = vmatprep.subr.mxu0 %v3690
    %v3692 = vand.u32 %v145, 4294901760
    %3693 = vmatpush1.msra.mxu0 %v3692
    %v3694 = vand.u32 %v148, 4294901760
    %3695 = vmatprep.subr.mxu0 %v3694
    %v3696 = vand.u32 %v147, 4294901760
    %3697 = vmatpush1.msra.mxu0 %v3696
    %v3698 = vand.u32 %v150, 4294901760
    %3699 = vmatprep.subr.mxu0 %v3698
    %v3700 = vand.u32 %v149, 4294901760
    %3701 = vmatpush1.msra.mxu0 %v3700
    %v3702 = vand.u32 %v152, 4294901760
    %3703 = vmatprep.subr.mxu0 %v3702
    %v3704 = vand.u32 %v151, 4294901760
    %3705 = vmatpush1.msra.mxu0 %v3704
    %v3706 = vand.u32 %v154, 4294901760
    %3707 = vmatprep.subr.mxu0 %v3706
    %v3708 = vand.u32 %v153, 4294901760
    %3709 = vmatpush1.msra.mxu0 %v3708
    %3710 = vmatprep.subr.mxu0 0.0
    %3711 = vmatpush1.msra.mxu0 0.0
    %3712 = vmatprep.subr.mxu0 0.0
    %3713 = vmatpush1.msra.mxu0 0.0
    %3714 = vmatprep.subr.mxu0 0.0
    %3715 = vmatpush1.msra.mxu0 0.0
    %3716 = vmatprep.subr.mxu0 0.0
    %3717 = vmatpush1.msra.mxu0 0.0
    %3718 = vmatprep.subr.mxu0 0.0
    %3719 = vmatpush1.msra.mxu0 0.0
    %3720 = vmatprep.subr.mxu0 0.0
    %3721 = vmatpush1.msra.mxu0 0.0
    %3722 = vmatprep.subr.mxu0 0.0
    %3723 = vmatpush1.msra.mxu0 0.0
    %3724 = vmatprep.subr.mxu0 0.0
    %3725 = vmatpush1.msra.mxu0 0.0
    %3726 = vmatprep.subr.mxu0 0.0
    %3727 = vmatpush1.msra.mxu0 0.0
    %3728 = vmatprep.subr.mxu0 0.0
    %3729 = vmatpush1.msra.mxu0 0.0
    %3730 = vmatprep.subr.mxu0 0.0
    %3731 = vmatpush1.msra.mxu0 0.0
    %3732 = vmatprep.subr.mxu0 0.0
    %3733 = vmatpush1.msra.mxu0 0.0
    %3734 = vmatprep.subr.mxu0 0.0
    %3735 = vmatpush1.msra.mxu0 0.0
    %3736 = vmatprep.subr.mxu0 0.0
    %3737 = vmatpush1.msra.mxu0 0.0
    %3738 = vmatprep.subr.mxu0 0.0
    %3739 = vmatpush1.msra.mxu0 0.0
    %3740 = vmatprep.subr.mxu0 0.0
    %3741 = vmatpush1.msra.mxu0 0.0
    %3742 = vmatprep.mubr.f32.mxu0 0.0
    %v3743 = vand.u32 %v3645, 4294901760
    %v3744 = vsub.f32 %v3645, %v3743
    %v3745 = vand.u32 %v3744, 4294901760
    %v3746 = vsub.f32 %v3744, %v3745
    %v3747 = vand.u32 %v3746, 4294901760
    %3748 = vmatmul.mubr.f32.gmra.mrb[0].mxu0 %v3747
    %v3749 = vpop.f32.mrb[0].mxu0
    %v3750 = vadd.f32 0.0, %v3749
    %v3751 = vpop.f32.mrb[0].mxu0
    %v3752 = vadd.f32 0.0, %v3751
    %3753 = vdwg.mxu0
    %v3754 = vand.u32 %v124, 4294901760
    %v3755 = vsub.f32 %v124, %v3754
    %v3756 = vand.u32 %v3755, 4294901760
    %v3757 = vsub.f32 %v3755, %v3756
    %v3758 = vand.u32 %v3757, 4294901760
    %3759 = vmatprep.subr.mxu0 %v3758
    %v3760 = vand.u32 %v123, 4294901760
    %v3761 = vsub.f32 %v123, %v3760
    %v3762 = vand.u32 %v3761, 4294901760
    %v3763 = vsub.f32 %v3761, %v3762
    %v3764 = vand.u32 %v3763, 4294901760
    %3765 = vmatpush1.msra.mxu0 %v3764
    %v3766 = vand.u32 %v126, 4294901760
    %v3767 = vsub.f32 %v126, %v3766
    %v3768 = vand.u32 %v3767, 4294901760
    %v3769 = vsub.f32 %v3767, %v3768
    %v3770 = vand.u32 %v3769, 4294901760
    %3771 = vmatprep.subr.mxu0 %v3770
    %v3772 = vand.u32 %v125, 4294901760
    %v3773 = vsub.f32 %v125, %v3772
    %v3774 = vand.u32 %v3773, 4294901760
    %v3775 = vsub.f32 %v3773, %v3774
    %v3776 = vand.u32 %v3775, 4294901760
    %3777 = vmatpush1.msra.mxu0 %v3776
    %v3778 = vand.u32 %v128, 4294901760
    %v3779 = vsub.f32 %v128, %v3778
    %v3780 = vand.u32 %v3779, 4294901760
    %v3781 = vsub.f32 %v3779, %v3780
    %v3782 = vand.u32 %v3781, 4294901760
    %3783 = vmatprep.subr.mxu0 %v3782
    %v3784 = vand.u32 %v127, 4294901760
    %v3785 = vsub.f32 %v127, %v3784
    %v3786 = vand.u32 %v3785, 4294901760
    %v3787 = vsub.f32 %v3785, %v3786
    %v3788 = vand.u32 %v3787, 4294901760
    %3789 = vmatpush1.msra.mxu0 %v3788
    %v3790 = vand.u32 %v130, 4294901760
    %v3791 = vsub.f32 %v130, %v3790
    %v3792 = vand.u32 %v3791, 4294901760
    %v3793 = vsub.f32 %v3791, %v3792
    %v3794 = vand.u32 %v3793, 4294901760
    %3795 = vmatprep.subr.mxu0 %v3794
    %v3796 = vand.u32 %v129, 4294901760
    %v3797 = vsub.f32 %v129, %v3796
    %v3798 = vand.u32 %v3797, 4294901760
    %v3799 = vsub.f32 %v3797, %v3798
    %v3800 = vand.u32 %v3799, 4294901760
    %3801 = vmatpush1.msra.mxu0 %v3800
    %v3802 = vand.u32 %v132, 4294901760
    %v3803 = vsub.f32 %v132, %v3802
    %v3804 = vand.u32 %v3803, 4294901760
    %v3805 = vsub.f32 %v3803, %v3804
    %v3806 = vand.u32 %v3805, 4294901760
    %3807 = vmatprep.subr.mxu0 %v3806
    %v3808 = vand.u32 %v131, 4294901760
    %v3809 = vsub.f32 %v131, %v3808
    %v3810 = vand.u32 %v3809, 4294901760
    %v3811 = vsub.f32 %v3809, %v3810
    %v3812 = vand.u32 %v3811, 4294901760
    %3813 = vmatpush1.msra.mxu0 %v3812
    %v3814 = vand.u32 %v134, 4294901760
    %v3815 = vsub.f32 %v134, %v3814
    %v3816 = vand.u32 %v3815, 4294901760
    %v3817 = vsub.f32 %v3815, %v3816
    %v3818 = vand.u32 %v3817, 4294901760
    %3819 = vmatprep.subr.mxu0 %v3818
    %v3820 = vand.u32 %v133, 4294901760
    %v3821 = vsub.f32 %v133, %v3820
    %v3822 = vand.u32 %v3821, 4294901760
    %v3823 = vsub.f32 %v3821, %v3822
    %v3824 = vand.u32 %v3823, 4294901760
    %3825 = vmatpush1.msra.mxu0 %v3824
    %v3826 = vand.u32 %v136, 4294901760
    %v3827 = vsub.f32 %v136, %v3826
    %v3828 = vand.u32 %v3827, 4294901760
    %v3829 = vsub.f32 %v3827, %v3828
    %v3830 = vand.u32 %v3829, 4294901760
    %3831 = vmatprep.subr.mxu0 %v3830
    %v3832 = vand.u32 %v135, 4294901760
    %v3833 = vsub.f32 %v135, %v3832
    %v3834 = vand.u32 %v3833, 4294901760
    %v3835 = vsub.f32 %v3833, %v3834
    %v3836 = vand.u32 %v3835, 4294901760
    %3837 = vmatpush1.msra.mxu0 %v3836
    %v3838 = vand.u32 %v138, 4294901760
    %v3839 = vsub.f32 %v138, %v3838
    %v3840 = vand.u32 %v3839, 4294901760
    %v3841 = vsub.f32 %v3839, %v3840
    %v3842 = vand.u32 %v3841, 4294901760
    %3843 = vmatprep.subr.mxu0 %v3842
    %v3844 = vand.u32 %v137, 4294901760
    %v3845 = vsub.f32 %v137, %v3844
    %v3846 = vand.u32 %v3845, 4294901760
    %v3847 = vsub.f32 %v3845, %v3846
    %v3848 = vand.u32 %v3847, 4294901760
    %3849 = vmatpush1.msra.mxu0 %v3848
    %v3850 = vand.u32 %v140, 4294901760
    %v3851 = vsub.f32 %v140, %v3850
    %v3852 = vand.u32 %v3851, 4294901760
    %v3853 = vsub.f32 %v3851, %v3852
    %v3854 = vand.u32 %v3853, 4294901760
    %3855 = vmatprep.subr.mxu0 %v3854
    %v3856 = vand.u32 %v139, 4294901760
    %v3857 = vsub.f32 %v139, %v3856
    %v3858 = vand.u32 %v3857, 4294901760
    %v3859 = vsub.f32 %v3857, %v3858
    %v3860 = vand.u32 %v3859, 4294901760
    %3861 = vmatpush1.msra.mxu0 %v3860
    %v3862 = vand.u32 %v142, 4294901760
    %v3863 = vsub.f32 %v142, %v3862
    %v3864 = vand.u32 %v3863, 4294901760
    %v3865 = vsub.f32 %v3863, %v3864
    %v3866 = vand.u32 %v3865, 4294901760
    %3867 = vmatprep.subr.mxu0 %v3866
    %v3868 = vand.u32 %v141, 4294901760
    %v3869 = vsub.f32 %v141, %v3868
    %v3870 = vand.u32 %v3869, 4294901760
    %v3871 = vsub.f32 %v3869, %v3870
    %v3872 = vand.u32 %v3871, 4294901760
    %3873 = vmatpush1.msra.mxu0 %v3872
    %v3874 = vand.u32 %v144, 4294901760
    %v3875 = vsub.f32 %v144, %v3874
    %v3876 = vand.u32 %v3875, 4294901760
    %v3877 = vsub.f32 %v3875, %v3876
    %v3878 = vand.u32 %v3877, 4294901760
    %3879 = vmatprep.subr.mxu0 %v3878
    %v3880 = vand.u32 %v143, 4294901760
    %v3881 = vsub.f32 %v143, %v3880
    %v3882 = vand.u32 %v3881, 4294901760
    %v3883 = vsub.f32 %v3881, %v3882
    %v3884 = vand.u32 %v3883, 4294901760
    %3885 = vmatpush1.msra.mxu0 %v3884
    %v3886 = vand.u32 %v146, 4294901760
    %v3887 = vsub.f32 %v146, %v3886
    %v3888 = vand.u32 %v3887, 4294901760
    %v3889 = vsub.f32 %v3887, %v3888
    %v3890 = vand.u32 %v3889, 4294901760
    %3891 = vmatprep.subr.mxu0 %v3890
    %v3892 = vand.u32 %v145, 4294901760
    %v3893 = vsub.f32 %v145, %v3892
    %v3894 = vand.u32 %v3893, 4294901760
    %v3895 = vsub.f32 %v3893, %v3894
    %v3896 = vand.u32 %v3895, 4294901760
    %3897 = vmatpush1.msra.mxu0 %v3896
    %v3898 = vand.u32 %v148, 4294901760
    %v3899 = vsub.f32 %v148, %v3898
    %v3900 = vand.u32 %v3899, 4294901760
    %v3901 = vsub.f32 %v3899, %v3900
    %v3902 = vand.u32 %v3901, 4294901760
    %3903 = vmatprep.subr.mxu0 %v3902
    %v3904 = vand.u32 %v147, 4294901760
    %v3905 = vsub.f32 %v147, %v3904
    %v3906 = vand.u32 %v3905, 4294901760
    %v3907 = vsub.f32 %v3905, %v3906
    %v3908 = vand.u32 %v3907, 4294901760
    %3909 = vmatpush1.msra.mxu0 %v3908
    %v3910 = vand.u32 %v150, 4294901760
    %v3911 = vsub.f32 %v150, %v3910
    %v3912 = vand.u32 %v3911, 4294901760
    %v3913 = vsub.f32 %v3911, %v3912
    %v3914 = vand.u32 %v3913, 4294901760
    %3915 = vmatprep.subr.mxu0 %v3914
    %v3916 = vand.u32 %v149, 4294901760
    %v3917 = vsub.f32 %v149, %v3916
    %v3918 = vand.u32 %v3917, 4294901760
    %v3919 = vsub.f32 %v3917, %v3918
    %v3920 = vand.u32 %v3919, 4294901760
    %3921 = vmatpush1.msra.mxu0 %v3920
    %v3922 = vand.u32 %v152, 4294901760
    %v3923 = vsub.f32 %v152, %v3922
    %v3924 = vand.u32 %v3923, 4294901760
    %v3925 = vsub.f32 %v3923, %v3924
    %v3926 = vand.u32 %v3925, 4294901760
    %3927 = vmatprep.subr.mxu0 %v3926
    %v3928 = vand.u32 %v151, 4294901760
    %v3929 = vsub.f32 %v151, %v3928
    %v3930 = vand.u32 %v3929, 4294901760
    %v3931 = vsub.f32 %v3929, %v3930
    %v3932 = vand.u32 %v3931, 4294901760
    %3933 = vmatpush1.msra.mxu0 %v3932
    %v3934 = vand.u32 %v154, 4294901760
    %v3935 = vsub.f32 %v154, %v3934
    %v3936 = vand.u32 %v3935, 4294901760
    %v3937 = vsub.f32 %v3935, %v3936
    %v3938 = vand.u32 %v3937, 4294901760
    %3939 = vmatprep.subr.mxu0 %v3938
    %v3940 = vand.u32 %v153, 4294901760
    %v3941 = vsub.f32 %v153, %v3940
    %v3942 = vand.u32 %v3941, 4294901760
    %v3943 = vsub.f32 %v3941, %v3942
    %v3944 = vand.u32 %v3943, 4294901760
    %3945 = vmatpush1.msra.mxu0 %v3944
    %3946 = vmatprep.subr.mxu0 0.0
    %3947 = vmatpush1.msra.mxu0 0.0
    %3948 = vmatprep.subr.mxu0 0.0
    %3949 = vmatpush1.msra.mxu0 0.0
    %3950 = vmatprep.subr.mxu0 0.0
    %3951 = vmatpush1.msra.mxu0 0.0
    %3952 = vmatprep.subr.mxu0 0.0
    %3953 = vmatpush1.msra.mxu0 0.0
    %3954 = vmatprep.subr.mxu0 0.0
    %3955 = vmatpush1.msra.mxu0 0.0
    %3956 = vmatprep.subr.mxu0 0.0
    %3957 = vmatpush1.msra.mxu0 0.0
    %3958 = vmatprep.subr.mxu0 0.0
    %3959 = vmatpush1.msra.mxu0 0.0
    %3960 = vmatprep.subr.mxu0 0.0
    %3961 = vmatpush1.msra.mxu0 0.0
    %3962 = vmatprep.subr.mxu0 0.0
    %3963 = vmatpush1.msra.mxu0 0.0
    %3964 = vmatprep.subr.mxu0 0.0
    %3965 = vmatpush1.msra.mxu0 0.0
    %3966 = vmatprep.subr.mxu0 0.0
    %3967 = vmatpush1.msra.mxu0 0.0
    %3968 = vmatprep.subr.mxu0 0.0
    %3969 = vmatpush1.msra.mxu0 0.0
    %3970 = vmatprep.subr.mxu0 0.0
    %3971 = vmatpush1.msra.mxu0 0.0
    %3972 = vmatprep.subr.mxu0 0.0
    %3973 = vmatpush1.msra.mxu0 0.0
    %3974 = vmatprep.subr.mxu0 0.0
    %3975 = vmatpush1.msra.mxu0 0.0
    %3976 = vmatprep.subr.mxu0 0.0
    %3977 = vmatpush1.msra.mxu0 0.0
    %3978 = vmatprep.mubr.f32.mxu0 0.0
    %v3979 = vand.u32 %v3645, 4294901760
    %3980 = vmatmul.mubr.f32.gmra.mrb[0].mxu0 %v3979
    %v3981 = vpop.f32.mrb[0].mxu0
    %v3982 = vadd.f32 %v3750, %v3981
    %v3983 = vpop.f32.mrb[0].mxu0
    %v3984 = vadd.f32 %v3752, %v3983
    %3985 = vdwg.mxu0
    %v3986 = vand.u32 %v124, 4294901760
    %v3987 = vsub.f32 %v124, %v3986
    %3988 = vmatprep.subr.mxu0 %v3987
    %v3989 = vand.u32 %v123, 4294901760
    %v3990 = vsub.f32 %v123, %v3989
    %3991 = vmatpush1.msra.mxu0 %v3990
    %v3992 = vand.u32 %v126, 4294901760
    %v3993 = vsub.f32 %v126, %v3992
    %3994 = vmatprep.subr.mxu0 %v3993
    %v3995 = vand.u32 %v125, 4294901760
    %v3996 = vsub.f32 %v125, %v3995
    %3997 = vmatpush1.msra.mxu0 %v3996
    %v3998 = vand.u32 %v128, 4294901760
    %v3999 = vsub.f32 %v128, %v3998
    %4000 = vmatprep.subr.mxu0 %v3999
    %v4001 = vand.u32 %v127, 4294901760
    %v4002 = vsub.f32 %v127, %v4001
    %4003 = vmatpush1.msra.mxu0 %v4002
    %v4004 = vand.u32 %v130, 4294901760
    %v4005 = vsub.f32 %v130, %v4004
    %4006 = vmatprep.subr.mxu0 %v4005
    %v4007 = vand.u32 %v129, 4294901760
    %v4008 = vsub.f32 %v129, %v4007
    %4009 = vmatpush1.msra.mxu0 %v4008
    %v4010 = vand.u32 %v132, 4294901760
    %v4011 = vsub.f32 %v132, %v4010
    %4012 = vmatprep.subr.mxu0 %v4011
    %v4013 = vand.u32 %v131, 4294901760
    %v4014 = vsub.f32 %v131, %v4013
    %4015 = vmatpush1.msra.mxu0 %v4014
    %v4016 = vand.u32 %v134, 4294901760
    %v4017 = vsub.f32 %v134, %v4016
    %4018 = vmatprep.subr.mxu0 %v4017
    %v4019 = vand.u32 %v133, 4294901760
    %v4020 = vsub.f32 %v133, %v4019
    %4021 = vmatpush1.msra.mxu0 %v4020
    %v4022 = vand.u32 %v136, 4294901760
    %v4023 = vsub.f32 %v136, %v4022
    %4024 = vmatprep.subr.mxu0 %v4023
    %v4025 = vand.u32 %v135, 4294901760
    %v4026 = vsub.f32 %v135, %v4025
    %4027 = vmatpush1.msra.mxu0 %v4026
    %v4028 = vand.u32 %v138, 4294901760
    %v4029 = vsub.f32 %v138, %v4028
    %4030 = vmatprep.subr.mxu0 %v4029
    %v4031 = vand.u32 %v137, 4294901760
    %v4032 = vsub.f32 %v137, %v4031
    %4033 = vmatpush1.msra.mxu0 %v4032
    %v4034 = vand.u32 %v140, 4294901760
    %v4035 = vsub.f32 %v140, %v4034
    %4036 = vmatprep.subr.mxu0 %v4035
    %v4037 = vand.u32 %v139, 4294901760
    %v4038 = vsub.f32 %v139, %v4037
    %4039 = vmatpush1.msra.mxu0 %v4038
    %v4040 = vand.u32 %v142, 4294901760
    %v4041 = vsub.f32 %v142, %v4040
    %4042 = vmatprep.subr.mxu0 %v4041
    %v4043 = vand.u32 %v141, 4294901760
    %v4044 = vsub.f32 %v141, %v4043
    %4045 = vmatpush1.msra.mxu0 %v4044
    %v4046 = vand.u32 %v144, 4294901760
    %v4047 = vsub.f32 %v144, %v4046
    %4048 = vmatprep.subr.mxu0 %v4047
    %v4049 = vand.u32 %v143, 4294901760
    %v4050 = vsub.f32 %v143, %v4049
    %4051 = vmatpush1.msra.mxu0 %v4050
    %v4052 = vand.u32 %v146, 4294901760
    %v4053 = vsub.f32 %v146, %v4052
    %4054 = vmatprep.subr.mxu0 %v4053
    %v4055 = vand.u32 %v145, 4294901760
    %v4056 = vsub.f32 %v145, %v4055
    %4057 = vmatpush1.msra.mxu0 %v4056
    %v4058 = vand.u32 %v148, 4294901760
    %v4059 = vsub.f32 %v148, %v4058
    %4060 = vmatprep.subr.mxu0 %v4059
    %v4061 = vand.u32 %v147, 4294901760
    %v4062 = vsub.f32 %v147, %v4061
    %4063 = vmatpush1.msra.mxu0 %v4062
    %v4064 = vand.u32 %v150, 4294901760
    %v4065 = vsub.f32 %v150, %v4064
    %4066 = vmatprep.subr.mxu0 %v4065
    %v4067 = vand.u32 %v149, 4294901760
    %v4068 = vsub.f32 %v149, %v4067
    %4069 = vmatpush1.msra.mxu0 %v4068
    %v4070 = vand.u32 %v152, 4294901760
    %v4071 = vsub.f32 %v152, %v4070
    %4072 = vmatprep.subr.mxu0 %v4071
    %v4073 = vand.u32 %v151, 4294901760
    %v4074 = vsub.f32 %v151, %v4073
    %4075 = vmatpush1.msra.mxu0 %v4074
    %v4076 = vand.u32 %v154, 4294901760
    %v4077 = vsub.f32 %v154, %v4076
    %4078 = vmatprep.subr.mxu0 %v4077
    %v4079 = vand.u32 %v153, 4294901760
    %v4080 = vsub.f32 %v153, %v4079
    %4081 = vmatpush1.msra.mxu0 %v4080
    %4082 = vmatprep.subr.mxu0 0.0
    %4083 = vmatpush1.msra.mxu0 0.0
    %4084 = vmatprep.subr.mxu0 0.0
    %4085 = vmatpush1.msra.mxu0 0.0
    %4086 = vmatprep.subr.mxu0 0.0
    %4087 = vmatpush1.msra.mxu0 0.0
    %4088 = vmatprep.subr.mxu0 0.0
    %4089 = vmatpush1.msra.mxu0 0.0
    %4090 = vmatprep.subr.mxu0 0.0
    %4091 = vmatpush1.msra.mxu0 0.0
    %4092 = vmatprep.subr.mxu0 0.0
    %4093 = vmatpush1.msra.mxu0 0.0
    %4094 = vmatprep.subr.mxu0 0.0
    %4095 = vmatpush1.msra.mxu0 0.0
    %4096 = vmatprep.subr.mxu0 0.0
    %4097 = vmatpush1.msra.mxu0 0.0
    %4098 = vmatprep.subr.mxu0 0.0
    %4099 = vmatpush1.msra.mxu0 0.0
    %4100 = vmatprep.subr.mxu0 0.0
    %4101 = vmatpush1.msra.mxu0 0.0
    %4102 = vmatprep.subr.mxu0 0.0
    %4103 = vmatpush1.msra.mxu0 0.0
    %4104 = vmatprep.subr.mxu0 0.0
    %4105 = vmatpush1.msra.mxu0 0.0
    %4106 = vmatprep.subr.mxu0 0.0
    %4107 = vmatpush1.msra.mxu0 0.0
    %4108 = vmatprep.subr.mxu0 0.0
    %4109 = vmatpush1.msra.mxu0 0.0
    %4110 = vmatprep.subr.mxu0 0.0
    %4111 = vmatpush1.msra.mxu0 0.0
    %4112 = vmatprep.subr.mxu0 0.0
    %4113 = vmatpush1.msra.mxu0 0.0
    %4114 = vmatprep.mubr.f32.mxu0 0.0
    %v4115 = vand.u32 %v3645, 4294901760
    %v4116 = vsub.f32 %v3645, %v4115
    %4117 = vmatmul.mubr.f32.gmra.mrb[0].mxu0 %v4116
    %v4118 = vpop.f32.mrb[0].mxu0
    %v4119 = vadd.f32 %v3982, %v4118
    %v4120 = vpop.f32.mrb[0].mxu0
    %v4121 = vadd.f32 %v3984, %v4120
    %4122 = vdwg.mxu0
    %v4123 = vand.u32 %v124, 4294901760
    %4124 = vmatprep.subr.mxu0 %v4123
    %v4125 = vand.u32 %v123, 4294901760
    %4126 = vmatpush1.msra.mxu0 %v4125
    %v4127 = vand.u32 %v126, 4294901760
    %4128 = vmatprep.subr.mxu0 %v4127
    %v4129 = vand.u32 %v125, 4294901760
    %4130 = vmatpush1.msra.mxu0 %v4129
    %v4131 = vand.u32 %v128, 4294901760
    %4132 = vmatprep.subr.mxu0 %v4131
    %v4133 = vand.u32 %v127, 4294901760
    %4134 = vmatpush1.msra.mxu0 %v4133
    %v4135 = vand.u32 %v130, 4294901760
    %4136 = vmatprep.subr.mxu0 %v4135
    %v4137 = vand.u32 %v129, 4294901760
    %4138 = vmatpush1.msra.mxu0 %v4137
    %v4139 = vand.u32 %v132, 4294901760
    %4140 = vmatprep.subr.mxu0 %v4139
    %v4141 = vand.u32 %v131, 4294901760
    %4142 = vmatpush1.msra.mxu0 %v4141
    %v4143 = vand.u32 %v134, 4294901760
    %4144 = vmatprep.subr.mxu0 %v4143
    %v4145 = vand.u32 %v133, 4294901760
    %4146 = vmatpush1.msra.mxu0 %v4145
    %v4147 = vand.u32 %v136, 4294901760
    %4148 = vmatprep.subr.mxu0 %v4147
    %v4149 = vand.u32 %v135, 4294901760
    %4150 = vmatpush1.msra.mxu0 %v4149
    %v4151 = vand.u32 %v138, 4294901760
    %4152 = vmatprep.subr.mxu0 %v4151
    %v4153 = vand.u32 %v137, 4294901760
    %4154 = vmatpush1.msra.mxu0 %v4153
    %v4155 = vand.u32 %v140, 4294901760
    %4156 = vmatprep.subr.mxu0 %v4155
    %v4157 = vand.u32 %v139, 4294901760
    %4158 = vmatpush1.msra.mxu0 %v4157
    %v4159 = vand.u32 %v142, 4294901760
    %4160 = vmatprep.subr.mxu0 %v4159
    %v4161 = vand.u32 %v141, 4294901760
    %4162 = vmatpush1.msra.mxu0 %v4161
    %v4163 = vand.u32 %v144, 4294901760
    %4164 = vmatprep.subr.mxu0 %v4163
    %v4165 = vand.u32 %v143, 4294901760
    %4166 = vmatpush1.msra.mxu0 %v4165
    %v4167 = vand.u32 %v146, 4294901760
    %4168 = vmatprep.subr.mxu0 %v4167
    %v4169 = vand.u32 %v145, 4294901760
    %4170 = vmatpush1.msra.mxu0 %v4169
    %v4171 = vand.u32 %v148, 4294901760
    %4172 = vmatprep.subr.mxu0 %v4171
    %v4173 = vand.u32 %v147, 4294901760
    %4174 = vmatpush1.msra.mxu0 %v4173
    %v4175 = vand.u32 %v150, 4294901760
    %4176 = vmatprep.subr.mxu0 %v4175
    %v4177 = vand.u32 %v149, 4294901760
    %4178 = vmatpush1.msra.mxu0 %v4177
    %v4179 = vand.u32 %v152, 4294901760
    %4180 = vmatprep.subr.mxu0 %v4179
    %v4181 = vand.u32 %v151, 4294901760
    %4182 = vmatpush1.msra.mxu0 %v4181
    %v4183 = vand.u32 %v154, 4294901760
    %4184 = vmatprep.subr.mxu0 %v4183
    %v4185 = vand.u32 %v153, 4294901760
    %4186 = vmatpush1.msra.mxu0 %v4185
    %4187 = vmatprep.subr.mxu0 0.0
    %4188 = vmatpush1.msra.mxu0 0.0
    %4189 = vmatprep.subr.mxu0 0.0
    %4190 = vmatpush1.msra.mxu0 0.0
    %4191 = vmatprep.subr.mxu0 0.0
    %4192 = vmatpush1.msra.mxu0 0.0
    %4193 = vmatprep.subr.mxu0 0.0
    %4194 = vmatpush1.msra.mxu0 0.0
    %4195 = vmatprep.subr.mxu0 0.0
    %4196 = vmatpush1.msra.mxu0 0.0
    %4197 = vmatprep.subr.mxu0 0.0
    %4198 = vmatpush1.msra.mxu0 0.0
    %4199 = vmatprep.subr.mxu0 0.0
    %4200 = vmatpush1.msra.mxu0 0.0
    %4201 = vmatprep.subr.mxu0 0.0
    %4202 = vmatpush1.msra.mxu0 0.0
    %4203 = vmatprep.subr.mxu0 0.0
    %4204 = vmatpush1.msra.mxu0 0.0
    %4205 = vmatprep.subr.mxu0 0.0
    %4206 = vmatpush1.msra.mxu0 0.0
    %4207 = vmatprep.subr.mxu0 0.0
    %4208 = vmatpush1.msra.mxu0 0.0
    %4209 = vmatprep.subr.mxu0 0.0
    %4210 = vmatpush1.msra.mxu0 0.0
    %4211 = vmatprep.subr.mxu0 0.0
    %4212 = vmatpush1.msra.mxu0 0.0
    %4213 = vmatprep.subr.mxu0 0.0
    %4214 = vmatpush1.msra.mxu0 0.0
    %4215 = vmatprep.subr.mxu0 0.0
    %4216 = vmatpush1.msra.mxu0 0.0
    %4217 = vmatprep.subr.mxu0 0.0
    %4218 = vmatpush1.msra.mxu0 0.0
    %4219 = vmatprep.mubr.f32.mxu0 0.0
    %v4220 = vand.u32 %v3645, 4294901760
    %v4221 = vsub.f32 %v3645, %v4220
    %v4222 = vand.u32 %v4221, 4294901760
    %4223 = vmatmul.mubr.f32.gmra.mrb[0].mxu0 %v4222
    %v4224 = vpop.f32.mrb[0].mxu0
    %v4225 = vadd.f32 %v4119, %v4224
    %v4226 = vpop.f32.mrb[0].mxu0
    %v4227 = vadd.f32 %v4121, %v4226
    %4228 = vdwg.mxu0
    %v4229 = vand.u32 %v124, 4294901760
    %v4230 = vsub.f32 %v124, %v4229
    %v4231 = vand.u32 %v4230, 4294901760
    %4232 = vmatprep.subr.mxu0 %v4231
    %v4233 = vand.u32 %v123, 4294901760
    %v4234 = vsub.f32 %v123, %v4233
    %v4235 = vand.u32 %v4234, 4294901760
    %4236 = vmatpush1.msra.mxu0 %v4235
    %v4237 = vand.u32 %v126, 4294901760
    %v4238 = vsub.f32 %v126, %v4237
    %v4239 = vand.u32 %v4238, 4294901760
    %4240 = vmatprep.subr.mxu0 %v4239
    %v4241 = vand.u32 %v125, 4294901760
    %v4242 = vsub.f32 %v125, %v4241
    %v4243 = vand.u32 %v4242, 4294901760
    %4244 = vmatpush1.msra.mxu0 %v4243
    %v4245 = vand.u32 %v128, 4294901760
    %v4246 = vsub.f32 %v128, %v4245
    %v4247 = vand.u32 %v4246, 4294901760
    %4248 = vmatprep.subr.mxu0 %v4247
    %v4249 = vand.u32 %v127, 4294901760
    %v4250 = vsub.f32 %v127, %v4249
    %v4251 = vand.u32 %v4250, 4294901760
    %4252 = vmatpush1.msra.mxu0 %v4251
    %v4253 = vand.u32 %v130, 4294901760
    %v4254 = vsub.f32 %v130, %v4253
    %v4255 = vand.u32 %v4254, 4294901760
    %4256 = vmatprep.subr.mxu0 %v4255
    %v4257 = vand.u32 %v129, 4294901760
    %v4258 = vsub.f32 %v129, %v4257
    %v4259 = vand.u32 %v4258, 4294901760
    %4260 = vmatpush1.msra.mxu0 %v4259
    %v4261 = vand.u32 %v132, 4294901760
    %v4262 = vsub.f32 %v132, %v4261
    %v4263 = vand.u32 %v4262, 4294901760
    %4264 = vmatprep.subr.mxu0 %v4263
    %v4265 = vand.u32 %v131, 4294901760
    %v4266 = vsub.f32 %v131, %v4265
    %v4267 = vand.u32 %v4266, 4294901760
    %4268 = vmatpush1.msra.mxu0 %v4267
    %v4269 = vand.u32 %v134, 4294901760
    %v4270 = vsub.f32 %v134, %v4269
    %v4271 = vand.u32 %v4270, 4294901760
    %4272 = vmatprep.subr.mxu0 %v4271
    %v4273 = vand.u32 %v133, 4294901760
    %v4274 = vsub.f32 %v133, %v4273
    %v4275 = vand.u32 %v4274, 4294901760
    %4276 = vmatpush1.msra.mxu0 %v4275
    %v4277 = vand.u32 %v136, 4294901760
    %v4278 = vsub.f32 %v136, %v4277
    %v4279 = vand.u32 %v4278, 4294901760
    %4280 = vmatprep.subr.mxu0 %v4279
    %v4281 = vand.u32 %v135, 4294901760
    %v4282 = vsub.f32 %v135, %v4281
    %v4283 = vand.u32 %v4282, 4294901760
    %4284 = vmatpush1.msra.mxu0 %v4283
    %v4285 = vand.u32 %v138, 4294901760
    %v4286 = vsub.f32 %v138, %v4285
    %v4287 = vand.u32 %v4286, 4294901760
    %4288 = vmatprep.subr.mxu0 %v4287
    %v4289 = vand.u32 %v137, 4294901760
    %v4290 = vsub.f32 %v137, %v4289
    %v4291 = vand.u32 %v4290, 4294901760
    %4292 = vmatpush1.msra.mxu0 %v4291
    %v4293 = vand.u32 %v140, 4294901760
    %v4294 = vsub.f32 %v140, %v4293
    %v4295 = vand.u32 %v4294, 4294901760
    %4296 = vmatprep.subr.mxu0 %v4295
    %v4297 = vand.u32 %v139, 4294901760
    %v4298 = vsub.f32 %v139, %v4297
    %v4299 = vand.u32 %v4298, 4294901760
    %4300 = vmatpush1.msra.mxu0 %v4299
    %v4301 = vand.u32 %v142, 4294901760
    %v4302 = vsub.f32 %v142, %v4301
    %v4303 = vand.u32 %v4302, 4294901760
    %4304 = vmatprep.subr.mxu0 %v4303
    %v4305 = vand.u32 %v141, 4294901760
    %v4306 = vsub.f32 %v141, %v4305
    %v4307 = vand.u32 %v4306, 4294901760
    %4308 = vmatpush1.msra.mxu0 %v4307
    %v4309 = vand.u32 %v144, 4294901760
    %v4310 = vsub.f32 %v144, %v4309
    %v4311 = vand.u32 %v4310, 4294901760
    %4312 = vmatprep.subr.mxu0 %v4311
    %v4313 = vand.u32 %v143, 4294901760
    %v4314 = vsub.f32 %v143, %v4313
    %v4315 = vand.u32 %v4314, 4294901760
    %4316 = vmatpush1.msra.mxu0 %v4315
    %v4317 = vand.u32 %v146, 4294901760
    %v4318 = vsub.f32 %v146, %v4317
    %v4319 = vand.u32 %v4318, 4294901760
    %4320 = vmatprep.subr.mxu0 %v4319
    %v4321 = vand.u32 %v145, 4294901760
    %v4322 = vsub.f32 %v145, %v4321
    %v4323 = vand.u32 %v4322, 4294901760
    %4324 = vmatpush1.msra.mxu0 %v4323
    %v4325 = vand.u32 %v148, 4294901760
    %v4326 = vsub.f32 %v148, %v4325
    %v4327 = vand.u32 %v4326, 4294901760
    %4328 = vmatprep.subr.mxu0 %v4327
    %v4329 = vand.u32 %v147, 4294901760
    %v4330 = vsub.f32 %v147, %v4329
    %v4331 = vand.u32 %v4330, 4294901760
    %4332 = vmatpush1.msra.mxu0 %v4331
    %v4333 = vand.u32 %v150, 4294901760
    %v4334 = vsub.f32 %v150, %v4333
    %v4335 = vand.u32 %v4334, 4294901760
    %4336 = vmatprep.subr.mxu0 %v4335
    %v4337 = vand.u32 %v149, 4294901760
    %v4338 = vsub.f32 %v149, %v4337
    %v4339 = vand.u32 %v4338, 4294901760
    %4340 = vmatpush1.msra.mxu0 %v4339
    %v4341 = vand.u32 %v152, 4294901760
    %v4342 = vsub.f32 %v152, %v4341
    %v4343 = vand.u32 %v4342, 4294901760
    %4344 = vmatprep.subr.mxu0 %v4343
    %v4345 = vand.u32 %v151, 4294901760
    %v4346 = vsub.f32 %v151, %v4345
    %v4347 = vand.u32 %v4346, 4294901760
    %4348 = vmatpush1.msra.mxu0 %v4347
    %v4349 = vand.u32 %v154, 4294901760
    %v4350 = vsub.f32 %v154, %v4349
    %v4351 = vand.u32 %v4350, 4294901760
    %4352 = vmatprep.subr.mxu0 %v4351
    %v4353 = vand.u32 %v153, 4294901760
    %v4354 = vsub.f32 %v153, %v4353
    %v4355 = vand.u32 %v4354, 4294901760
    %4356 = vmatpush1.msra.mxu0 %v4355
    %4357 = vmatprep.subr.mxu0 0.0
    %4358 = vmatpush1.msra.mxu0 0.0
    %4359 = vmatprep.subr.mxu0 0.0
    %4360 = vmatpush1.msra.mxu0 0.0
    %4361 = vmatprep.subr.mxu0 0.0
    %4362 = vmatpush1.msra.mxu0 0.0
    %4363 = vmatprep.subr.mxu0 0.0
    %4364 = vmatpush1.msra.mxu0 0.0
    %4365 = vmatprep.subr.mxu0 0.0
    %4366 = vmatpush1.msra.mxu0 0.0
    %4367 = vmatprep.subr.mxu0 0.0
    %4368 = vmatpush1.msra.mxu0 0.0
    %4369 = vmatprep.subr.mxu0 0.0
    %4370 = vmatpush1.msra.mxu0 0.0
    %4371 = vmatprep.subr.mxu0 0.0
    %4372 = vmatpush1.msra.mxu0 0.0
    %4373 = vmatprep.subr.mxu0 0.0
    %4374 = vmatpush1.msra.mxu0 0.0
    %4375 = vmatprep.subr.mxu0 0.0
    %4376 = vmatpush1.msra.mxu0 0.0
    %4377 = vmatprep.subr.mxu0 0.0
    %4378 = vmatpush1.msra.mxu0 0.0
    %4379 = vmatprep.subr.mxu0 0.0
    %4380 = vmatpush1.msra.mxu0 0.0
    %4381 = vmatprep.subr.mxu0 0.0
    %4382 = vmatpush1.msra.mxu0 0.0
    %4383 = vmatprep.subr.mxu0 0.0
    %4384 = vmatpush1.msra.mxu0 0.0
    %4385 = vmatprep.subr.mxu0 0.0
    %4386 = vmatpush1.msra.mxu0 0.0
    %4387 = vmatprep.subr.mxu0 0.0
    %4388 = vmatpush1.msra.mxu0 0.0
    %4389 = vmatprep.mubr.f32.mxu0 0.0
    %v4390 = vand.u32 %v3645, 4294901760
    %4391 = vmatmul.mubr.f32.gmra.mrb[0].mxu0 %v4390
    %v4392 = vpop.f32.mrb[0].mxu0
    %v4393 = vadd.f32 %v4225, %v4392
    %v4394 = vpop.f32.mrb[0].mxu0
    %v4395 = vadd.f32 %v4227, %v4394
    %4396 = vdwg.mxu0
    %v4397 = vand.u32 %v124, 4294901760
    %4398 = vmatprep.subr.mxu0 %v4397
    %v4399 = vand.u32 %v123, 4294901760
    %4400 = vmatpush1.msra.mxu0 %v4399
    %v4401 = vand.u32 %v126, 4294901760
    %4402 = vmatprep.subr.mxu0 %v4401
    %v4403 = vand.u32 %v125, 4294901760
    %4404 = vmatpush1.msra.mxu0 %v4403
    %v4405 = vand.u32 %v128, 4294901760
    %4406 = vmatprep.subr.mxu0 %v4405
    %v4407 = vand.u32 %v127, 4294901760
    %4408 = vmatpush1.msra.mxu0 %v4407
    %v4409 = vand.u32 %v130, 4294901760
    %4410 = vmatprep.subr.mxu0 %v4409
    %v4411 = vand.u32 %v129, 4294901760
    %4412 = vmatpush1.msra.mxu0 %v4411
    %v4413 = vand.u32 %v132, 4294901760
    %4414 = vmatprep.subr.mxu0 %v4413
    %v4415 = vand.u32 %v131, 4294901760
    %4416 = vmatpush1.msra.mxu0 %v4415
    %v4417 = vand.u32 %v134, 4294901760
    %4418 = vmatprep.subr.mxu0 %v4417
    %v4419 = vand.u32 %v133, 4294901760
    %4420 = vmatpush1.msra.mxu0 %v4419
    %v4421 = vand.u32 %v136, 4294901760
    %4422 = vmatprep.subr.mxu0 %v4421
    %v4423 = vand.u32 %v135, 4294901760
    %4424 = vmatpush1.msra.mxu0 %v4423
    %v4425 = vand.u32 %v138, 4294901760
    %4426 = vmatprep.subr.mxu0 %v4425
    %v4427 = vand.u32 %v137, 4294901760
    %4428 = vmatpush1.msra.mxu0 %v4427
    %v4429 = vand.u32 %v140, 4294901760
    %4430 = vmatprep.subr.mxu0 %v4429
    %v4431 = vand.u32 %v139, 4294901760
    %4432 = vmatpush1.msra.mxu0 %v4431
    %v4433 = vand.u32 %v142, 4294901760
    %4434 = vmatprep.subr.mxu0 %v4433
    %v4435 = vand.u32 %v141, 4294901760
    %4436 = vmatpush1.msra.mxu0 %v4435
    %v4437 = vand.u32 %v144, 4294901760
    %4438 = vmatprep.subr.mxu0 %v4437
    %v4439 = vand.u32 %v143, 4294901760
    %4440 = vmatpush1.msra.mxu0 %v4439
    %v4441 = vand.u32 %v146, 4294901760
    %4442 = vmatprep.subr.mxu0 %v4441
    %v4443 = vand.u32 %v145, 4294901760
    %4444 = vmatpush1.msra.mxu0 %v4443
    %v4445 = vand.u32 %v148, 4294901760
    %4446 = vmatprep.subr.mxu0 %v4445
    %v4447 = vand.u32 %v147, 4294901760
    %4448 = vmatpush1.msra.mxu0 %v4447
    %v4449 = vand.u32 %v150, 4294901760
    %4450 = vmatprep.subr.mxu0 %v4449
    %v4451 = vand.u32 %v149, 4294901760
    %4452 = vmatpush1.msra.mxu0 %v4451
    %v4453 = vand.u32 %v152, 4294901760
    %4454 = vmatprep.subr.mxu0 %v4453
    %v4455 = vand.u32 %v151, 4294901760
    %4456 = vmatpush1.msra.mxu0 %v4455
    %v4457 = vand.u32 %v154, 4294901760
    %4458 = vmatprep.subr.mxu0 %v4457
    %v4459 = vand.u32 %v153, 4294901760
    %4460 = vmatpush1.msra.mxu0 %v4459
    %4461 = vmatprep.subr.mxu0 0.0
    %4462 = vmatpush1.msra.mxu0 0.0
    %4463 = vmatprep.subr.mxu0 0.0
    %4464 = vmatpush1.msra.mxu0 0.0
    %4465 = vmatprep.subr.mxu0 0.0
    %4466 = vmatpush1.msra.mxu0 0.0
    %4467 = vmatprep.subr.mxu0 0.0
    %4468 = vmatpush1.msra.mxu0 0.0
    %4469 = vmatprep.subr.mxu0 0.0
    %4470 = vmatpush1.msra.mxu0 0.0
    %4471 = vmatprep.subr.mxu0 0.0
    %4472 = vmatpush1.msra.mxu0 0.0
    %4473 = vmatprep.subr.mxu0 0.0
    %4474 = vmatpush1.msra.mxu0 0.0
    %4475 = vmatprep.subr.mxu0 0.0
    %4476 = vmatpush1.msra.mxu0 0.0
    %4477 = vmatprep.subr.mxu0 0.0
    %4478 = vmatpush1.msra.mxu0 0.0
    %4479 = vmatprep.subr.mxu0 0.0
    %4480 = vmatpush1.msra.mxu0 0.0
    %4481 = vmatprep.subr.mxu0 0.0
    %4482 = vmatpush1.msra.mxu0 0.0
    %4483 = vmatprep.subr.mxu0 0.0
    %4484 = vmatpush1.msra.mxu0 0.0
    %4485 = vmatprep.subr.mxu0 0.0
    %4486 = vmatpush1.msra.mxu0 0.0
    %4487 = vmatprep.subr.mxu0 0.0
    %4488 = vmatpush1.msra.mxu0 0.0
    %4489 = vmatprep.subr.mxu0 0.0
    %4490 = vmatpush1.msra.mxu0 0.0
    %4491 = vmatprep.subr.mxu0 0.0
    %4492 = vmatpush1.msra.mxu0 0.0
    %4493 = vmatprep.mubr.f32.mxu0 0.0
    %v4494 = vand.u32 %v3645, 4294901760
    %4495 = vmatmul.mubr.f32.gmra.mrb[0].mxu0 %v4494
    %v4496 = vpop.f32.mrb[0].mxu0
    %v4497 = vadd.f32 %v4393, %v4496
    %v4498 = vpop.f32.mrb[0].mxu0
    %v4499 = vadd.f32 %v4395, %v4498
    %4500 = vdwg.mxu0
    %4501 = vst [vmem:[%s2333 + $0x10] sm:$0xff] %v4497
    %4502 = vst [vmem:[%s2333 + $0x18] sm:$0xff] %v4499
    // Predicated region
    $region46: #{tpu_custom_call.1} parent=1 // pred_check
      _
    $region47: #{tpu_custom_call.1} parent=1 // pred_check_branch
      %4504 = sbr.rel (0) target = $region49
    $region48: #{tpu_custom_call.1} parent=1 // pred_region
      %s4506 = ssub.s32 1024, 1024
      %4507 = vsyncadd [#allocation4], %s4506
      %s4508 = sshll.u32 [#allocation11], 4
      %s4509 = int_to_ptr.vmem [resolvable:$true] %s4508
      %4514 = dma.vmem_to_hbm [thread:$0]  %s4509, 1024, %s6, [#allocation4], 256, 256, 16
    $region49: #{tpu_custom_call.1} parent=1 // pred_fallthru
      _
    // Predicated region
    $region50: #{tpu_custom_call.1} parent=1 // pred_check
      _
    $region51: #{tpu_custom_call.1} parent=1 // pred_check_branch
      %4516 = sbr.rel (0) target = $region53
    $region52: #{tpu_custom_call.1} parent=1 // pred_region
      %4517 = dma.done [#allocation4], 1024
    $region53: #{tpu_custom_call.1} parent=1 // pred_fallthru
      _
    %4518 = vsyncpa [#allocation3], 1
    %4519 = vsyncpa [#allocation6], 1
    %4520 = vsyncpa [#allocation9], 1
    %4521 = vsyncpa [#allocation4], 1

</llo_original>
